<compile_context>
chip_gen: v7x
topology: tpu7x:2x2x1
jax: 0.10.0
libtpu: 0.0.40
codegen_flags: <defaults>
</compile_context>

<pallas_src>
import math

import jax
import jax.numpy as jnp
from jax.experimental import pallas as pl
from jax.experimental.pallas import tpu as pltpu

# ----------------------------- hyper-parameters ------------------------------
VOCAB_SIZE = 128
N_EMBD = 32
N_HEAD = 4
N_LAYER = 2
BLOCK_SIZE = 16
BATCH = 2
SEQ = 8

LANES = 128


def _make_kernel(B, T, E, H, L, V):
    SN = B * T
    hd = E // H
    bf16 = jnp.bfloat16

    # --- static row offsets inside the packed slabs ---
    KV_OFF = 0          # weight slab rows [0, E)   : hoisted cross-attn K/V, all layers
    LM_OFF = E          # weight slab rows [E, 2E)  : lm_head weight (E, V)

    def w_off(l):       # per-layer weight base row: [sa_w | ow_pack | l1w | l2wT]
        return 2 * E + l * 4 * E

    def b_off(l):       # per-layer bias base row (row 0 = kv bias for all layers)
        return 1 + 5 * l

    def kernel(xm_ref, w_ref, b_ref, out_ref):
        x = xm_ref[:, 0:E]                  # (SN, E)  f32 activations
        mask = xm_ref[:, E:E + SN]          # (SN, SN) f32 additive equal-t mask
        mem_bf = x.astype(bf16)             # decoder "memory" == input embeddings

        def mm(a, b):                       # native [M,K]x[K,N] MXU path, f32 accumulate
            return jnp.dot(a, b, preferred_element_type=jnp.float32)

        def mm_t(a, b):                     # a @ b.T
            return jax.lax.dot_general(a, b, (((1,), (1,)), ((), ())),
                                       preferred_element_type=jnp.float32)

        def layernorm(v, w, b):             # f32 elementwise throughout (v5e-safe)
            mu = jnp.mean(v, axis=-1, keepdims=True)
            var = jnp.mean((v - mu) ** 2, axis=-1, keepdims=True)
            return (v - mu) * jax.lax.rsqrt(var + 1e-5) * w + b

        def attend(q, k, v, ow, ob):
            # q already carries the 1/sqrt(hd) scale (folded into weights in the glue).
            # Per-head out-projection accumulation (no lane-concat of heads).
            q_bf = q.astype(bf16)
            k_bf = k.astype(bf16)
            v_bf = v.astype(bf16)
            out = None
            for h in range(H):
                sl = slice(h * hd, (h + 1) * hd)
                s = mm_t(q_bf[:, sl], k_bf[:, sl]) + mask        # (SN, SN) f32
                s = s - jnp.max(s, axis=-1, keepdims=True)
                e = jnp.exp(s)
                r = jnp.sum(e, axis=-1, keepdims=True)
                pv = mm(e.astype(bf16), v_bf[:, sl])             # (SN, hd) f32
                pv = pv * pl.reciprocal(r, approx=True)          # deferred normalize (EUP)
                contrib = mm(pv.astype(bf16), ow[sl, :])         # (SN, E) f32
                out = contrib if out is None else out + contrib
            return out + ob

        # ---- hoisted loop-invariant cross-attn K/V for ALL layers: one lane-dense matmul
        kv_all = mm(mem_bf, w_ref[KV_OFF:KV_OFF + E, :]) + b_ref[0:1, :]   # (SN, 128) f32

        for l in range(L):
            wo = w_off(l)
            bo = b_off(l)
            ow_pack = w_ref[wo + E:wo + 2 * E, :]   # (E,128) bf16: [sa_ow | ca_qw | ca_ow | 0]
            sa_b = b_ref[bo:bo + 1, :]              # (1,128): padded fused QKV bias (q scaled)
            ob_pack = b_ref[bo + 1:bo + 2, :]       # (1,128): [sa_ob | ca_qb | ca_ob | 0]
            l1b = b_ref[bo + 2:bo + 3, :]           # (1,128)
            ln12 = b_ref[bo + 3:bo + 4, :]          # (1,128): [ln1w | ln1b | ln2w | ln2b]
            ln3x = b_ref[bo + 4:bo + 5, :]          # (1,128): [ln3w | ln3b | l2b | 0]

            # ---- self-attention: fused QKV projection, zero-padded to N=128 ----
            x_bf = x.astype(bf16)
            qkv = mm(x_bf, w_ref[wo:wo + E, :]) + sa_b                      # (SN, 128) f32
            sa = attend(qkv[:, 0:E], qkv[:, E:2 * E], qkv[:, 2 * E:3 * E],
                        ow_pack[:, 0:E], ob_pack[:, 0:E])
            x = layernorm(x + sa, ln12[:, 0:E], ln12[:, E:2 * E])

            # ---- cross-attention vs memory (K/V hoisted, only q-proj per layer) ----
            x_bf = x.astype(bf16)
            q = mm(x_bf, ow_pack[:, E:2 * E]) + ob_pack[:, E:2 * E]         # (SN, E) f32
            ca = attend(q,
                        kv_all[:, 2 * E * l:2 * E * l + E],
                        kv_all[:, 2 * E * l + E:2 * E * l + 2 * E],
                        ow_pack[:, 2 * E:3 * E], ob_pack[:, 2 * E:3 * E])
            x = layernorm(x + ca, ln12[:, 2 * E:3 * E], ln12[:, 3 * E:4 * E])

            # ---- feed-forward: linear(4E) -> relu -> linear(E) (l2 transpose-packed) ----
            x_bf = x.astype(bf16)
            h1 = jnp.maximum(mm(x_bf, w_ref[wo + 2 * E:wo + 3 * E, :]) + l1b, 0.0)
            ff = mm_t(h1.astype(bf16), w_ref[wo + 3 * E:wo + 4 * E, :]) + ln3x[:, 2 * E:3 * E]
            x = layernorm(x + ff, ln3x[:, 0:E], ln3x[:, E:2 * E])

        # final dropout is identity in eval mode; lm_head has no bias.
        # V = 128 -> lane-dense output store.
        out_ref[...] = mm(x.astype(bf16), w_ref[LM_OFF:LM_OFF + E, 0:V])

    return kernel


def init_params(key, V, E, H, L, block_size):
    """Parameters in PyTorch layout (same as nn.TransformerDecoderLayer)."""
    def nrm(k, shape, scale=0.02):
        return jax.random.normal(k, shape, jnp.float32) * scale

    ks = jax.random.split(key, 16)
    p = {
        "tok_emb": nrm(ks[0], (V, E), 1.0),
        "pos_emb": nrm(ks[1], (block_size, E), 1.0),
        "sa_inw": nrm(ks[2], (L, 3 * E, E)),
        "sa_inb": jnp.zeros((L, 1, 3 * E), jnp.float32),
        "sa_ow": nrm(ks[3], (L, E, E)),
        "sa_ob": jnp.zeros((L, 1, E), jnp.float32),
        "ca_inw": nrm(ks[4], (L, 3 * E, E)),
        "ca_inb": jnp.zeros((L, 1, 3 * E), jnp.float32),
        "ca_ow": nrm(ks[5], (L, E, E)),
        "ca_ob": jnp.zeros((L, 1, E), jnp.float32),
        "l1w": nrm(ks[6], (L, 4 * E, E)),
        "l1b": jnp.zeros((L, 1, 4 * E), jnp.float32),
        "l2w": nrm(ks[7], (L, E, 4 * E)),
        "l2b": jnp.zeros((L, 1, E), jnp.float32),
        "ln1w": jnp.ones((L, 1, E), jnp.float32),
        "ln1b": jnp.zeros((L, 1, E), jnp.float32),
        "ln2w": jnp.ones((L, 1, E), jnp.float32),
        "ln2b": jnp.zeros((L, 1, E), jnp.float32),
        "ln3w": jnp.ones((L, 1, E), jnp.float32),
        "ln3b": jnp.zeros((L, 1, E), jnp.float32),
        "lm_w": nrm(ks[8], (V, E)),
    }
    return p


def _pad_lanes(a, width=LANES):
    """Zero-pad the last (lane) axis of a 2-D array to `width`."""
    n = a.shape[-1]
    if n == width:
        return a
    return jnp.pad(a, ((0, 0), (0, width - n)))


def model_forward(idx, params, *, V=VOCAB_SIZE, E=N_EMBD, H=N_HEAD, L=N_LAYER):
    B, T = idx.shape
    SN = B * T
    hd = E // H
    scale = 1.0 / math.sqrt(hd)
    bf = jnp.bfloat16
    f32 = jnp.float32

    # packing feasibility at these (small) shapes
    assert E % H == 0 and E % 8 == 0
    assert 3 * E <= LANES and 4 * E <= LANES
    assert 2 * E * L <= LANES and V <= LANES and E + SN <= LANES

    # --- embedding glue (gather + add) ---
    tok = params["tok_emb"][idx]                      # (B, T, E)
    pos = params["pos_emb"][:T]                       # (T, E)
    x2d = (tok + pos[None, :, :]).reshape(SN, E).astype(f32)

    # --- additive equal-t attention mask, packed next to x2d (one DMA) ---
    t_idx = jnp.arange(SN, dtype=jnp.int32) % T
    attn_mask = jnp.where(t_idx[:, None] == t_idx[None, :], 0.0, -1e30).astype(f32)
    xm = _pad_lanes(jnp.concatenate([x2d, attn_mask], axis=1))          # (SN, 128) f32

    # --- one-time weight re-layout into a single bf16 slab ([K,N] MXU layout) ---
    q_scale_qkv = jnp.concatenate([jnp.full((E,), scale, f32),
                                   jnp.ones((2 * E,), f32)])            # fold 1/sqrt(hd) into q
    sa_w_t = jnp.swapaxes(params["sa_inw"], 1, 2) * q_scale_qkv         # (L, E, 3E)
    sa_ow_t = jnp.swapaxes(params["sa_ow"], 1, 2)                       # (L, E, E)
    ca_w_t = jnp.swapaxes(params["ca_inw"], 1, 2)                       # (L, E, 3E)
    ca_qw_t = ca_w_t[:, :, 0:E] * scale                                 # (L, E, E)
    ca_ow_t = jnp.swapaxes(params["ca_ow"], 1, 2)                       # (L, E, E)
    l1w_t = jnp.swapaxes(params["l1w"], 1, 2)                           # (L, E, 4E)

    w_blocks = []
    # hoisted cross-attn K/V weights for all layers, lane-packed: layer l at lanes [2E*l, 2E*(l+1))
    kv_all_w = jnp.concatenate([ca_w_t[l][:, E:3 * E] for l in range(L)], axis=1)
    w_blocks.append(_pad_lanes(kv_all_w))                               # (E, 128)
    w_blocks.append(_pad_lanes(params["lm_w"].T))                       # (E, 128)  lm_head
    for l in range(L):
        w_blocks.append(_pad_lanes(sa_w_t[l]))                          # fused QKV, N padded->128
        w_blocks.append(_pad_lanes(jnp.concatenate(                     # [sa_ow | ca_qw | ca_ow]
            [sa_ow_t[l], ca_qw_t[l], ca_ow_t[l]], axis=1)))
        w_blocks.append(_pad_lanes(l1w_t[l]))                           # (E, 4E=128)
        w_blocks.append(_pad_lanes(params["l2w"][l]))                   # (E, 4E) transpose-packed
    w_slab = jnp.concatenate(w_blocks, axis=0).astype(bf)               # (2E + 4E*L, 128) bf16

    # --- one-time bias / layernorm re-layout into a single lane-dense f32 slab ---
    sa_b = params["sa_inb"] * q_scale_qkv                               # (L, 1, 3E)
    ca_qb = params["ca_inb"][:, :, 0:E] * scale                         # (L, 1, E)
    b_rows = [_pad_lanes(jnp.concatenate(
        [params["ca_inb"][l][:, E:3 * E] for l in range(L)], axis=1))]  # kv bias, all layers
    for l in range(L):
        b_rows.append(_pad_lanes(sa_b[l]))                              # fused QKV bias
        b_rows.append(_pad_lanes(jnp.concatenate(
            [params["sa_ob"][l], ca_qb[l], params["ca_ob"][l]], axis=1)))
        b_rows.append(_pad_lanes(params["l1b"][l]))
        b_rows.append(_pad_lanes(jnp.concatenate(
            [params["ln1w"][l], params["ln1b"][l],
             params["ln2w"][l], params["ln2b"][l]], axis=1)))
        b_rows.append(_pad_lanes(jnp.concatenate(
            [params["ln3w"][l], params["ln3b"][l], params["l2b"][l]], axis=1)))
    b_slab = jnp.concatenate(b_rows, axis=0).astype(f32)                # (1 + 5L, 128) f32

    kernel = _make_kernel(B, T, E, H, L, V)
    logits2d = pl.pallas_call(
        kernel,
        out_shape=jax.ShapeDtypeStruct((SN, V), jnp.float32),
        in_specs=[pl.BlockSpec(memory_space=pltpu.MemorySpace.VMEM)] * 3,
        out_specs=pl.BlockSpec(memory_space=pltpu.MemorySpace.VMEM),
        # single-shot, all-resident, single TensorCore: no grid (per-step overhead
        # would dominate); footprint << 1 MiB so 32 MiB scoped VMEM is plenty on v7x too.
        compiler_params=pltpu.CompilerParams(vmem_limit_bytes=32 * 1024 * 1024),
    )(xm, w_slab, b_slab)
    return logits2d.reshape(B, T, V)
    # TODO(synk): targets / F.cross_entropy loss path and generate()'s
    # torch.multinomial sampling loop are not implemented in the kernel.


def reference_forward(idx, p, *, E=N_EMBD, H=N_HEAD, L=N_LAYER):
    """Pure-jnp f32 reference of the same math (PyTorch layout weights)."""
    B, T = idx.shape
    SN, hd = B * T, E // H
    scale = 1.0 / math.sqrt(hd)
    x2d = (p["tok_emb"][idx] + p["pos_emb"][:T][None]).reshape(SN, E)
    mask = jnp.where((jnp.arange(SN)[:, None] % T) == (jnp.arange(SN)[None, :] % T),
                     0.0, -1e30)

    def ln(v, w, b):
        mu = v.mean(-1, keepdims=True)
        var = ((v - mu) ** 2).mean(-1, keepdims=True)
        return (v - mu) / jnp.sqrt(var + 1e-5) * w + b

    def mha(q_in, kv_in, in_w, in_b, out_w, out_b):
        q = q_in @ in_w[0:E].T + in_b[:, 0:E]
        k = kv_in @ in_w[E:2 * E].T + in_b[:, E:2 * E]
        v = kv_in @ in_w[2 * E:].T + in_b[:, 2 * E:]
        out = jnp.zeros((SN, E), jnp.float32)
        for h in range(H):
            sl = slice(h * hd, (h + 1) * hd)
            s = q[:, sl] @ k[:, sl].T * scale + mask
            s = s - s.max(-1, keepdims=True)
            e = jnp.exp(s)
            pr = e / e.sum(-1, keepdims=True)
            out = out + (pr @ v[:, sl]) @ out_w[:, sl].T
        return out + out_b

    x, mem = x2d, x2d
    for l in range(L):
        x = ln(x + mha(x, x, p["sa_inw"][l], p["sa_inb"][l],
                       p["sa_ow"][l], p["sa_ob"][l]), p["ln1w"][l], p["ln1b"][l])
        x = ln(x + mha(x, mem, p["ca_inw"][l], p["ca_inb"][l],
                       p["ca_ow"][l], p["ca_ob"][l]), p["ln2w"][l], p["ln2b"][l])
        h1 = jnp.maximum(x @ p["l1w"][l].T + p["l1b"][l], 0.0)
        x = ln(x + h1 @ p["l2w"][l].T + p["l2b"][l], p["ln3w"][l], p["ln3b"][l])
    return (x @ p["lm_w"].T).reshape(B, T, -1)


if __name__ == "__main__":
    key = jax.random.PRNGKey(0)
    k_param, k_idx = jax.random.split(key)
    params = init_params(k_param, VOCAB_SIZE, N_EMBD, N_HEAD, N_LAYER, BLOCK_SIZE)
    idx = jax.random.randint(k_idx, (BATCH, SEQ), 0, VOCAB_SIZE, dtype=jnp.int32)

    logits = model_forward(idx, params)
    logits = jax.block_until_ready(logits)

    ref = reference_forward(idx, params)
    assert logits.shape == (BATCH, SEQ, VOCAB_SIZE)
    assert bool(jnp.all(jnp.isfinite(logits)))
    # kernel uses bf16 MXU inputs + approx reciprocal; f32 reference -> 2e-2 tolerance
    assert bool(jnp.allclose(logits, ref, atol=2e-2, rtol=2e-2))
    print("KERNEL_OK")
</pallas_src>

<mosaic_0001>
module attributes {stable_mosaic.version = 11 : i64} {
  func.func @kernel(%arg0: memref<16x128xf32, #tpu.memory_space<vmem>>, %arg1: memref<320x128xbf16, #tpu.memory_space<vmem>>, %arg2: memref<11x128xf32, #tpu.memory_space<vmem>>, %arg3: memref<16x128xf32, #tpu.memory_space<vmem>>) attributes {dimension_semantics = [], scalar_prefetch = 0 : i64, scratch_operands = 0 : i64, tpu.core_type = #tpu.core_type<tc>} {
    %c0 = arith.constant 0 : index
    %c0_0 = arith.constant 0 : index
    %0 = vector.load %arg0[%c0, %c0_0] : memref<16x128xf32, #tpu.memory_space<vmem>>, vector<16x32xf32>
    %c0_1 = arith.constant 0 : index
    %c32 = arith.constant 32 : index
    %1 = vector.load %arg0[%c0_1, %c32] : memref<16x128xf32, #tpu.memory_space<vmem>>, vector<16x16xf32>
    %2 = arith.truncf %0 : vector<16x32xf32> to vector<16x32xbf16>
    %c0_2 = arith.constant 0 : index
    %c0_3 = arith.constant 0 : index
    %3 = vector.load %arg1[%c0_2, %c0_3] : memref<320x128xbf16, #tpu.memory_space<vmem>>, vector<32x128xbf16>
    %cst = arith.constant dense<0.000000e+00> : vector<16x128xf32>
    %4 = tpu.matmul %2, %3, %cst {dimension_numbers = #tpu.dot_dimension_numbers<[1], [0], [0], [1], [0, 0, 1, 1], [], []>} : vector<16x32xbf16>, vector<32x128xbf16>, vector<16x128xf32> -> vector<16x128xf32>
    %c0_4 = arith.constant 0 : index
    %c0_5 = arith.constant 0 : index
    %5 = vector.load %arg2[%c0_4, %c0_5] : memref<11x128xf32, #tpu.memory_space<vmem>>, vector<1x128xf32>
    %6 = vector.broadcast %5 : vector<1x128xf32> to vector<16x128xf32>
    %7 = arith.addf %4, %6 : vector<16x128xf32>
    %c96 = arith.constant 96 : index
    %c0_6 = arith.constant 0 : index
    %8 = vector.load %arg1[%c96, %c0_6] : memref<320x128xbf16, #tpu.memory_space<vmem>>, vector<32x128xbf16>
    %c1 = arith.constant 1 : index
    %c0_7 = arith.constant 0 : index
    %9 = vector.load %arg2[%c1, %c0_7] : memref<11x128xf32, #tpu.memory_space<vmem>>, vector<1x128xf32>
    %c2 = arith.constant 2 : index
    %c0_8 = arith.constant 0 : index
    %10 = vector.load %arg2[%c2, %c0_8] : memref<11x128xf32, #tpu.memory_space<vmem>>, vector<1x128xf32>
    %c3 = arith.constant 3 : index
    %c0_9 = arith.constant 0 : index
    %11 = vector.load %arg2[%c3, %c0_9] : memref<11x128xf32, #tpu.memory_space<vmem>>, vector<1x128xf32>
    %c4 = arith.constant 4 : index
    %c0_10 = arith.constant 0 : index
    %12 = vector.load %arg2[%c4, %c0_10] : memref<11x128xf32, #tpu.memory_space<vmem>>, vector<1x128xf32>
    %c5 = arith.constant 5 : index
    %c0_11 = arith.constant 0 : index
    %13 = vector.load %arg2[%c5, %c0_11] : memref<11x128xf32, #tpu.memory_space<vmem>>, vector<1x128xf32>
    %14 = arith.truncf %0 : vector<16x32xf32> to vector<16x32xbf16>
    %c64 = arith.constant 64 : index
    %c0_12 = arith.constant 0 : index
    %15 = vector.load %arg1[%c64, %c0_12] : memref<320x128xbf16, #tpu.memory_space<vmem>>, vector<32x128xbf16>
    %cst_13 = arith.constant dense<0.000000e+00> : vector<16x128xf32>
    %16 = tpu.matmul %14, %15, %cst_13 {dimension_numbers = #tpu.dot_dimension_numbers<[1], [0], [0], [1], [0, 0, 1, 1], [], []>} : vector<16x32xbf16>, vector<32x128xbf16>, vector<16x128xf32> -> vector<16x128xf32>
    %17 = vector.broadcast %9 : vector<1x128xf32> to vector<16x128xf32>
    %18 = arith.addf %16, %17 : vector<16x128xf32>
    %19 = vector.extract_strided_slice %18 {offsets = [0, 0], sizes = [16, 32], strides = [1, 1]} : vector<16x128xf32> to vector<16x32xf32>
    %20 = vector.extract_strided_slice %18 {offsets = [0, 32], sizes = [16, 32], strides = [1, 1]} : vector<16x128xf32> to vector<16x32xf32>
    %21 = vector.extract_strided_slice %18 {offsets = [0, 64], sizes = [16, 32], strides = [1, 1]} : vector<16x128xf32> to vector<16x32xf32>
    %22 = vector.extract_strided_slice %8 {offsets = [0, 0], sizes = [32, 32], strides = [1, 1]} : vector<32x128xbf16> to vector<32x32xbf16>
    %23 = vector.extract_strided_slice %10 {offsets = [0, 0], sizes = [1, 32], strides = [1, 1]} : vector<1x128xf32> to vector<1x32xf32>
    %24 = arith.truncf %19 : vector<16x32xf32> to vector<16x32xbf16>
    %25 = arith.truncf %20 : vector<16x32xf32> to vector<16x32xbf16>
    %26 = arith.truncf %21 : vector<16x32xf32> to vector<16x32xbf16>
    %27 = vector.extract_strided_slice %24 {offsets = [0, 0], sizes = [16, 8], strides = [1, 1]} : vector<16x32xbf16> to vector<16x8xbf16>
    %28 = vector.extract_strided_slice %25 {offsets = [0, 0], sizes = [16, 8], strides = [1, 1]} : vector<16x32xbf16> to vector<16x8xbf16>
    %cst_14 = arith.constant dense<0.000000e+00> : vector<16x16xf32>
    %29 = tpu.matmul %27, %28, %cst_14 {dimension_numbers = #tpu.dot_dimension_numbers<[1], [1], [0], [0], [0, 0, 1, 0], [], []>} : vector<16x8xbf16>, vector<16x8xbf16>, vector<16x16xf32> -> vector<16x16xf32>
    %30 = arith.addf %29, %1 : vector<16x16xf32>
    %cst_15 = arith.constant dense<0xFF800000> : vector<16xf32>
    %31 = vector.multi_reduction <maximumf>, %30, %cst_15 [1] : vector<16x16xf32> to vector<16xf32>
    %32 = vector.shape_cast %31 : vector<16xf32> to vector<16x1xf32>
    %33 = vector.broadcast %32 : vector<16x1xf32> to vector<16x16xf32>
    %34 = arith.subf %30, %33 : vector<16x16xf32>
    %35 = math.exp %34 : vector<16x16xf32>
    %cst_16 = arith.constant dense<0.000000e+00> : vector<16xf32>
    %36 = vector.multi_reduction <add>, %35, %cst_16 [1] : vector<16x16xf32> to vector<16xf32>
    %37 = vector.shape_cast %36 : vector<16xf32> to vector<16x1xf32>
    %38 = arith.truncf %35 : vector<16x16xf32> to vector<16x16xbf16>
    %39 = vector.extract_strided_slice %26 {offsets = [0, 0], sizes = [16, 8], strides = [1, 1]} : vector<16x32xbf16> to vector<16x8xbf16>
    %cst_17 = arith.constant dense<0.000000e+00> : vector<16x8xf32>
    %40 = tpu.matmul %38, %39, %cst_17 {dimension_numbers = #tpu.dot_dimension_numbers<[1], [0], [0], [1], [0, 0, 1, 1], [], []>} : vector<16x16xbf16>, vector<16x8xbf16>, vector<16x8xf32> -> vector<16x8xf32>
    %41 = tpu.reciprocal %37 {approx = true} : vector<16x1xf32> -> vector<16x1xf32>
    %42 = vector.broadcast %41 : vector<16x1xf32> to vector<16x8xf32>
    %43 = arith.mulf %40, %42 : vector<16x8xf32>
    %44 = arith.truncf %43 : vector<16x8xf32> to vector<16x8xbf16>
    %45 = vector.extract_strided_slice %22 {offsets = [0, 0], sizes = [8, 32], strides = [1, 1]} : vector<32x32xbf16> to vector<8x32xbf16>
    %cst_18 = arith.constant dense<0.000000e+00> : vector<16x32xf32>
    %46 = tpu.matmul %44, %45, %cst_18 {dimension_numbers = #tpu.dot_dimension_numbers<[1], [0], [0], [1], [0, 0, 1, 1], [], []>} : vector<16x8xbf16>, vector<8x32xbf16>, vector<16x32xf32> -> vector<16x32xf32>
    %47 = vector.extract_strided_slice %24 {offsets = [0, 8], sizes = [16, 8], strides = [1, 1]} : vector<16x32xbf16> to vector<16x8xbf16>
    %48 = vector.extract_strided_slice %25 {offsets = [0, 8], sizes = [16, 8], strides = [1, 1]} : vector<16x32xbf16> to vector<16x8xbf16>
    %cst_19 = arith.constant dense<0.000000e+00> : vector<16x16xf32>
    %49 = tpu.matmul %47, %48, %cst_19 {dimension_numbers = #tpu.dot_dimension_numbers<[1], [1], [0], [0], [0, 0, 1, 0], [], []>} : vector<16x8xbf16>, vector<16x8xbf16>, vector<16x16xf32> -> vector<16x16xf32>
    %50 = arith.addf %49, %1 : vector<16x16xf32>
    %cst_20 = arith.constant dense<0xFF800000> : vector<16xf32>
    %51 = vector.multi_reduction <maximumf>, %50, %cst_20 [1] : vector<16x16xf32> to vector<16xf32>
    %52 = vector.shape_cast %51 : vector<16xf32> to vector<16x1xf32>
    %53 = vector.broadcast %52 : vector<16x1xf32> to vector<16x16xf32>
    %54 = arith.subf %50, %53 : vector<16x16xf32>
    %55 = math.exp %54 : vector<16x16xf32>
    %cst_21 = arith.constant dense<0.000000e+00> : vector<16xf32>
    %56 = vector.multi_reduction <add>, %55, %cst_21 [1] : vector<16x16xf32> to vector<16xf32>
    %57 = vector.shape_cast %56 : vector<16xf32> to vector<16x1xf32>
    %58 = arith.truncf %55 : vector<16x16xf32> to vector<16x16xbf16>
    %59 = vector.extract_strided_slice %26 {offsets = [0, 8], sizes = [16, 8], strides = [1, 1]} : vector<16x32xbf16> to vector<16x8xbf16>
    %cst_22 = arith.constant dense<0.000000e+00> : vector<16x8xf32>
    %60 = tpu.matmul %58, %59, %cst_22 {dimension_numbers = #tpu.dot_dimension_numbers<[1], [0], [0], [1], [0, 0, 1, 1], [], []>} : vector<16x16xbf16>, vector<16x8xbf16>, vector<16x8xf32> -> vector<16x8xf32>
    %61 = tpu.reciprocal %57 {approx = true} : vector<16x1xf32> -> vector<16x1xf32>
    %62 = vector.broadcast %61 : vector<16x1xf32> to vector<16x8xf32>
    %63 = arith.mulf %60, %62 : vector<16x8xf32>
    %64 = arith.truncf %63 : vector<16x8xf32> to vector<16x8xbf16>
    %65 = vector.extract_strided_slice %22 {offsets = [8, 0], sizes = [8, 32], strides = [1, 1]} : vector<32x32xbf16> to vector<8x32xbf16>
    %cst_23 = arith.constant dense<0.000000e+00> : vector<16x32xf32>
    %66 = tpu.matmul %64, %65, %cst_23 {dimension_numbers = #tpu.dot_dimension_numbers<[1], [0], [0], [1], [0, 0, 1, 1], [], []>} : vector<16x8xbf16>, vector<8x32xbf16>, vector<16x32xf32> -> vector<16x32xf32>
    %67 = arith.addf %46, %66 : vector<16x32xf32>
    %68 = vector.extract_strided_slice %24 {offsets = [0, 16], sizes = [16, 8], strides = [1, 1]} : vector<16x32xbf16> to vector<16x8xbf16>
    %69 = vector.extract_strided_slice %25 {offsets = [0, 16], sizes = [16, 8], strides = [1, 1]} : vector<16x32xbf16> to vector<16x8xbf16>
    %cst_24 = arith.constant dense<0.000000e+00> : vector<16x16xf32>
    %70 = tpu.matmul %68, %69, %cst_24 {dimension_numbers = #tpu.dot_dimension_numbers<[1], [1], [0], [0], [0, 0, 1, 0], [], []>} : vector<16x8xbf16>, vector<16x8xbf16>, vector<16x16xf32> -> vector<16x16xf32>
    %71 = arith.addf %70, %1 : vector<16x16xf32>
    %cst_25 = arith.constant dense<0xFF800000> : vector<16xf32>
    %72 = vector.multi_reduction <maximumf>, %71, %cst_25 [1] : vector<16x16xf32> to vector<16xf32>
    %73 = vector.shape_cast %72 : vector<16xf32> to vector<16x1xf32>
    %74 = vector.broadcast %73 : vector<16x1xf32> to vector<16x16xf32>
    %75 = arith.subf %71, %74 : vector<16x16xf32>
    %76 = math.exp %75 : vector<16x16xf32>
    %cst_26 = arith.constant dense<0.000000e+00> : vector<16xf32>
    %77 = vector.multi_reduction <add>, %76, %cst_26 [1] : vector<16x16xf32> to vector<16xf32>
    %78 = vector.shape_cast %77 : vector<16xf32> to vector<16x1xf32>
    %79 = arith.truncf %76 : vector<16x16xf32> to vector<16x16xbf16>
    %80 = vector.extract_strided_slice %26 {offsets = [0, 16], sizes = [16, 8], strides = [1, 1]} : vector<16x32xbf16> to vector<16x8xbf16>
    %cst_27 = arith.constant dense<0.000000e+00> : vector<16x8xf32>
    %81 = tpu.matmul %79, %80, %cst_27 {dimension_numbers = #tpu.dot_dimension_numbers<[1], [0], [0], [1], [0, 0, 1, 1], [], []>} : vector<16x16xbf16>, vector<16x8xbf16>, vector<16x8xf32> -> vector<16x8xf32>
    %82 = tpu.reciprocal %78 {approx = true} : vector<16x1xf32> -> vector<16x1xf32>
    %83 = vector.broadcast %82 : vector<16x1xf32> to vector<16x8xf32>
    %84 = arith.mulf %81, %83 : vector<16x8xf32>
    %85 = arith.truncf %84 : vector<16x8xf32> to vector<16x8xbf16>
    %86 = vector.extract_strided_slice %22 {offsets = [16, 0], sizes = [8, 32], strides = [1, 1]} : vector<32x32xbf16> to vector<8x32xbf16>
    %cst_28 = arith.constant dense<0.000000e+00> : vector<16x32xf32>
    %87 = tpu.matmul %85, %86, %cst_28 {dimension_numbers = #tpu.dot_dimension_numbers<[1], [0], [0], [1], [0, 0, 1, 1], [], []>} : vector<16x8xbf16>, vector<8x32xbf16>, vector<16x32xf32> -> vector<16x32xf32>
    %88 = arith.addf %67, %87 : vector<16x32xf32>
    %89 = vector.extract_strided_slice %24 {offsets = [0, 24], sizes = [16, 8], strides = [1, 1]} : vector<16x32xbf16> to vector<16x8xbf16>
    %90 = vector.extract_strided_slice %25 {offsets = [0, 24], sizes = [16, 8], strides = [1, 1]} : vector<16x32xbf16> to vector<16x8xbf16>
    %cst_29 = arith.constant dense<0.000000e+00> : vector<16x16xf32>
    %91 = tpu.matmul %89, %90, %cst_29 {dimension_numbers = #tpu.dot_dimension_numbers<[1], [1], [0], [0], [0, 0, 1, 0], [], []>} : vector<16x8xbf16>, vector<16x8xbf16>, vector<16x16xf32> -> vector<16x16xf32>
    %92 = arith.addf %91, %1 : vector<16x16xf32>
    %cst_30 = arith.constant dense<0xFF800000> : vector<16xf32>
    %93 = vector.multi_reduction <maximumf>, %92, %cst_30 [1] : vector<16x16xf32> to vector<16xf32>
    %94 = vector.shape_cast %93 : vector<16xf32> to vector<16x1xf32>
    %95 = vector.broadcast %94 : vector<16x1xf32> to vector<16x16xf32>
    %96 = arith.subf %92, %95 : vector<16x16xf32>
    %97 = math.exp %96 : vector<16x16xf32>
    %cst_31 = arith.constant dense<0.000000e+00> : vector<16xf32>
    %98 = vector.multi_reduction <add>, %97, %cst_31 [1] : vector<16x16xf32> to vector<16xf32>
    %99 = vector.shape_cast %98 : vector<16xf32> to vector<16x1xf32>
    %100 = arith.truncf %97 : vector<16x16xf32> to vector<16x16xbf16>
    %101 = vector.extract_strided_slice %26 {offsets = [0, 24], sizes = [16, 8], strides = [1, 1]} : vector<16x32xbf16> to vector<16x8xbf16>
    %cst_32 = arith.constant dense<0.000000e+00> : vector<16x8xf32>
    %102 = tpu.matmul %100, %101, %cst_32 {dimension_numbers = #tpu.dot_dimension_numbers<[1], [0], [0], [1], [0, 0, 1, 1], [], []>} : vector<16x16xbf16>, vector<16x8xbf16>, vector<16x8xf32> -> vector<16x8xf32>
    %103 = tpu.reciprocal %99 {approx = true} : vector<16x1xf32> -> vector<16x1xf32>
    %104 = vector.broadcast %103 : vector<16x1xf32> to vector<16x8xf32>
    %105 = arith.mulf %102, %104 : vector<16x8xf32>
    %106 = arith.truncf %105 : vector<16x8xf32> to vector<16x8xbf16>
    %107 = vector.extract_strided_slice %22 {offsets = [24, 0], sizes = [8, 32], strides = [1, 1]} : vector<32x32xbf16> to vector<8x32xbf16>
    %cst_33 = arith.constant dense<0.000000e+00> : vector<16x32xf32>
    %108 = tpu.matmul %106, %107, %cst_33 {dimension_numbers = #tpu.dot_dimension_numbers<[1], [0], [0], [1], [0, 0, 1, 1], [], []>} : vector<16x8xbf16>, vector<8x32xbf16>, vector<16x32xf32> -> vector<16x32xf32>
    %109 = arith.addf %88, %108 : vector<16x32xf32>
    %110 = vector.broadcast %23 : vector<1x32xf32> to vector<16x32xf32>
    %111 = arith.addf %109, %110 : vector<16x32xf32>
    %112 = arith.addf %0, %111 : vector<16x32xf32>
    %113 = vector.extract_strided_slice %12 {offsets = [0, 0], sizes = [1, 32], strides = [1, 1]} : vector<1x128xf32> to vector<1x32xf32>
    %114 = vector.extract_strided_slice %12 {offsets = [0, 32], sizes = [1, 32], strides = [1, 1]} : vector<1x128xf32> to vector<1x32xf32>
    %cst_34 = arith.constant dense<0.000000e+00> : vector<16xf32>
    %115 = vector.multi_reduction <add>, %112, %cst_34 [1] : vector<16x32xf32> to vector<16xf32>
    %116 = vector.shape_cast %115 : vector<16xf32> to vector<16x1xf32>
    %cst_35 = arith.constant 3.200000e+01 : f32
    %117 = vector.broadcast %cst_35 : f32 to vector<16x1xf32>
    %118 = arith.divf %116, %117 : vector<16x1xf32>
    %119 = vector.broadcast %118 : vector<16x1xf32> to vector<16x32xf32>
    %120 = arith.subf %112, %119 : vector<16x32xf32>
    %121 = arith.mulf %120, %120 : vector<16x32xf32>
    %cst_36 = arith.constant dense<0.000000e+00> : vector<16xf32>
    %122 = vector.multi_reduction <add>, %121, %cst_36 [1] : vector<16x32xf32> to vector<16xf32>
    %123 = vector.shape_cast %122 : vector<16xf32> to vector<16x1xf32>
    %cst_37 = arith.constant 3.200000e+01 : f32
    %124 = vector.broadcast %cst_37 : f32 to vector<16x1xf32>
    %125 = arith.divf %123, %124 : vector<16x1xf32>
    %126 = vector.broadcast %118 : vector<16x1xf32> to vector<16x32xf32>
    %127 = arith.subf %112, %126 : vector<16x32xf32>
    %cst_38 = arith.constant 9.99999974E-6 : f32
    %128 = vector.broadcast %cst_38 : f32 to vector<16x1xf32>
    %129 = arith.addf %125, %128 : vector<16x1xf32>
    %130 = math.rsqrt %129 : vector<16x1xf32>
    %131 = vector.broadcast %130 : vector<16x1xf32> to vector<16x32xf32>
    %132 = arith.mulf %127, %131 : vector<16x32xf32>
    %133 = vector.broadcast %113 : vector<1x32xf32> to vector<16x32xf32>
    %134 = arith.mulf %132, %133 : vector<16x32xf32>
    %135 = vector.broadcast %114 : vector<1x32xf32> to vector<16x32xf32>
    %136 = arith.addf %134, %135 : vector<16x32xf32>
    %137 = arith.truncf %136 : vector<16x32xf32> to vector<16x32xbf16>
    %138 = vector.extract_strided_slice %8 {offsets = [0, 32], sizes = [32, 32], strides = [1, 1]} : vector<32x128xbf16> to vector<32x32xbf16>
    %cst_39 = arith.constant dense<0.000000e+00> : vector<16x32xf32>
    %139 = tpu.matmul %137, %138, %cst_39 {dimension_numbers = #tpu.dot_dimension_numbers<[1], [0], [0], [1], [0, 0, 1, 1], [], []>} : vector<16x32xbf16>, vector<32x32xbf16>, vector<16x32xf32> -> vector<16x32xf32>
    %140 = vector.extract_strided_slice %10 {offsets = [0, 32], sizes = [1, 32], strides = [1, 1]} : vector<1x128xf32> to vector<1x32xf32>
    %141 = vector.broadcast %140 : vector<1x32xf32> to vector<16x32xf32>
    %142 = arith.addf %139, %141 : vector<16x32xf32>
    %143 = vector.extract_strided_slice %7 {offsets = [0, 0], sizes = [16, 32], strides = [1, 1]} : vector<16x128xf32> to vector<16x32xf32>
    %144 = vector.extract_strided_slice %7 {offsets = [0, 32], sizes = [16, 32], strides = [1, 1]} : vector<16x128xf32> to vector<16x32xf32>
    %145 = vector.extract_strided_slice %8 {offsets = [0, 64], sizes = [32, 32], strides = [1, 1]} : vector<32x128xbf16> to vector<32x32xbf16>
    %146 = vector.extract_strided_slice %10 {offsets = [0, 64], sizes = [1, 32], strides = [1, 1]} : vector<1x128xf32> to vector<1x32xf32>
    %147 = arith.truncf %142 : vector<16x32xf32> to vector<16x32xbf16>
    %148 = arith.truncf %143 : vector<16x32xf32> to vector<16x32xbf16>
    %149 = arith.truncf %144 : vector<16x32xf32> to vector<16x32xbf16>
    %150 = vector.extract_strided_slice %147 {offsets = [0, 0], sizes = [16, 8], strides = [1, 1]} : vector<16x32xbf16> to vector<16x8xbf16>
    %151 = vector.extract_strided_slice %148 {offsets = [0, 0], sizes = [16, 8], strides = [1, 1]} : vector<16x32xbf16> to vector<16x8xbf16>
    %cst_40 = arith.constant dense<0.000000e+00> : vector<16x16xf32>
    %152 = tpu.matmul %150, %151, %cst_40 {dimension_numbers = #tpu.dot_dimension_numbers<[1], [1], [0], [0], [0, 0, 1, 0], [], []>} : vector<16x8xbf16>, vector<16x8xbf16>, vector<16x16xf32> -> vector<16x16xf32>
    %153 = arith.addf %152, %1 : vector<16x16xf32>
    %cst_41 = arith.constant dense<0xFF800000> : vector<16xf32>
    %154 = vector.multi_reduction <maximumf>, %153, %cst_41 [1] : vector<16x16xf32> to vector<16xf32>
    %155 = vector.shape_cast %154 : vector<16xf32> to vector<16x1xf32>
    %156 = vector.broadcast %155 : vector<16x1xf32> to vector<16x16xf32>
    %157 = arith.subf %153, %156 : vector<16x16xf32>
    %158 = math.exp %157 : vector<16x16xf32>
    %cst_42 = arith.constant dense<0.000000e+00> : vector<16xf32>
    %159 = vector.multi_reduction <add>, %158, %cst_42 [1] : vector<16x16xf32> to vector<16xf32>
    %160 = vector.shape_cast %159 : vector<16xf32> to vector<16x1xf32>
    %161 = arith.truncf %158 : vector<16x16xf32> to vector<16x16xbf16>
    %162 = vector.extract_strided_slice %149 {offsets = [0, 0], sizes = [16, 8], strides = [1, 1]} : vector<16x32xbf16> to vector<16x8xbf16>
    %cst_43 = arith.constant dense<0.000000e+00> : vector<16x8xf32>
    %163 = tpu.matmul %161, %162, %cst_43 {dimension_numbers = #tpu.dot_dimension_numbers<[1], [0], [0], [1], [0, 0, 1, 1], [], []>} : vector<16x16xbf16>, vector<16x8xbf16>, vector<16x8xf32> -> vector<16x8xf32>
    %164 = tpu.reciprocal %160 {approx = true} : vector<16x1xf32> -> vector<16x1xf32>
    %165 = vector.broadcast %164 : vector<16x1xf32> to vector<16x8xf32>
    %166 = arith.mulf %163, %165 : vector<16x8xf32>
    %167 = arith.truncf %166 : vector<16x8xf32> to vector<16x8xbf16>
    %168 = vector.extract_strided_slice %145 {offsets = [0, 0], sizes = [8, 32], strides = [1, 1]} : vector<32x32xbf16> to vector<8x32xbf16>
    %cst_44 = arith.constant dense<0.000000e+00> : vector<16x32xf32>
    %169 = tpu.matmul %167, %168, %cst_44 {dimension_numbers = #tpu.dot_dimension_numbers<[1], [0], [0], [1], [0, 0, 1, 1], [], []>} : vector<16x8xbf16>, vector<8x32xbf16>, vector<16x32xf32> -> vector<16x32xf32>
    %170 = vector.extract_strided_slice %147 {offsets = [0, 8], sizes = [16, 8], strides = [1, 1]} : vector<16x32xbf16> to vector<16x8xbf16>
    %171 = vector.extract_strided_slice %148 {offsets = [0, 8], sizes = [16, 8], strides = [1, 1]} : vector<16x32xbf16> to vector<16x8xbf16>
    %cst_45 = arith.constant dense<0.000000e+00> : vector<16x16xf32>
    %172 = tpu.matmul %170, %171, %cst_45 {dimension_numbers = #tpu.dot_dimension_numbers<[1], [1], [0], [0], [0, 0, 1, 0], [], []>} : vector<16x8xbf16>, vector<16x8xbf16>, vector<16x16xf32> -> vector<16x16xf32>
    %173 = arith.addf %172, %1 : vector<16x16xf32>
    %cst_46 = arith.constant dense<0xFF800000> : vector<16xf32>
    %174 = vector.multi_reduction <maximumf>, %173, %cst_46 [1] : vector<16x16xf32> to vector<16xf32>
    %175 = vector.shape_cast %174 : vector<16xf32> to vector<16x1xf32>
    %176 = vector.broadcast %175 : vector<16x1xf32> to vector<16x16xf32>
    %177 = arith.subf %173, %176 : vector<16x16xf32>
    %178 = math.exp %177 : vector<16x16xf32>
    %cst_47 = arith.constant dense<0.000000e+00> : vector<16xf32>
    %179 = vector.multi_reduction <add>, %178, %cst_47 [1] : vector<16x16xf32> to vector<16xf32>
    %180 = vector.shape_cast %179 : vector<16xf32> to vector<16x1xf32>
    %181 = arith.truncf %178 : vector<16x16xf32> to vector<16x16xbf16>
    %182 = vector.extract_strided_slice %149 {offsets = [0, 8], sizes = [16, 8], strides = [1, 1]} : vector<16x32xbf16> to vector<16x8xbf16>
    %cst_48 = arith.constant dense<0.000000e+00> : vector<16x8xf32>
    %183 = tpu.matmul %181, %182, %cst_48 {dimension_numbers = #tpu.dot_dimension_numbers<[1], [0], [0], [1], [0, 0, 1, 1], [], []>} : vector<16x16xbf16>, vector<16x8xbf16>, vector<16x8xf32> -> vector<16x8xf32>
    %184 = tpu.reciprocal %180 {approx = true} : vector<16x1xf32> -> vector<16x1xf32>
    %185 = vector.broadcast %184 : vector<16x1xf32> to vector<16x8xf32>
    %186 = arith.mulf %183, %185 : vector<16x8xf32>
    %187 = arith.truncf %186 : vector<16x8xf32> to vector<16x8xbf16>
    %188 = vector.extract_strided_slice %145 {offsets = [8, 0], sizes = [8, 32], strides = [1, 1]} : vector<32x32xbf16> to vector<8x32xbf16>
    %cst_49 = arith.constant dense<0.000000e+00> : vector<16x32xf32>
    %189 = tpu.matmul %187, %188, %cst_49 {dimension_numbers = #tpu.dot_dimension_numbers<[1], [0], [0], [1], [0, 0, 1, 1], [], []>} : vector<16x8xbf16>, vector<8x32xbf16>, vector<16x32xf32> -> vector<16x32xf32>
    %190 = arith.addf %169, %189 : vector<16x32xf32>
    %191 = vector.extract_strided_slice %147 {offsets = [0, 16], sizes = [16, 8], strides = [1, 1]} : vector<16x32xbf16> to vector<16x8xbf16>
    %192 = vector.extract_strided_slice %148 {offsets = [0, 16], sizes = [16, 8], strides = [1, 1]} : vector<16x32xbf16> to vector<16x8xbf16>
    %cst_50 = arith.constant dense<0.000000e+00> : vector<16x16xf32>
    %193 = tpu.matmul %191, %192, %cst_50 {dimension_numbers = #tpu.dot_dimension_numbers<[1], [1], [0], [0], [0, 0, 1, 0], [], []>} : vector<16x8xbf16>, vector<16x8xbf16>, vector<16x16xf32> -> vector<16x16xf32>
    %194 = arith.addf %193, %1 : vector<16x16xf32>
    %cst_51 = arith.constant dense<0xFF800000> : vector<16xf32>
    %195 = vector.multi_reduction <maximumf>, %194, %cst_51 [1] : vector<16x16xf32> to vector<16xf32>
    %196 = vector.shape_cast %195 : vector<16xf32> to vector<16x1xf32>
    %197 = vector.broadcast %196 : vector<16x1xf32> to vector<16x16xf32>
    %198 = arith.subf %194, %197 : vector<16x16xf32>
    %199 = math.exp %198 : vector<16x16xf32>
    %cst_52 = arith.constant dense<0.000000e+00> : vector<16xf32>
    %200 = vector.multi_reduction <add>, %199, %cst_52 [1] : vector<16x16xf32> to vector<16xf32>
    %201 = vector.shape_cast %200 : vector<16xf32> to vector<16x1xf32>
    %202 = arith.truncf %199 : vector<16x16xf32> to vector<16x16xbf16>
    %203 = vector.extract_strided_slice %149 {offsets = [0, 16], sizes = [16, 8], strides = [1, 1]} : vector<16x32xbf16> to vector<16x8xbf16>
    %cst_53 = arith.constant dense<0.000000e+00> : vector<16x8xf32>
    %204 = tpu.matmul %202, %203, %cst_53 {dimension_numbers = #tpu.dot_dimension_numbers<[1], [0], [0], [1], [0, 0, 1, 1], [], []>} : vector<16x16xbf16>, vector<16x8xbf16>, vector<16x8xf32> -> vector<16x8xf32>
    %205 = tpu.reciprocal %201 {approx = true} : vector<16x1xf32> -> vector<16x1xf32>
    %206 = vector.broadcast %205 : vector<16x1xf32> to vector<16x8xf32>
    %207 = arith.mulf %204, %206 : vector<16x8xf32>
    %208 = arith.truncf %207 : vector<16x8xf32> to vector<16x8xbf16>
    %209 = vector.extract_strided_slice %145 {offsets = [16, 0], sizes = [8, 32], strides = [1, 1]} : vector<32x32xbf16> to vector<8x32xbf16>
    %cst_54 = arith.constant dense<0.000000e+00> : vector<16x32xf32>
    %210 = tpu.matmul %208, %209, %cst_54 {dimension_numbers = #tpu.dot_dimension_numbers<[1], [0], [0], [1], [0, 0, 1, 1], [], []>} : vector<16x8xbf16>, vector<8x32xbf16>, vector<16x32xf32> -> vector<16x32xf32>
    %211 = arith.addf %190, %210 : vector<16x32xf32>
    %212 = vector.extract_strided_slice %147 {offsets = [0, 24], sizes = [16, 8], strides = [1, 1]} : vector<16x32xbf16> to vector<16x8xbf16>
    %213 = vector.extract_strided_slice %148 {offsets = [0, 24], sizes = [16, 8], strides = [1, 1]} : vector<16x32xbf16> to vector<16x8xbf16>
    %cst_55 = arith.constant dense<0.000000e+00> : vector<16x16xf32>
    %214 = tpu.matmul %212, %213, %cst_55 {dimension_numbers = #tpu.dot_dimension_numbers<[1], [1], [0], [0], [0, 0, 1, 0], [], []>} : vector<16x8xbf16>, vector<16x8xbf16>, vector<16x16xf32> -> vector<16x16xf32>
    %215 = arith.addf %214, %1 : vector<16x16xf32>
    %cst_56 = arith.constant dense<0xFF800000> : vector<16xf32>
    %216 = vector.multi_reduction <maximumf>, %215, %cst_56 [1] : vector<16x16xf32> to vector<16xf32>
    %217 = vector.shape_cast %216 : vector<16xf32> to vector<16x1xf32>
    %218 = vector.broadcast %217 : vector<16x1xf32> to vector<16x16xf32>
    %219 = arith.subf %215, %218 : vector<16x16xf32>
    %220 = math.exp %219 : vector<16x16xf32>
    %cst_57 = arith.constant dense<0.000000e+00> : vector<16xf32>
    %221 = vector.multi_reduction <add>, %220, %cst_57 [1] : vector<16x16xf32> to vector<16xf32>
    %222 = vector.shape_cast %221 : vector<16xf32> to vector<16x1xf32>
    %223 = arith.truncf %220 : vector<16x16xf32> to vector<16x16xbf16>
    %224 = vector.extract_strided_slice %149 {offsets = [0, 24], sizes = [16, 8], strides = [1, 1]} : vector<16x32xbf16> to vector<16x8xbf16>
    %cst_58 = arith.constant dense<0.000000e+00> : vector<16x8xf32>
    %225 = tpu.matmul %223, %224, %cst_58 {dimension_numbers = #tpu.dot_dimension_numbers<[1], [0], [0], [1], [0, 0, 1, 1], [], []>} : vector<16x16xbf16>, vector<16x8xbf16>, vector<16x8xf32> -> vector<16x8xf32>
    %226 = tpu.reciprocal %222 {approx = true} : vector<16x1xf32> -> vector<16x1xf32>
    %227 = vector.broadcast %226 : vector<16x1xf32> to vector<16x8xf32>
    %228 = arith.mulf %225, %227 : vector<16x8xf32>
    %229 = arith.truncf %228 : vector<16x8xf32> to vector<16x8xbf16>
    %230 = vector.extract_strided_slice %145 {offsets = [24, 0], sizes = [8, 32], strides = [1, 1]} : vector<32x32xbf16> to vector<8x32xbf16>
    %cst_59 = arith.constant dense<0.000000e+00> : vector<16x32xf32>
    %231 = tpu.matmul %229, %230, %cst_59 {dimension_numbers = #tpu.dot_dimension_numbers<[1], [0], [0], [1], [0, 0, 1, 1], [], []>} : vector<16x8xbf16>, vector<8x32xbf16>, vector<16x32xf32> -> vector<16x32xf32>
    %232 = arith.addf %211, %231 : vector<16x32xf32>
    %233 = vector.broadcast %146 : vector<1x32xf32> to vector<16x32xf32>
    %234 = arith.addf %232, %233 : vector<16x32xf32>
    %235 = arith.addf %136, %234 : vector<16x32xf32>
    %236 = vector.extract_strided_slice %12 {offsets = [0, 64], sizes = [1, 32], strides = [1, 1]} : vector<1x128xf32> to vector<1x32xf32>
    %237 = vector.extract_strided_slice %12 {offsets = [0, 96], sizes = [1, 32], strides = [1, 1]} : vector<1x128xf32> to vector<1x32xf32>
    %cst_60 = arith.constant dense<0.000000e+00> : vector<16xf32>
    %238 = vector.multi_reduction <add>, %235, %cst_60 [1] : vector<16x32xf32> to vector<16xf32>
    %239 = vector.shape_cast %238 : vector<16xf32> to vector<16x1xf32>
    %cst_61 = arith.constant 3.200000e+01 : f32
    %240 = vector.broadcast %cst_61 : f32 to vector<16x1xf32>
    %241 = arith.divf %239, %240 : vector<16x1xf32>
    %242 = vector.broadcast %241 : vector<16x1xf32> to vector<16x32xf32>
    %243 = arith.subf %235, %242 : vector<16x32xf32>
    %244 = arith.mulf %243, %243 : vector<16x32xf32>
    %cst_62 = arith.constant dense<0.000000e+00> : vector<16xf32>
    %245 = vector.multi_reduction <add>, %244, %cst_62 [1] : vector<16x32xf32> to vector<16xf32>
    %246 = vector.shape_cast %245 : vector<16xf32> to vector<16x1xf32>
    %cst_63 = arith.constant 3.200000e+01 : f32
    %247 = vector.broadcast %cst_63 : f32 to vector<16x1xf32>
    %248 = arith.divf %246, %247 : vector<16x1xf32>
    %249 = vector.broadcast %241 : vector<16x1xf32> to vector<16x32xf32>
    %250 = arith.subf %235, %249 : vector<16x32xf32>
    %cst_64 = arith.constant 9.99999974E-6 : f32
    %251 = vector.broadcast %cst_64 : f32 to vector<16x1xf32>
    %252 = arith.addf %248, %251 : vector<16x1xf32>
    %253 = math.rsqrt %252 : vector<16x1xf32>
    %254 = vector.broadcast %253 : vector<16x1xf32> to vector<16x32xf32>
    %255 = arith.mulf %250, %254 : vector<16x32xf32>
    %256 = vector.broadcast %236 : vector<1x32xf32> to vector<16x32xf32>
    %257 = arith.mulf %255, %256 : vector<16x32xf32>
    %258 = vector.broadcast %237 : vector<1x32xf32> to vector<16x32xf32>
    %259 = arith.addf %257, %258 : vector<16x32xf32>
    %260 = arith.truncf %259 : vector<16x32xf32> to vector<16x32xbf16>
    %c128 = arith.constant 128 : index
    %c0_65 = arith.constant 0 : index
    %261 = vector.load %arg1[%c128, %c0_65] : memref<320x128xbf16, #tpu.memory_space<vmem>>, vector<32x128xbf16>
    %cst_66 = arith.constant dense<0.000000e+00> : vector<16x128xf32>
    %262 = tpu.matmul %260, %261, %cst_66 {dimension_numbers = #tpu.dot_dimension_numbers<[1], [0], [0], [1], [0, 0, 1, 1], [], []>} : vector<16x32xbf16>, vector<32x128xbf16>, vector<16x128xf32> -> vector<16x128xf32>
    %263 = vector.broadcast %11 : vector<1x128xf32> to vector<16x128xf32>
    %264 = arith.addf %262, %263 : vector<16x128xf32>
    %cst_67 = arith.constant 0.000000e+00 : f32
    %265 = vector.broadcast %cst_67 : f32 to vector<16x128xf32>
    %266 = arith.maximumf %264, %265 : vector<16x128xf32>
    %267 = arith.truncf %266 : vector<16x128xf32> to vector<16x128xbf16>
    %c160 = arith.constant 160 : index
    %c0_68 = arith.constant 0 : index
    %268 = vector.load %arg1[%c160, %c0_68] : memref<320x128xbf16, #tpu.memory_space<vmem>>, vector<32x128xbf16>
    %cst_69 = arith.constant dense<0.000000e+00> : vector<16x32xf32>
    %269 = tpu.matmul %267, %268, %cst_69 {dimension_numbers = #tpu.dot_dimension_numbers<[1], [1], [0], [0], [0, 0, 1, 0], [], []>} : vector<16x128xbf16>, vector<32x128xbf16>, vector<16x32xf32> -> vector<16x32xf32>
    %270 = vector.extract_strided_slice %13 {offsets = [0, 64], sizes = [1, 32], strides = [1, 1]} : vector<1x128xf32> to vector<1x32xf32>
    %271 = vector.broadcast %270 : vector<1x32xf32> to vector<16x32xf32>
    %272 = arith.addf %269, %271 : vector<16x32xf32>
    %273 = arith.addf %259, %272 : vector<16x32xf32>
    %274 = vector.extract_strided_slice %13 {offsets = [0, 0], sizes = [1, 32], strides = [1, 1]} : vector<1x128xf32> to vector<1x32xf32>
    %275 = vector.extract_strided_slice %13 {offsets = [0, 32], sizes = [1, 32], strides = [1, 1]} : vector<1x128xf32> to vector<1x32xf32>
    %cst_70 = arith.constant dense<0.000000e+00> : vector<16xf32>
    %276 = vector.multi_reduction <add>, %273, %cst_70 [1] : vector<16x32xf32> to vector<16xf32>
    %277 = vector.shape_cast %276 : vector<16xf32> to vector<16x1xf32>
    %cst_71 = arith.constant 3.200000e+01 : f32
    %278 = vector.broadcast %cst_71 : f32 to vector<16x1xf32>
    %279 = arith.divf %277, %278 : vector<16x1xf32>
    %280 = vector.broadcast %279 : vector<16x1xf32> to vector<16x32xf32>
    %281 = arith.subf %273, %280 : vector<16x32xf32>
    %282 = arith.mulf %281, %281 : vector<16x32xf32>
    %cst_72 = arith.constant dense<0.000000e+00> : vector<16xf32>
    %283 = vector.multi_reduction <add>, %282, %cst_72 [1] : vector<16x32xf32> to vector<16xf32>
    %284 = vector.shape_cast %283 : vector<16xf32> to vector<16x1xf32>
    %cst_73 = arith.constant 3.200000e+01 : f32
    %285 = vector.broadcast %cst_73 : f32 to vector<16x1xf32>
    %286 = arith.divf %284, %285 : vector<16x1xf32>
    %287 = vector.broadcast %279 : vector<16x1xf32> to vector<16x32xf32>
    %288 = arith.subf %273, %287 : vector<16x32xf32>
    %cst_74 = arith.constant 9.99999974E-6 : f32
    %289 = vector.broadcast %cst_74 : f32 to vector<16x1xf32>
    %290 = arith.addf %286, %289 : vector<16x1xf32>
    %291 = math.rsqrt %290 : vector<16x1xf32>
    %292 = vector.broadcast %291 : vector<16x1xf32> to vector<16x32xf32>
    %293 = arith.mulf %288, %292 : vector<16x32xf32>
    %294 = vector.broadcast %274 : vector<1x32xf32> to vector<16x32xf32>
    %295 = arith.mulf %293, %294 : vector<16x32xf32>
    %296 = vector.broadcast %275 : vector<1x32xf32> to vector<16x32xf32>
    %297 = arith.addf %295, %296 : vector<16x32xf32>
    %c224 = arith.constant 224 : index
    %c0_75 = arith.constant 0 : index
    %298 = vector.load %arg1[%c224, %c0_75] : memref<320x128xbf16, #tpu.memory_space<vmem>>, vector<32x128xbf16>
    %c6 = arith.constant 6 : index
    %c0_76 = arith.constant 0 : index
    %299 = vector.load %arg2[%c6, %c0_76] : memref<11x128xf32, #tpu.memory_space<vmem>>, vector<1x128xf32>
    %c7 = arith.constant 7 : index
    %c0_77 = arith.constant 0 : index
    %300 = vector.load %arg2[%c7, %c0_77] : memref<11x128xf32, #tpu.memory_space<vmem>>, vector<1x128xf32>
    %c8 = arith.constant 8 : index
    %c0_78 = arith.constant 0 : index
    %301 = vector.load %arg2[%c8, %c0_78] : memref<11x128xf32, #tpu.memory_space<vmem>>, vector<1x128xf32>
    %c9 = arith.constant 9 : index
    %c0_79 = arith.constant 0 : index
    %302 = vector.load %arg2[%c9, %c0_79] : memref<11x128xf32, #tpu.memory_space<vmem>>, vector<1x128xf32>
    %c10 = arith.constant 10 : index
    %c0_80 = arith.constant 0 : index
    %303 = vector.load %arg2[%c10, %c0_80] : memref<11x128xf32, #tpu.memory_space<vmem>>, vector<1x128xf32>
    %304 = arith.truncf %297 : vector<16x32xf32> to vector<16x32xbf16>
    %c192 = arith.constant 192 : index
    %c0_81 = arith.constant 0 : index
    %305 = vector.load %arg1[%c192, %c0_81] : memref<320x128xbf16, #tpu.memory_space<vmem>>, vector<32x128xbf16>
    %cst_82 = arith.constant dense<0.000000e+00> : vector<16x128xf32>
    %306 = tpu.matmul %304, %305, %cst_82 {dimension_numbers = #tpu.dot_dimension_numbers<[1], [0], [0], [1], [0, 0, 1, 1], [], []>} : vector<16x32xbf16>, vector<32x128xbf16>, vector<16x128xf32> -> vector<16x128xf32>
    %307 = vector.broadcast %299 : vector<1x128xf32> to vector<16x128xf32>
    %308 = arith.addf %306, %307 : vector<16x128xf32>
    %309 = vector.extract_strided_slice %308 {offsets = [0, 0], sizes = [16, 32], strides = [1, 1]} : vector<16x128xf32> to vector<16x32xf32>
    %310 = vector.extract_strided_slice %308 {offsets = [0, 32], sizes = [16, 32], strides = [1, 1]} : vector<16x128xf32> to vector<16x32xf32>
    %311 = vector.extract_strided_slice %308 {offsets = [0, 64], sizes = [16, 32], strides = [1, 1]} : vector<16x128xf32> to vector<16x32xf32>
    %312 = vector.extract_strided_slice %298 {offsets = [0, 0], sizes = [32, 32], strides = [1, 1]} : vector<32x128xbf16> to vector<32x32xbf16>
    %313 = vector.extract_strided_slice %300 {offsets = [0, 0], sizes = [1, 32], strides = [1, 1]} : vector<1x128xf32> to vector<1x32xf32>
    %314 = arith.truncf %309 : vector<16x32xf32> to vector<16x32xbf16>
    %315 = arith.truncf %310 : vector<16x32xf32> to vector<16x32xbf16>
    %316 = arith.truncf %311 : vector<16x32xf32> to vector<16x32xbf16>
    %317 = vector.extract_strided_slice %314 {offsets = [0, 0], sizes = [16, 8], strides = [1, 1]} : vector<16x32xbf16> to vector<16x8xbf16>
    %318 = vector.extract_strided_slice %315 {offsets = [0, 0], sizes = [16, 8], strides = [1, 1]} : vector<16x32xbf16> to vector<16x8xbf16>
    %cst_83 = arith.constant dense<0.000000e+00> : vector<16x16xf32>
    %319 = tpu.matmul %317, %318, %cst_83 {dimension_numbers = #tpu.dot_dimension_numbers<[1], [1], [0], [0], [0, 0, 1, 0], [], []>} : vector<16x8xbf16>, vector<16x8xbf16>, vector<16x16xf32> -> vector<16x16xf32>
    %320 = arith.addf %319, %1 : vector<16x16xf32>
    %cst_84 = arith.constant dense<0xFF800000> : vector<16xf32>
    %321 = vector.multi_reduction <maximumf>, %320, %cst_84 [1] : vector<16x16xf32> to vector<16xf32>
    %322 = vector.shape_cast %321 : vector<16xf32> to vector<16x1xf32>
    %323 = vector.broadcast %322 : vector<16x1xf32> to vector<16x16xf32>
    %324 = arith.subf %320, %323 : vector<16x16xf32>
    %325 = math.exp %324 : vector<16x16xf32>
    %cst_85 = arith.constant dense<0.000000e+00> : vector<16xf32>
    %326 = vector.multi_reduction <add>, %325, %cst_85 [1] : vector<16x16xf32> to vector<16xf32>
    %327 = vector.shape_cast %326 : vector<16xf32> to vector<16x1xf32>
    %328 = arith.truncf %325 : vector<16x16xf32> to vector<16x16xbf16>
    %329 = vector.extract_strided_slice %316 {offsets = [0, 0], sizes = [16, 8], strides = [1, 1]} : vector<16x32xbf16> to vector<16x8xbf16>
    %cst_86 = arith.constant dense<0.000000e+00> : vector<16x8xf32>
    %330 = tpu.matmul %328, %329, %cst_86 {dimension_numbers = #tpu.dot_dimension_numbers<[1], [0], [0], [1], [0, 0, 1, 1], [], []>} : vector<16x16xbf16>, vector<16x8xbf16>, vector<16x8xf32> -> vector<16x8xf32>
    %331 = tpu.reciprocal %327 {approx = true} : vector<16x1xf32> -> vector<16x1xf32>
    %332 = vector.broadcast %331 : vector<16x1xf32> to vector<16x8xf32>
    %333 = arith.mulf %330, %332 : vector<16x8xf32>
    %334 = arith.truncf %333 : vector<16x8xf32> to vector<16x8xbf16>
    %335 = vector.extract_strided_slice %312 {offsets = [0, 0], sizes = [8, 32], strides = [1, 1]} : vector<32x32xbf16> to vector<8x32xbf16>
    %cst_87 = arith.constant dense<0.000000e+00> : vector<16x32xf32>
    %336 = tpu.matmul %334, %335, %cst_87 {dimension_numbers = #tpu.dot_dimension_numbers<[1], [0], [0], [1], [0, 0, 1, 1], [], []>} : vector<16x8xbf16>, vector<8x32xbf16>, vector<16x32xf32> -> vector<16x32xf32>
    %337 = vector.extract_strided_slice %314 {offsets = [0, 8], sizes = [16, 8], strides = [1, 1]} : vector<16x32xbf16> to vector<16x8xbf16>
    %338 = vector.extract_strided_slice %315 {offsets = [0, 8], sizes = [16, 8], strides = [1, 1]} : vector<16x32xbf16> to vector<16x8xbf16>
    %cst_88 = arith.constant dense<0.000000e+00> : vector<16x16xf32>
    %339 = tpu.matmul %337, %338, %cst_88 {dimension_numbers = #tpu.dot_dimension_numbers<[1], [1], [0], [0], [0, 0, 1, 0], [], []>} : vector<16x8xbf16>, vector<16x8xbf16>, vector<16x16xf32> -> vector<16x16xf32>
    %340 = arith.addf %339, %1 : vector<16x16xf32>
    %cst_89 = arith.constant dense<0xFF800000> : vector<16xf32>
    %341 = vector.multi_reduction <maximumf>, %340, %cst_89 [1] : vector<16x16xf32> to vector<16xf32>
    %342 = vector.shape_cast %341 : vector<16xf32> to vector<16x1xf32>
    %343 = vector.broadcast %342 : vector<16x1xf32> to vector<16x16xf32>
    %344 = arith.subf %340, %343 : vector<16x16xf32>
    %345 = math.exp %344 : vector<16x16xf32>
    %cst_90 = arith.constant dense<0.000000e+00> : vector<16xf32>
    %346 = vector.multi_reduction <add>, %345, %cst_90 [1] : vector<16x16xf32> to vector<16xf32>
    %347 = vector.shape_cast %346 : vector<16xf32> to vector<16x1xf32>
    %348 = arith.truncf %345 : vector<16x16xf32> to vector<16x16xbf16>
    %349 = vector.extract_strided_slice %316 {offsets = [0, 8], sizes = [16, 8], strides = [1, 1]} : vector<16x32xbf16> to vector<16x8xbf16>
    %cst_91 = arith.constant dense<0.000000e+00> : vector<16x8xf32>
    %350 = tpu.matmul %348, %349, %cst_91 {dimension_numbers = #tpu.dot_dimension_numbers<[1], [0], [0], [1], [0, 0, 1, 1], [], []>} : vector<16x16xbf16>, vector<16x8xbf16>, vector<16x8xf32> -> vector<16x8xf32>
    %351 = tpu.reciprocal %347 {approx = true} : vector<16x1xf32> -> vector<16x1xf32>
    %352 = vector.broadcast %351 : vector<16x1xf32> to vector<16x8xf32>
    %353 = arith.mulf %350, %352 : vector<16x8xf32>
    %354 = arith.truncf %353 : vector<16x8xf32> to vector<16x8xbf16>
    %355 = vector.extract_strided_slice %312 {offsets = [8, 0], sizes = [8, 32], strides = [1, 1]} : vector<32x32xbf16> to vector<8x32xbf16>
    %cst_92 = arith.constant dense<0.000000e+00> : vector<16x32xf32>
    %356 = tpu.matmul %354, %355, %cst_92 {dimension_numbers = #tpu.dot_dimension_numbers<[1], [0], [0], [1], [0, 0, 1, 1], [], []>} : vector<16x8xbf16>, vector<8x32xbf16>, vector<16x32xf32> -> vector<16x32xf32>
    %357 = arith.addf %336, %356 : vector<16x32xf32>
    %358 = vector.extract_strided_slice %314 {offsets = [0, 16], sizes = [16, 8], strides = [1, 1]} : vector<16x32xbf16> to vector<16x8xbf16>
    %359 = vector.extract_strided_slice %315 {offsets = [0, 16], sizes = [16, 8], strides = [1, 1]} : vector<16x32xbf16> to vector<16x8xbf16>
    %cst_93 = arith.constant dense<0.000000e+00> : vector<16x16xf32>
    %360 = tpu.matmul %358, %359, %cst_93 {dimension_numbers = #tpu.dot_dimension_numbers<[1], [1], [0], [0], [0, 0, 1, 0], [], []>} : vector<16x8xbf16>, vector<16x8xbf16>, vector<16x16xf32> -> vector<16x16xf32>
    %361 = arith.addf %360, %1 : vector<16x16xf32>
    %cst_94 = arith.constant dense<0xFF800000> : vector<16xf32>
    %362 = vector.multi_reduction <maximumf>, %361, %cst_94 [1] : vector<16x16xf32> to vector<16xf32>
    %363 = vector.shape_cast %362 : vector<16xf32> to vector<16x1xf32>
    %364 = vector.broadcast %363 : vector<16x1xf32> to vector<16x16xf32>
    %365 = arith.subf %361, %364 : vector<16x16xf32>
    %366 = math.exp %365 : vector<16x16xf32>
    %cst_95 = arith.constant dense<0.000000e+00> : vector<16xf32>
    %367 = vector.multi_reduction <add>, %366, %cst_95 [1] : vector<16x16xf32> to vector<16xf32>
    %368 = vector.shape_cast %367 : vector<16xf32> to vector<16x1xf32>
    %369 = arith.truncf %366 : vector<16x16xf32> to vector<16x16xbf16>
    %370 = vector.extract_strided_slice %316 {offsets = [0, 16], sizes = [16, 8], strides = [1, 1]} : vector<16x32xbf16> to vector<16x8xbf16>
    %cst_96 = arith.constant dense<0.000000e+00> : vector<16x8xf32>
    %371 = tpu.matmul %369, %370, %cst_96 {dimension_numbers = #tpu.dot_dimension_numbers<[1], [0], [0], [1], [0, 0, 1, 1], [], []>} : vector<16x16xbf16>, vector<16x8xbf16>, vector<16x8xf32> -> vector<16x8xf32>
    %372 = tpu.reciprocal %368 {approx = true} : vector<16x1xf32> -> vector<16x1xf32>
    %373 = vector.broadcast %372 : vector<16x1xf32> to vector<16x8xf32>
    %374 = arith.mulf %371, %373 : vector<16x8xf32>
    %375 = arith.truncf %374 : vector<16x8xf32> to vector<16x8xbf16>
    %376 = vector.extract_strided_slice %312 {offsets = [16, 0], sizes = [8, 32], strides = [1, 1]} : vector<32x32xbf16> to vector<8x32xbf16>
    %cst_97 = arith.constant dense<0.000000e+00> : vector<16x32xf32>
    %377 = tpu.matmul %375, %376, %cst_97 {dimension_numbers = #tpu.dot_dimension_numbers<[1], [0], [0], [1], [0, 0, 1, 1], [], []>} : vector<16x8xbf16>, vector<8x32xbf16>, vector<16x32xf32> -> vector<16x32xf32>
    %378 = arith.addf %357, %377 : vector<16x32xf32>
    %379 = vector.extract_strided_slice %314 {offsets = [0, 24], sizes = [16, 8], strides = [1, 1]} : vector<16x32xbf16> to vector<16x8xbf16>
    %380 = vector.extract_strided_slice %315 {offsets = [0, 24], sizes = [16, 8], strides = [1, 1]} : vector<16x32xbf16> to vector<16x8xbf16>
    %cst_98 = arith.constant dense<0.000000e+00> : vector<16x16xf32>
    %381 = tpu.matmul %379, %380, %cst_98 {dimension_numbers = #tpu.dot_dimension_numbers<[1], [1], [0], [0], [0, 0, 1, 0], [], []>} : vector<16x8xbf16>, vector<16x8xbf16>, vector<16x16xf32> -> vector<16x16xf32>
    %382 = arith.addf %381, %1 : vector<16x16xf32>
    %cst_99 = arith.constant dense<0xFF800000> : vector<16xf32>
    %383 = vector.multi_reduction <maximumf>, %382, %cst_99 [1] : vector<16x16xf32> to vector<16xf32>
    %384 = vector.shape_cast %383 : vector<16xf32> to vector<16x1xf32>
    %385 = vector.broadcast %384 : vector<16x1xf32> to vector<16x16xf32>
    %386 = arith.subf %382, %385 : vector<16x16xf32>
    %387 = math.exp %386 : vector<16x16xf32>
    %cst_100 = arith.constant dense<0.000000e+00> : vector<16xf32>
    %388 = vector.multi_reduction <add>, %387, %cst_100 [1] : vector<16x16xf32> to vector<16xf32>
    %389 = vector.shape_cast %388 : vector<16xf32> to vector<16x1xf32>
    %390 = arith.truncf %387 : vector<16x16xf32> to vector<16x16xbf16>
    %391 = vector.extract_strided_slice %316 {offsets = [0, 24], sizes = [16, 8], strides = [1, 1]} : vector<16x32xbf16> to vector<16x8xbf16>
    %cst_101 = arith.constant dense<0.000000e+00> : vector<16x8xf32>
    %392 = tpu.matmul %390, %391, %cst_101 {dimension_numbers = #tpu.dot_dimension_numbers<[1], [0], [0], [1], [0, 0, 1, 1], [], []>} : vector<16x16xbf16>, vector<16x8xbf16>, vector<16x8xf32> -> vector<16x8xf32>
    %393 = tpu.reciprocal %389 {approx = true} : vector<16x1xf32> -> vector<16x1xf32>
    %394 = vector.broadcast %393 : vector<16x1xf32> to vector<16x8xf32>
    %395 = arith.mulf %392, %394 : vector<16x8xf32>
    %396 = arith.truncf %395 : vector<16x8xf32> to vector<16x8xbf16>
    %397 = vector.extract_strided_slice %312 {offsets = [24, 0], sizes = [8, 32], strides = [1, 1]} : vector<32x32xbf16> to vector<8x32xbf16>
    %cst_102 = arith.constant dense<0.000000e+00> : vector<16x32xf32>
    %398 = tpu.matmul %396, %397, %cst_102 {dimension_numbers = #tpu.dot_dimension_numbers<[1], [0], [0], [1], [0, 0, 1, 1], [], []>} : vector<16x8xbf16>, vector<8x32xbf16>, vector<16x32xf32> -> vector<16x32xf32>
    %399 = arith.addf %378, %398 : vector<16x32xf32>
    %400 = vector.broadcast %313 : vector<1x32xf32> to vector<16x32xf32>
    %401 = arith.addf %399, %400 : vector<16x32xf32>
    %402 = arith.addf %297, %401 : vector<16x32xf32>
    %403 = vector.extract_strided_slice %302 {offsets = [0, 0], sizes = [1, 32], strides = [1, 1]} : vector<1x128xf32> to vector<1x32xf32>
    %404 = vector.extract_strided_slice %302 {offsets = [0, 32], sizes = [1, 32], strides = [1, 1]} : vector<1x128xf32> to vector<1x32xf32>
    %cst_103 = arith.constant dense<0.000000e+00> : vector<16xf32>
    %405 = vector.multi_reduction <add>, %402, %cst_103 [1] : vector<16x32xf32> to vector<16xf32>
    %406 = vector.shape_cast %405 : vector<16xf32> to vector<16x1xf32>
    %cst_104 = arith.constant 3.200000e+01 : f32
    %407 = vector.broadcast %cst_104 : f32 to vector<16x1xf32>
    %408 = arith.divf %406, %407 : vector<16x1xf32>
    %409 = vector.broadcast %408 : vector<16x1xf32> to vector<16x32xf32>
    %410 = arith.subf %402, %409 : vector<16x32xf32>
    %411 = arith.mulf %410, %410 : vector<16x32xf32>
    %cst_105 = arith.constant dense<0.000000e+00> : vector<16xf32>
    %412 = vector.multi_reduction <add>, %411, %cst_105 [1] : vector<16x32xf32> to vector<16xf32>
    %413 = vector.shape_cast %412 : vector<16xf32> to vector<16x1xf32>
    %cst_106 = arith.constant 3.200000e+01 : f32
    %414 = vector.broadcast %cst_106 : f32 to vector<16x1xf32>
    %415 = arith.divf %413, %414 : vector<16x1xf32>
    %416 = vector.broadcast %408 : vector<16x1xf32> to vector<16x32xf32>
    %417 = arith.subf %402, %416 : vector<16x32xf32>
    %cst_107 = arith.constant 9.99999974E-6 : f32
    %418 = vector.broadcast %cst_107 : f32 to vector<16x1xf32>
    %419 = arith.addf %415, %418 : vector<16x1xf32>
    %420 = math.rsqrt %419 : vector<16x1xf32>
    %421 = vector.broadcast %420 : vector<16x1xf32> to vector<16x32xf32>
    %422 = arith.mulf %417, %421 : vector<16x32xf32>
    %423 = vector.broadcast %403 : vector<1x32xf32> to vector<16x32xf32>
    %424 = arith.mulf %422, %423 : vector<16x32xf32>
    %425 = vector.broadcast %404 : vector<1x32xf32> to vector<16x32xf32>
    %426 = arith.addf %424, %425 : vector<16x32xf32>
    %427 = arith.truncf %426 : vector<16x32xf32> to vector<16x32xbf16>
    %428 = vector.extract_strided_slice %298 {offsets = [0, 32], sizes = [32, 32], strides = [1, 1]} : vector<32x128xbf16> to vector<32x32xbf16>
    %cst_108 = arith.constant dense<0.000000e+00> : vector<16x32xf32>
    %429 = tpu.matmul %427, %428, %cst_108 {dimension_numbers = #tpu.dot_dimension_numbers<[1], [0], [0], [1], [0, 0, 1, 1], [], []>} : vector<16x32xbf16>, vector<32x32xbf16>, vector<16x32xf32> -> vector<16x32xf32>
    %430 = vector.extract_strided_slice %300 {offsets = [0, 32], sizes = [1, 32], strides = [1, 1]} : vector<1x128xf32> to vector<1x32xf32>
    %431 = vector.broadcast %430 : vector<1x32xf32> to vector<16x32xf32>
    %432 = arith.addf %429, %431 : vector<16x32xf32>
    %433 = vector.extract_strided_slice %7 {offsets = [0, 64], sizes = [16, 32], strides = [1, 1]} : vector<16x128xf32> to vector<16x32xf32>
    %434 = vector.extract_strided_slice %7 {offsets = [0, 96], sizes = [16, 32], strides = [1, 1]} : vector<16x128xf32> to vector<16x32xf32>
    %435 = vector.extract_strided_slice %298 {offsets = [0, 64], sizes = [32, 32], strides = [1, 1]} : vector<32x128xbf16> to vector<32x32xbf16>
    %436 = vector.extract_strided_slice %300 {offsets = [0, 64], sizes = [1, 32], strides = [1, 1]} : vector<1x128xf32> to vector<1x32xf32>
    %437 = arith.truncf %432 : vector<16x32xf32> to vector<16x32xbf16>
    %438 = arith.truncf %433 : vector<16x32xf32> to vector<16x32xbf16>
    %439 = arith.truncf %434 : vector<16x32xf32> to vector<16x32xbf16>
    %440 = vector.extract_strided_slice %437 {offsets = [0, 0], sizes = [16, 8], strides = [1, 1]} : vector<16x32xbf16> to vector<16x8xbf16>
    %441 = vector.extract_strided_slice %438 {offsets = [0, 0], sizes = [16, 8], strides = [1, 1]} : vector<16x32xbf16> to vector<16x8xbf16>
    %cst_109 = arith.constant dense<0.000000e+00> : vector<16x16xf32>
    %442 = tpu.matmul %440, %441, %cst_109 {dimension_numbers = #tpu.dot_dimension_numbers<[1], [1], [0], [0], [0, 0, 1, 0], [], []>} : vector<16x8xbf16>, vector<16x8xbf16>, vector<16x16xf32> -> vector<16x16xf32>
    %443 = arith.addf %442, %1 : vector<16x16xf32>
    %cst_110 = arith.constant dense<0xFF800000> : vector<16xf32>
    %444 = vector.multi_reduction <maximumf>, %443, %cst_110 [1] : vector<16x16xf32> to vector<16xf32>
    %445 = vector.shape_cast %444 : vector<16xf32> to vector<16x1xf32>
    %446 = vector.broadcast %445 : vector<16x1xf32> to vector<16x16xf32>
    %447 = arith.subf %443, %446 : vector<16x16xf32>
    %448 = math.exp %447 : vector<16x16xf32>
    %cst_111 = arith.constant dense<0.000000e+00> : vector<16xf32>
    %449 = vector.multi_reduction <add>, %448, %cst_111 [1] : vector<16x16xf32> to vector<16xf32>
    %450 = vector.shape_cast %449 : vector<16xf32> to vector<16x1xf32>
    %451 = arith.truncf %448 : vector<16x16xf32> to vector<16x16xbf16>
    %452 = vector.extract_strided_slice %439 {offsets = [0, 0], sizes = [16, 8], strides = [1, 1]} : vector<16x32xbf16> to vector<16x8xbf16>
    %cst_112 = arith.constant dense<0.000000e+00> : vector<16x8xf32>
    %453 = tpu.matmul %451, %452, %cst_112 {dimension_numbers = #tpu.dot_dimension_numbers<[1], [0], [0], [1], [0, 0, 1, 1], [], []>} : vector<16x16xbf16>, vector<16x8xbf16>, vector<16x8xf32> -> vector<16x8xf32>
    %454 = tpu.reciprocal %450 {approx = true} : vector<16x1xf32> -> vector<16x1xf32>
    %455 = vector.broadcast %454 : vector<16x1xf32> to vector<16x8xf32>
    %456 = arith.mulf %453, %455 : vector<16x8xf32>
    %457 = arith.truncf %456 : vector<16x8xf32> to vector<16x8xbf16>
    %458 = vector.extract_strided_slice %435 {offsets = [0, 0], sizes = [8, 32], strides = [1, 1]} : vector<32x32xbf16> to vector<8x32xbf16>
    %cst_113 = arith.constant dense<0.000000e+00> : vector<16x32xf32>
    %459 = tpu.matmul %457, %458, %cst_113 {dimension_numbers = #tpu.dot_dimension_numbers<[1], [0], [0], [1], [0, 0, 1, 1], [], []>} : vector<16x8xbf16>, vector<8x32xbf16>, vector<16x32xf32> -> vector<16x32xf32>
    %460 = vector.extract_strided_slice %437 {offsets = [0, 8], sizes = [16, 8], strides = [1, 1]} : vector<16x32xbf16> to vector<16x8xbf16>
    %461 = vector.extract_strided_slice %438 {offsets = [0, 8], sizes = [16, 8], strides = [1, 1]} : vector<16x32xbf16> to vector<16x8xbf16>
    %cst_114 = arith.constant dense<0.000000e+00> : vector<16x16xf32>
    %462 = tpu.matmul %460, %461, %cst_114 {dimension_numbers = #tpu.dot_dimension_numbers<[1], [1], [0], [0], [0, 0, 1, 0], [], []>} : vector<16x8xbf16>, vector<16x8xbf16>, vector<16x16xf32> -> vector<16x16xf32>
    %463 = arith.addf %462, %1 : vector<16x16xf32>
    %cst_115 = arith.constant dense<0xFF800000> : vector<16xf32>
    %464 = vector.multi_reduction <maximumf>, %463, %cst_115 [1] : vector<16x16xf32> to vector<16xf32>
    %465 = vector.shape_cast %464 : vector<16xf32> to vector<16x1xf32>
    %466 = vector.broadcast %465 : vector<16x1xf32> to vector<16x16xf32>
    %467 = arith.subf %463, %466 : vector<16x16xf32>
    %468 = math.exp %467 : vector<16x16xf32>
    %cst_116 = arith.constant dense<0.000000e+00> : vector<16xf32>
    %469 = vector.multi_reduction <add>, %468, %cst_116 [1] : vector<16x16xf32> to vector<16xf32>
    %470 = vector.shape_cast %469 : vector<16xf32> to vector<16x1xf32>
    %471 = arith.truncf %468 : vector<16x16xf32> to vector<16x16xbf16>
    %472 = vector.extract_strided_slice %439 {offsets = [0, 8], sizes = [16, 8], strides = [1, 1]} : vector<16x32xbf16> to vector<16x8xbf16>
    %cst_117 = arith.constant dense<0.000000e+00> : vector<16x8xf32>
    %473 = tpu.matmul %471, %472, %cst_117 {dimension_numbers = #tpu.dot_dimension_numbers<[1], [0], [0], [1], [0, 0, 1, 1], [], []>} : vector<16x16xbf16>, vector<16x8xbf16>, vector<16x8xf32> -> vector<16x8xf32>
    %474 = tpu.reciprocal %470 {approx = true} : vector<16x1xf32> -> vector<16x1xf32>
    %475 = vector.broadcast %474 : vector<16x1xf32> to vector<16x8xf32>
    %476 = arith.mulf %473, %475 : vector<16x8xf32>
    %477 = arith.truncf %476 : vector<16x8xf32> to vector<16x8xbf16>
    %478 = vector.extract_strided_slice %435 {offsets = [8, 0], sizes = [8, 32], strides = [1, 1]} : vector<32x32xbf16> to vector<8x32xbf16>
    %cst_118 = arith.constant dense<0.000000e+00> : vector<16x32xf32>
    %479 = tpu.matmul %477, %478, %cst_118 {dimension_numbers = #tpu.dot_dimension_numbers<[1], [0], [0], [1], [0, 0, 1, 1], [], []>} : vector<16x8xbf16>, vector<8x32xbf16>, vector<16x32xf32> -> vector<16x32xf32>
    %480 = arith.addf %459, %479 : vector<16x32xf32>
    %481 = vector.extract_strided_slice %437 {offsets = [0, 16], sizes = [16, 8], strides = [1, 1]} : vector<16x32xbf16> to vector<16x8xbf16>
    %482 = vector.extract_strided_slice %438 {offsets = [0, 16], sizes = [16, 8], strides = [1, 1]} : vector<16x32xbf16> to vector<16x8xbf16>
    %cst_119 = arith.constant dense<0.000000e+00> : vector<16x16xf32>
    %483 = tpu.matmul %481, %482, %cst_119 {dimension_numbers = #tpu.dot_dimension_numbers<[1], [1], [0], [0], [0, 0, 1, 0], [], []>} : vector<16x8xbf16>, vector<16x8xbf16>, vector<16x16xf32> -> vector<16x16xf32>
    %484 = arith.addf %483, %1 : vector<16x16xf32>
    %cst_120 = arith.constant dense<0xFF800000> : vector<16xf32>
    %485 = vector.multi_reduction <maximumf>, %484, %cst_120 [1] : vector<16x16xf32> to vector<16xf32>
    %486 = vector.shape_cast %485 : vector<16xf32> to vector<16x1xf32>
    %487 = vector.broadcast %486 : vector<16x1xf32> to vector<16x16xf32>
    %488 = arith.subf %484, %487 : vector<16x16xf32>
    %489 = math.exp %488 : vector<16x16xf32>
    %cst_121 = arith.constant dense<0.000000e+00> : vector<16xf32>
    %490 = vector.multi_reduction <add>, %489, %cst_121 [1] : vector<16x16xf32> to vector<16xf32>
    %491 = vector.shape_cast %490 : vector<16xf32> to vector<16x1xf32>
    %492 = arith.truncf %489 : vector<16x16xf32> to vector<16x16xbf16>
    %493 = vector.extract_strided_slice %439 {offsets = [0, 16], sizes = [16, 8], strides = [1, 1]} : vector<16x32xbf16> to vector<16x8xbf16>
    %cst_122 = arith.constant dense<0.000000e+00> : vector<16x8xf32>
    %494 = tpu.matmul %492, %493, %cst_122 {dimension_numbers = #tpu.dot_dimension_numbers<[1], [0], [0], [1], [0, 0, 1, 1], [], []>} : vector<16x16xbf16>, vector<16x8xbf16>, vector<16x8xf32> -> vector<16x8xf32>
    %495 = tpu.reciprocal %491 {approx = true} : vector<16x1xf32> -> vector<16x1xf32>
    %496 = vector.broadcast %495 : vector<16x1xf32> to vector<16x8xf32>
    %497 = arith.mulf %494, %496 : vector<16x8xf32>
    %498 = arith.truncf %497 : vector<16x8xf32> to vector<16x8xbf16>
    %499 = vector.extract_strided_slice %435 {offsets = [16, 0], sizes = [8, 32], strides = [1, 1]} : vector<32x32xbf16> to vector<8x32xbf16>
    %cst_123 = arith.constant dense<0.000000e+00> : vector<16x32xf32>
    %500 = tpu.matmul %498, %499, %cst_123 {dimension_numbers = #tpu.dot_dimension_numbers<[1], [0], [0], [1], [0, 0, 1, 1], [], []>} : vector<16x8xbf16>, vector<8x32xbf16>, vector<16x32xf32> -> vector<16x32xf32>
    %501 = arith.addf %480, %500 : vector<16x32xf32>
    %502 = vector.extract_strided_slice %437 {offsets = [0, 24], sizes = [16, 8], strides = [1, 1]} : vector<16x32xbf16> to vector<16x8xbf16>
    %503 = vector.extract_strided_slice %438 {offsets = [0, 24], sizes = [16, 8], strides = [1, 1]} : vector<16x32xbf16> to vector<16x8xbf16>
    %cst_124 = arith.constant dense<0.000000e+00> : vector<16x16xf32>
    %504 = tpu.matmul %502, %503, %cst_124 {dimension_numbers = #tpu.dot_dimension_numbers<[1], [1], [0], [0], [0, 0, 1, 0], [], []>} : vector<16x8xbf16>, vector<16x8xbf16>, vector<16x16xf32> -> vector<16x16xf32>
    %505 = arith.addf %504, %1 : vector<16x16xf32>
    %cst_125 = arith.constant dense<0xFF800000> : vector<16xf32>
    %506 = vector.multi_reduction <maximumf>, %505, %cst_125 [1] : vector<16x16xf32> to vector<16xf32>
    %507 = vector.shape_cast %506 : vector<16xf32> to vector<16x1xf32>
    %508 = vector.broadcast %507 : vector<16x1xf32> to vector<16x16xf32>
    %509 = arith.subf %505, %508 : vector<16x16xf32>
    %510 = math.exp %509 : vector<16x16xf32>
    %cst_126 = arith.constant dense<0.000000e+00> : vector<16xf32>
    %511 = vector.multi_reduction <add>, %510, %cst_126 [1] : vector<16x16xf32> to vector<16xf32>
    %512 = vector.shape_cast %511 : vector<16xf32> to vector<16x1xf32>
    %513 = arith.truncf %510 : vector<16x16xf32> to vector<16x16xbf16>
    %514 = vector.extract_strided_slice %439 {offsets = [0, 24], sizes = [16, 8], strides = [1, 1]} : vector<16x32xbf16> to vector<16x8xbf16>
    %cst_127 = arith.constant dense<0.000000e+00> : vector<16x8xf32>
    %515 = tpu.matmul %513, %514, %cst_127 {dimension_numbers = #tpu.dot_dimension_numbers<[1], [0], [0], [1], [0, 0, 1, 1], [], []>} : vector<16x16xbf16>, vector<16x8xbf16>, vector<16x8xf32> -> vector<16x8xf32>
    %516 = tpu.reciprocal %512 {approx = true} : vector<16x1xf32> -> vector<16x1xf32>
    %517 = vector.broadcast %516 : vector<16x1xf32> to vector<16x8xf32>
    %518 = arith.mulf %515, %517 : vector<16x8xf32>
    %519 = arith.truncf %518 : vector<16x8xf32> to vector<16x8xbf16>
    %520 = vector.extract_strided_slice %435 {offsets = [24, 0], sizes = [8, 32], strides = [1, 1]} : vector<32x32xbf16> to vector<8x32xbf16>
    %cst_128 = arith.constant dense<0.000000e+00> : vector<16x32xf32>
    %521 = tpu.matmul %519, %520, %cst_128 {dimension_numbers = #tpu.dot_dimension_numbers<[1], [0], [0], [1], [0, 0, 1, 1], [], []>} : vector<16x8xbf16>, vector<8x32xbf16>, vector<16x32xf32> -> vector<16x32xf32>
    %522 = arith.addf %501, %521 : vector<16x32xf32>
    %523 = vector.broadcast %436 : vector<1x32xf32> to vector<16x32xf32>
    %524 = arith.addf %522, %523 : vector<16x32xf32>
    %525 = arith.addf %426, %524 : vector<16x32xf32>
    %526 = vector.extract_strided_slice %302 {offsets = [0, 64], sizes = [1, 32], strides = [1, 1]} : vector<1x128xf32> to vector<1x32xf32>
    %527 = vector.extract_strided_slice %302 {offsets = [0, 96], sizes = [1, 32], strides = [1, 1]} : vector<1x128xf32> to vector<1x32xf32>
    %cst_129 = arith.constant dense<0.000000e+00> : vector<16xf32>
    %528 = vector.multi_reduction <add>, %525, %cst_129 [1] : vector<16x32xf32> to vector<16xf32>
    %529 = vector.shape_cast %528 : vector<16xf32> to vector<16x1xf32>
    %cst_130 = arith.constant 3.200000e+01 : f32
    %530 = vector.broadcast %cst_130 : f32 to vector<16x1xf32>
    %531 = arith.divf %529, %530 : vector<16x1xf32>
    %532 = vector.broadcast %531 : vector<16x1xf32> to vector<16x32xf32>
    %533 = arith.subf %525, %532 : vector<16x32xf32>
    %534 = arith.mulf %533, %533 : vector<16x32xf32>
    %cst_131 = arith.constant dense<0.000000e+00> : vector<16xf32>
    %535 = vector.multi_reduction <add>, %534, %cst_131 [1] : vector<16x32xf32> to vector<16xf32>
    %536 = vector.shape_cast %535 : vector<16xf32> to vector<16x1xf32>
    %cst_132 = arith.constant 3.200000e+01 : f32
    %537 = vector.broadcast %cst_132 : f32 to vector<16x1xf32>
    %538 = arith.divf %536, %537 : vector<16x1xf32>
    %539 = vector.broadcast %531 : vector<16x1xf32> to vector<16x32xf32>
    %540 = arith.subf %525, %539 : vector<16x32xf32>
    %cst_133 = arith.constant 9.99999974E-6 : f32
    %541 = vector.broadcast %cst_133 : f32 to vector<16x1xf32>
    %542 = arith.addf %538, %541 : vector<16x1xf32>
    %543 = math.rsqrt %542 : vector<16x1xf32>
    %544 = vector.broadcast %543 : vector<16x1xf32> to vector<16x32xf32>
    %545 = arith.mulf %540, %544 : vector<16x32xf32>
    %546 = vector.broadcast %526 : vector<1x32xf32> to vector<16x32xf32>
    %547 = arith.mulf %545, %546 : vector<16x32xf32>
    %548 = vector.broadcast %527 : vector<1x32xf32> to vector<16x32xf32>
    %549 = arith.addf %547, %548 : vector<16x32xf32>
    %550 = arith.truncf %549 : vector<16x32xf32> to vector<16x32xbf16>
    %c256 = arith.constant 256 : index
    %c0_134 = arith.constant 0 : index
    %551 = vector.load %arg1[%c256, %c0_134] : memref<320x128xbf16, #tpu.memory_space<vmem>>, vector<32x128xbf16>
    %cst_135 = arith.constant dense<0.000000e+00> : vector<16x128xf32>
    %552 = tpu.matmul %550, %551, %cst_135 {dimension_numbers = #tpu.dot_dimension_numbers<[1], [0], [0], [1], [0, 0, 1, 1], [], []>} : vector<16x32xbf16>, vector<32x128xbf16>, vector<16x128xf32> -> vector<16x128xf32>
    %553 = vector.broadcast %301 : vector<1x128xf32> to vector<16x128xf32>
    %554 = arith.addf %552, %553 : vector<16x128xf32>
    %cst_136 = arith.constant 0.000000e+00 : f32
    %555 = vector.broadcast %cst_136 : f32 to vector<16x128xf32>
    %556 = arith.maximumf %554, %555 : vector<16x128xf32>
    %557 = arith.truncf %556 : vector<16x128xf32> to vector<16x128xbf16>
    %c288 = arith.constant 288 : index
    %c0_137 = arith.constant 0 : index
    %558 = vector.load %arg1[%c288, %c0_137] : memref<320x128xbf16, #tpu.memory_space<vmem>>, vector<32x128xbf16>
    %cst_138 = arith.constant dense<0.000000e+00> : vector<16x32xf32>
    %559 = tpu.matmul %557, %558, %cst_138 {dimension_numbers = #tpu.dot_dimension_numbers<[1], [1], [0], [0], [0, 0, 1, 0], [], []>} : vector<16x128xbf16>, vector<32x128xbf16>, vector<16x32xf32> -> vector<16x32xf32>
    %560 = vector.extract_strided_slice %303 {offsets = [0, 64], sizes = [1, 32], strides = [1, 1]} : vector<1x128xf32> to vector<1x32xf32>
    %561 = vector.broadcast %560 : vector<1x32xf32> to vector<16x32xf32>
    %562 = arith.addf %559, %561 : vector<16x32xf32>
    %563 = arith.addf %549, %562 : vector<16x32xf32>
    %564 = vector.extract_strided_slice %303 {offsets = [0, 0], sizes = [1, 32], strides = [1, 1]} : vector<1x128xf32> to vector<1x32xf32>
    %565 = vector.extract_strided_slice %303 {offsets = [0, 32], sizes = [1, 32], strides = [1, 1]} : vector<1x128xf32> to vector<1x32xf32>
    %cst_139 = arith.constant dense<0.000000e+00> : vector<16xf32>
    %566 = vector.multi_reduction <add>, %563, %cst_139 [1] : vector<16x32xf32> to vector<16xf32>
    %567 = vector.shape_cast %566 : vector<16xf32> to vector<16x1xf32>
    %cst_140 = arith.constant 3.200000e+01 : f32
    %568 = vector.broadcast %cst_140 : f32 to vector<16x1xf32>
    %569 = arith.divf %567, %568 : vector<16x1xf32>
    %570 = vector.broadcast %569 : vector<16x1xf32> to vector<16x32xf32>
    %571 = arith.subf %563, %570 : vector<16x32xf32>
    %572 = arith.mulf %571, %571 : vector<16x32xf32>
    %cst_141 = arith.constant dense<0.000000e+00> : vector<16xf32>
    %573 = vector.multi_reduction <add>, %572, %cst_141 [1] : vector<16x32xf32> to vector<16xf32>
    %574 = vector.shape_cast %573 : vector<16xf32> to vector<16x1xf32>
    %cst_142 = arith.constant 3.200000e+01 : f32
    %575 = vector.broadcast %cst_142 : f32 to vector<16x1xf32>
    %576 = arith.divf %574, %575 : vector<16x1xf32>
    %577 = vector.broadcast %569 : vector<16x1xf32> to vector<16x32xf32>
    %578 = arith.subf %563, %577 : vector<16x32xf32>
    %cst_143 = arith.constant 9.99999974E-6 : f32
    %579 = vector.broadcast %cst_143 : f32 to vector<16x1xf32>
    %580 = arith.addf %576, %579 : vector<16x1xf32>
    %581 = math.rsqrt %580 : vector<16x1xf32>
    %582 = vector.broadcast %581 : vector<16x1xf32> to vector<16x32xf32>
    %583 = arith.mulf %578, %582 : vector<16x32xf32>
    %584 = vector.broadcast %564 : vector<1x32xf32> to vector<16x32xf32>
    %585 = arith.mulf %583, %584 : vector<16x32xf32>
    %586 = vector.broadcast %565 : vector<1x32xf32> to vector<16x32xf32>
    %587 = arith.addf %585, %586 : vector<16x32xf32>
    %588 = arith.truncf %587 : vector<16x32xf32> to vector<16x32xbf16>
    %c32_144 = arith.constant 32 : index
    %c0_145 = arith.constant 0 : index
    %589 = vector.load %arg1[%c32_144, %c0_145] : memref<320x128xbf16, #tpu.memory_space<vmem>>, vector<32x128xbf16>
    %cst_146 = arith.constant dense<0.000000e+00> : vector<16x128xf32>
    %590 = tpu.matmul %588, %589, %cst_146 {dimension_numbers = #tpu.dot_dimension_numbers<[1], [0], [0], [1], [0, 0, 1, 1], [], []>} : vector<16x32xbf16>, vector<32x128xbf16>, vector<16x128xf32> -> vector<16x128xf32>
    %c0_147 = arith.constant 0 : index
    %c0_148 = arith.constant 0 : index
    %591 = vector.load %arg3[%c0_147, %c0_148] : memref<16x128xf32, #tpu.memory_space<vmem>>, vector<16x128xf32>
    tpu.vector_store %arg3[%c0_147, %c0_148], %590 {strides = array<i32>} : memref<16x128xf32, #tpu.memory_space<vmem>>, vector<16x128xf32>,
    return
  }
}

</mosaic_0001>

<llo_original>
// kernel: tpu_custom_call.1
$region0: #{tpu_custom_call.1}
  #allocation0 [shape = 'u32[]', space=smem, size = 0x4, offset = 0x4, fixed_abs, tag = 'smem constant byte address 0x4 - core index']
  #allocation1 [shape = 'u32[144,128]{1,0:T(1,128)}', space=vmem, size = 0x12000, scoped, tag = 'internal scratch']
  %s0 = inlined_call_operand.hbm [shape: f32[16,128], index: 0, kind: input, shape index: {}]
  %s1 = inlined_call_operand.hbm [shape: bf16[320,128], index: 1, kind: input, shape index: {}]
  %s2 = inlined_call_operand.hbm [shape: f32[11,128], index: 2, kind: input, shape index: {}]
  %s3 = inlined_call_operand.hbm [shape: f32[16,128], index: 3, kind: output, shape index: {}]
  %s4 = sld [smem:[#allocation0]]
  $region34: #{tpu_custom_call.1} parent=0
    _
  %s6 = ssub.s32 1, %s4
  %s7 = scalar_select 0, %s6, %s4
  $region1: #{tpu_custom_call.1} parent=0
    #allocation2 [shape = 'u8[8192]{0}', space=vmem, size = 0x2000, scoped, tag = 'input window, operand 0, single buffered']
    #allocation3 [shape = 's32[1]{0}', space=sflag, size = 0x4, scoped, tag = 'scoped memory for tpu_custom_call.1']
    #allocation4 [shape = 's32[1]{0}', space=sflag, size = 0x4, scoped, tag = 'scoped memory for tpu_custom_call.1']
    #allocation5 [shape = 'u8[81920]{0}', space=vmem, size = 0x14000, scoped, tag = 'input window, operand 1, single buffered']
    #allocation6 [shape = 's32[1]{0}', space=sflag, size = 0x4, scoped, tag = 'scoped memory for tpu_custom_call.1']
    #allocation7 [shape = 'u8[8192]{0}', space=vmem, size = 0x2000, scoped, tag = 'input window, operand 2, single buffered']
    #allocation8 [shape = 'u8[8192]{0}', space=vmem, size = 0x2000, scoped, tag = 'output window, operand 0, single buffered']
    %8 = vsyncpa [#allocation3], 0
    %9 = vsyncpa [#allocation6], 0
    %10 = vsyncpa [#allocation4], 0
    // Predicated region
    $region2: #{tpu_custom_call.1} parent=1 // pred_check
      _
    $region3: #{tpu_custom_call.1} parent=1 // pred_check_branch
      %12 = sbr.rel (0) target = $region5
    $region4: #{tpu_custom_call.1} parent=1 // pred_region
      %s14 = ssub.s32 256, 256
      %15 = vsyncadd [#allocation3], %s14
      %s16 = sshll.u32 [#allocation2], 4
      %s17 = int_to_ptr.vmem [resolvable:$true] %s16
      %22 = dma.hbm_to_vmem [thread:$0]  %s0, 256, %s17, [#allocation3], 128, 128, 8
    $region5: #{tpu_custom_call.1} parent=1 // pred_fallthru
      _
    // Predicated region
    $region6: #{tpu_custom_call.1} parent=1 // pred_check
      _
    $region7: #{tpu_custom_call.1} parent=1 // pred_check_branch
      %24 = sbr.rel (0) target = $region9
    $region8: #{tpu_custom_call.1} parent=1 // pred_region
      %s26 = ssub.s32 2560, 2560
      %27 = vsyncadd [#allocation6], %s26
      %s28 = sshll.u32 [#allocation5], 4
      %s29 = int_to_ptr.vmem [resolvable:$true] %s28
      %34 = dma.hbm_to_vmem [thread:$0]  %s1, 2560, %s29, [#allocation6], 64, 64, 4
    $region9: #{tpu_custom_call.1} parent=1 // pred_fallthru
      _
    // Predicated region
    $region10: #{tpu_custom_call.1} parent=1 // pred_check
      _
    $region11: #{tpu_custom_call.1} parent=1 // pred_check_branch
      %36 = sbr.rel (0) target = $region13
    $region12: #{tpu_custom_call.1} parent=1 // pred_region
      %s38 = ssub.s32 256, 256
      %39 = vsyncadd [#allocation6], %s38
      %s40 = sshll.u32 [#allocation7], 4
      %s41 = int_to_ptr.vmem [resolvable:$true] %s40
      %46 = dma.hbm_to_vmem [thread:$0]  %s2, 256, %s41, [#allocation6], 128, 128, 8
    $region13: #{tpu_custom_call.1} parent=1 // pred_fallthru
      _
    // Predicated region
    $region14: #{tpu_custom_call.1} parent=1 // pred_check
      _
    $region15: #{tpu_custom_call.1} parent=1 // pred_check_branch
      %48 = sbr.rel (0) target = $region17
    $region16: #{tpu_custom_call.1} parent=1 // pred_region
      %49 = dma.done [#allocation3], 256
    $region17: #{tpu_custom_call.1} parent=1 // pred_fallthru
      _
    // Predicated region
    $region18: #{tpu_custom_call.1} parent=1 // pred_check
      _
    $region19: #{tpu_custom_call.1} parent=1 // pred_check_branch
      %51 = sbr.rel (0) target = $region21
    $region20: #{tpu_custom_call.1} parent=1 // pred_region
      %52 = dma.done [#allocation6], 2560
    $region21: #{tpu_custom_call.1} parent=1 // pred_fallthru
      _
    // Predicated region
    $region22: #{tpu_custom_call.1} parent=1 // pred_check
      _
    $region23: #{tpu_custom_call.1} parent=1 // pred_check_branch
      %54 = sbr.rel (0) target = $region25
    $region24: #{tpu_custom_call.1} parent=1 // pred_region
      %55 = dma.done [#allocation6], 256
    $region25: #{tpu_custom_call.1} parent=1 // pred_fallthru
      _
    %v57 = vld [vmem:[#allocation2] sm:$0xff]
    %v58 = vld [vmem:[#allocation2 + $0x8] sm:$0xff]
    %v59 = vpack.c.bf16 %v58, %v57
    %v60 = vld [vmem:[#allocation5] sm:$0xf]
    %v61 = vld [vmem:[#allocation5 + $0x4] sm:$0xf]
    %v62 = vld [vmem:[#allocation5 + $0x8] sm:$0xf]
    %v63 = vld [vmem:[#allocation5 + $0xc] sm:$0xf]
    %v64 = vld [vmem:[#allocation7] sm:$0x1]
    %v65 = vlaneseq
    %v66 = vshrl.u32 %v65, 7
    %v67 = vsub.s32 0, %v66
    %v68 = vrot.slane %v64, %v67
    %v73 = vunpack.c.l.b16 %v60
    %v74 = vunpack.c.l.b16 %v61
    %v75 = vunpack.c.l.b16 %v62
    %v76 = vunpack.c.l.b16 %v63
    %v77 = vpack.c.b16 %v74, %v73
    %v78 = vpack.c.b16 %v76, %v75
    %vm81 = vcmask 261120
    %v83 = vsel %vm81, %v59, 0
    %85 = vmatprep.subr.bf16.mxu0 0
    %86 = vmatpush1.bf16.msra.mxu0 %v77
    %87 = vmatprep.subr.bf16.mxu0 0
    %88 = vmatpush1.bf16.msra.mxu0 %v78
    %89 = vmatprep.subr.bf16.mxu0 0
    %90 = vmatpush1.bf16.msra.mxu0 0
    %91 = vmatprep.subr.bf16.mxu0 0
    %92 = vmatpush1.bf16.msra.mxu0 0
    %93 = vmatprep.subr.bf16.mxu0 0
    %94 = vmatpush1.bf16.msra.mxu0 0
    %95 = vmatprep.subr.bf16.mxu0 0
    %96 = vmatpush1.bf16.msra.mxu0 0
    %97 = vmatprep.subr.bf16.mxu0 0
    %98 = vmatpush1.bf16.msra.mxu0 0
    %99 = vmatprep.subr.bf16.mxu0 0
    %100 = vmatpush1.bf16.msra.mxu0 0
    %101 = vmatprep.subr.bf16.mxu0 0
    %102 = vmatpush1.bf16.msra.mxu0 0
    %103 = vmatprep.subr.bf16.mxu0 0
    %104 = vmatpush1.bf16.msra.mxu0 0
    %105 = vmatprep.subr.bf16.mxu0 0
    %106 = vmatpush1.bf16.msra.mxu0 0
    %107 = vmatprep.subr.bf16.mxu0 0
    %108 = vmatpush1.bf16.msra.mxu0 0
    %109 = vmatprep.subr.bf16.mxu0 0
    %110 = vmatpush1.bf16.msra.mxu0 0
    %111 = vmatprep.subr.bf16.mxu0 0
    %112 = vmatpush1.bf16.msra.mxu0 0
    %113 = vmatprep.subr.bf16.mxu0 0
    %114 = vmatpush1.bf16.msra.mxu0 0
    %115 = vmatprep.subr.bf16.mxu0 0
    %116 = vmatpush1.bf16.msra.mxu0 0
    %117 = vmatprep.mubr.bf16.mxu0 0
    %118 = vmatmul.mubr.bf16.gmra.mrb[0].mxu0 %v83
    %v119 = vpop.f32.mrb[0].mxu0
    %v120 = vadd.f32 %v68, %v119
    %v121 = vpop.f32.mrb[0].mxu0
    %v122 = vpop.f32.mrb[0].mxu0
    %v123 = vadd.f32 %v68, %v122
    %v124 = vpop.f32.mrb[0].mxu0
    %125 = vdwg.mxu0
    %v126 = vld [vmem:[#allocation5 + $0x30] sm:$0xf]
    %v127 = vld [vmem:[#allocation5 + $0x34] sm:$0xf]
    %v128 = vld [vmem:[#allocation5 + $0x38] sm:$0xf]
    %v129 = vld [vmem:[#allocation5 + $0x3c] sm:$0xf]
    %v130 = vld [vmem:[#allocation7 + $0x1] sm:$0x1]
    %v131 = vld [vmem:[#allocation7 + $0x2] sm:$0x1]
    %v132 = vld [vmem:[#allocation7 + $0x3] sm:$0x1]
    %v133 = vld [vmem:[#allocation7 + $0x4] sm:$0x1]
    %v134 = vld [vmem:[#allocation7 + $0x5] sm:$0x1]
    %v135 = vld [vmem:[#allocation5 + $0x20] sm:$0xf]
    %v136 = vld [vmem:[#allocation5 + $0x24] sm:$0xf]
    %v137 = vld [vmem:[#allocation5 + $0x28] sm:$0xf]
    %v138 = vld [vmem:[#allocation5 + $0x2c] sm:$0xf]
    %v139 = vlaneseq
    %v140 = vshrl.u32 %v139, 7
    %v141 = vsub.s32 0, %v140
    %v142 = vrot.slane %v130, %v141
    %v147 = vunpack.c.l.b16 %v135
    %v148 = vunpack.c.l.b16 %v136
    %v149 = vunpack.c.l.b16 %v137
    %v150 = vunpack.c.l.b16 %v138
    %v151 = vpack.c.b16 %v148, %v147
    %v152 = vpack.c.b16 %v150, %v149
    %155 = vmatprep.subr.bf16.mxu0 0
    %156 = vmatpush1.bf16.msra.mxu0 %v151
    %157 = vmatprep.subr.bf16.mxu0 0
    %158 = vmatpush1.bf16.msra.mxu0 %v152
    %159 = vmatprep.subr.bf16.mxu0 0
    %160 = vmatpush1.bf16.msra.mxu0 0
    %161 = vmatprep.subr.bf16.mxu0 0
    %162 = vmatpush1.bf16.msra.mxu0 0
    %163 = vmatprep.subr.bf16.mxu0 0
    %164 = vmatpush1.bf16.msra.mxu0 0
    %165 = vmatprep.subr.bf16.mxu0 0
    %166 = vmatpush1.bf16.msra.mxu0 0
    %167 = vmatprep.subr.bf16.mxu0 0
    %168 = vmatpush1.bf16.msra.mxu0 0
    %169 = vmatprep.subr.bf16.mxu0 0
    %170 = vmatpush1.bf16.msra.mxu0 0
    %171 = vmatprep.subr.bf16.mxu0 0
    %172 = vmatpush1.bf16.msra.mxu0 0
    %173 = vmatprep.subr.bf16.mxu0 0
    %174 = vmatpush1.bf16.msra.mxu0 0
    %175 = vmatprep.subr.bf16.mxu0 0
    %176 = vmatpush1.bf16.msra.mxu0 0
    %177 = vmatprep.subr.bf16.mxu0 0
    %178 = vmatpush1.bf16.msra.mxu0 0
    %179 = vmatprep.subr.bf16.mxu0 0
    %180 = vmatpush1.bf16.msra.mxu0 0
    %181 = vmatprep.subr.bf16.mxu0 0
    %182 = vmatpush1.bf16.msra.mxu0 0
    %183 = vmatprep.subr.bf16.mxu0 0
    %184 = vmatpush1.bf16.msra.mxu0 0
    %185 = vmatprep.subr.bf16.mxu0 0
    %186 = vmatpush1.bf16.msra.mxu0 0
    %187 = vmatprep.mubr.bf16.mxu0 0
    %188 = vmatmul.mubr.bf16.gmra.mrb[0].mxu0 %v83
    %v189 = vpop.f32.mrb[0].mxu0
    %v190 = vadd.f32 %v142, %v189
    %v191 = vpop.f32.mrb[0].mxu0
    %v192 = vpop.f32.mrb[0].mxu0
    %v193 = vadd.f32 %v142, %v192
    %v194 = vpop.f32.mrb[0].mxu0
    %195 = vdwg.mxu0
    %v196 = vpack.c.bf16 %v193, %v190
    %198 = vrot.lane.b32.xlu0 %v196, 96
    %v199 = vpop.permute.xlu0 %198
    %202 = vrot.lane.b32.xlu0 %v57, 96
    %v203 = vpop.permute.xlu0 %202
    %204 = vrot.lane.b32.xlu0 %v58, 96
    %v205 = vpop.permute.xlu0 %204
    %vm208 = vcmask 64512
    %v210 = vsel %vm208, %v196, 0
    %v213 = vsel %vm208, %v199, 0
    %215 = vmatprep.subr.bf16.mxu0 0
    %216 = vmatpush1.bf16.xpose.msra.mxu0 %v213
    %217 = vmatprep.subr.bf16.mxu0 0
    %218 = vmatpush1.bf16.xpose.msra.mxu0 0
    %219 = vmatprep.subr.bf16.mxu0 0
    %220 = vmatpush1.bf16.xpose.msra.mxu0 0
    %221 = vmatprep.subr.bf16.mxu0 0
    %222 = vmatpush1.bf16.xpose.msra.mxu0 0
    %223 = vmatprep.subr.bf16.mxu0 0
    %224 = vmatpush1.bf16.xpose.msra.mxu0 0
    %225 = vmatprep.subr.bf16.mxu0 0
    %226 = vmatpush1.bf16.xpose.msra.mxu0 0
    %227 = vmatprep.subr.bf16.mxu0 0
    %228 = vmatpush1.bf16.xpose.msra.mxu0 0
    %229 = vmatprep.subr.bf16.mxu0 0
    %230 = vmatpush1.bf16.xpose.msra.mxu0 0
    %231 = vmatprep.subr.bf16.mxu0 0
    %232 = vmatpush1.bf16.xpose.msra.mxu0 0
    %233 = vmatprep.subr.bf16.mxu0 0
    %234 = vmatpush1.bf16.xpose.msra.mxu0 0
    %235 = vmatprep.subr.bf16.mxu0 0
    %236 = vmatpush1.bf16.xpose.msra.mxu0 0
    %237 = vmatprep.subr.bf16.mxu0 0
    %238 = vmatpush1.bf16.xpose.msra.mxu0 0
    %239 = vmatprep.subr.bf16.mxu0 0
    %240 = vmatpush1.bf16.xpose.msra.mxu0 0
    %241 = vmatprep.subr.bf16.mxu0 0
    %242 = vmatpush1.bf16.xpose.msra.mxu0 0
    %243 = vmatprep.subr.bf16.mxu0 0
    %244 = vmatpush1.bf16.xpose.msra.mxu0 0
    %245 = vmatprep.subr.bf16.mxu0 0
    %246 = vmatpush1.bf16.xpose.msra.mxu0 0
    %247 = vmatprep.mubr.bf16.mxu0 0
    %248 = vmatmul.mubr.bf16.gmra.mrb[0].mxu0 %v210
    %v249 = vpop.f32.mrb[0].mxu0
    %v250 = vadd.f32 %v203, %v249
    %v251 = vpop.f32.mrb[0].mxu0
    %v252 = vpop.f32.mrb[0].mxu0
    %v253 = vadd.f32 %v205, %v252
    %v254 = vpop.f32.mrb[0].mxu0
    %255 = vdwg.mxu0
    %vm256 = vcmask 130048
    %v257 = vsel %vm256, %v250, -inf
    %258 = vmax.xlane.f32.xlu0 %v257
    %v259 = vpop.xlane.xlu0 %258
    %v260 = vsel %vm256, %v253, -inf
    %261 = vmax.xlane.f32.xlu0 %v260
    %v262 = vpop.xlane.xlu0 %261
    %v263 = vsub.f32 %v250, %v259
    %v264 = vsub.f32 %v253, %v262
    %v265 = vmul.f32 %v263, 1.442695
    %v266 = vpow.pop %v265
    %v267 = vmul.f32 %v264, 1.442695
    %v268 = vpow.pop %v267
    %v269 = vsel %vm256, %v266, 0.0
    %270 = vadd.xlane.f32.xlu0 %v269
    %v271 = vpop.xlane.xlu0 %270
    %v272 = vsel %vm256, %v268, 0.0
    %273 = vadd.xlane.f32.xlu0 %v272
    %v274 = vpop.xlane.xlu0 %273
    %v275 = vpack.c.bf16 %v268, %v266
    %276 = vrot.lane.b32.xlu0 %v196, 64
    %v277 = vpop.permute.xlu0 %276
    %v280 = vsel %vm256, %v275, 0
    %282 = vmatprep.subr.bf16.mxu0 0
    %283 = vmatpush1.bf16.msra.mxu0 %v277
    %284 = vmatprep.subr.bf16.mxu0 0
    %285 = vmatpush1.bf16.msra.mxu0 0
    %286 = vmatprep.subr.bf16.mxu0 0
    %287 = vmatpush1.bf16.msra.mxu0 0
    %288 = vmatprep.subr.bf16.mxu0 0
    %289 = vmatpush1.bf16.msra.mxu0 0
    %290 = vmatprep.subr.bf16.mxu0 0
    %291 = vmatpush1.bf16.msra.mxu0 0
    %292 = vmatprep.subr.bf16.mxu0 0
    %293 = vmatpush1.bf16.msra.mxu0 0
    %294 = vmatprep.subr.bf16.mxu0 0
    %295 = vmatpush1.bf16.msra.mxu0 0
    %296 = vmatprep.subr.bf16.mxu0 0
    %297 = vmatpush1.bf16.msra.mxu0 0
    %298 = vmatprep.subr.bf16.mxu0 0
    %299 = vmatpush1.bf16.msra.mxu0 0
    %300 = vmatprep.subr.bf16.mxu0 0
    %301 = vmatpush1.bf16.msra.mxu0 0
    %302 = vmatprep.subr.bf16.mxu0 0
    %303 = vmatpush1.bf16.msra.mxu0 0
    %304 = vmatprep.subr.bf16.mxu0 0
    %305 = vmatpush1.bf16.msra.mxu0 0
    %306 = vmatprep.subr.bf16.mxu0 0
    %307 = vmatpush1.bf16.msra.mxu0 0
    %308 = vmatprep.subr.bf16.mxu0 0
    %309 = vmatpush1.bf16.msra.mxu0 0
    %310 = vmatprep.subr.bf16.mxu0 0
    %311 = vmatpush1.bf16.msra.mxu0 0
    %312 = vmatprep.subr.bf16.mxu0 0
    %313 = vmatpush1.bf16.msra.mxu0 0
    %314 = vmatprep.mubr.bf16.mxu0 0
    %315 = vmatmul.mubr.bf16.gmra.mrb[0].mxu0 %v280
    %v316 = vpop.f32.mrb[0].mxu0
    %v317 = vadd.f32 0.0, %v316
    %v318 = vpop.f32.mrb[0].mxu0
    %v319 = vpop.f32.mrb[0].mxu0
    %v320 = vadd.f32 0.0, %v319
    %v321 = vpop.f32.mrb[0].mxu0
    %322 = vdwg.mxu0
    %v323 = vrcp.pop %v271
    %v324 = vrcp.pop %v274
    %v325 = vmul.f32 %v317, %v323
    %v326 = vmul.f32 %v320, %v324
    %v327 = vpack.c.bf16 %v326, %v325
    %328 = vrot.lane.b32.xlu0 %v196, 120
    %v329 = vpop.permute.xlu0 %328
    %330 = vrot.lane.b32.xlu0 %v196, 88
    %v331 = vpop.permute.xlu0 %330
    %v333 = vsel %vm208, %v329, 0
    %v336 = vsel %vm208, %v331, 0
    %338 = vmatprep.subr.bf16.mxu0 0
    %339 = vmatpush1.bf16.xpose.msra.mxu0 %v336
    %340 = vmatprep.subr.bf16.mxu0 0
    %341 = vmatpush1.bf16.xpose.msra.mxu0 0
    %342 = vmatprep.subr.bf16.mxu0 0
    %343 = vmatpush1.bf16.xpose.msra.mxu0 0
    %344 = vmatprep.subr.bf16.mxu0 0
    %345 = vmatpush1.bf16.xpose.msra.mxu0 0
    %346 = vmatprep.subr.bf16.mxu0 0
    %347 = vmatpush1.bf16.xpose.msra.mxu0 0
    %348 = vmatprep.subr.bf16.mxu0 0
    %349 = vmatpush1.bf16.xpose.msra.mxu0 0
    %350 = vmatprep.subr.bf16.mxu0 0
    %351 = vmatpush1.bf16.xpose.msra.mxu0 0
    %352 = vmatprep.subr.bf16.mxu0 0
    %353 = vmatpush1.bf16.xpose.msra.mxu0 0
    %354 = vmatprep.subr.bf16.mxu0 0
    %355 = vmatpush1.bf16.xpose.msra.mxu0 0
    %356 = vmatprep.subr.bf16.mxu0 0
    %357 = vmatpush1.bf16.xpose.msra.mxu0 0
    %358 = vmatprep.subr.bf16.mxu0 0
    %359 = vmatpush1.bf16.xpose.msra.mxu0 0
    %360 = vmatprep.subr.bf16.mxu0 0
    %361 = vmatpush1.bf16.xpose.msra.mxu0 0
    %362 = vmatprep.subr.bf16.mxu0 0
    %363 = vmatpush1.bf16.xpose.msra.mxu0 0
    %364 = vmatprep.subr.bf16.mxu0 0
    %365 = vmatpush1.bf16.xpose.msra.mxu0 0
    %366 = vmatprep.subr.bf16.mxu0 0
    %367 = vmatpush1.bf16.xpose.msra.mxu0 0
    %368 = vmatprep.subr.bf16.mxu0 0
    %369 = vmatpush1.bf16.xpose.msra.mxu0 0
    %370 = vmatprep.mubr.bf16.mxu0 0
    %371 = vmatmul.mubr.bf16.gmra.mrb[0].mxu0 %v333
    %v372 = vpop.f32.mrb[0].mxu0
    %v373 = vadd.f32 %v203, %v372
    %v374 = vpop.f32.mrb[0].mxu0
    %v375 = vpop.f32.mrb[0].mxu0
    %v376 = vadd.f32 %v205, %v375
    %v377 = vpop.f32.mrb[0].mxu0
    %378 = vdwg.mxu0
    %v379 = vsel %vm256, %v373, -inf
    %380 = vmax.xlane.f32.xlu0 %v379
    %v381 = vpop.xlane.xlu0 %380
    %v382 = vsel %vm256, %v376, -inf
    %383 = vmax.xlane.f32.xlu0 %v382
    %v384 = vpop.xlane.xlu0 %383
    %v385 = vsub.f32 %v373, %v381
    %v386 = vsub.f32 %v376, %v384
    %v387 = vmul.f32 %v385, 1.442695
    %v388 = vpow.pop %v387
    %v389 = vmul.f32 %v386, 1.442695
    %v390 = vpow.pop %v389
    %v391 = vsel %vm256, %v388, 0.0
    %392 = vadd.xlane.f32.xlu0 %v391
    %v393 = vpop.xlane.xlu0 %392
    %v394 = vsel %vm256, %v390, 0.0
    %395 = vadd.xlane.f32.xlu0 %v394
    %v396 = vpop.xlane.xlu0 %395
    %v397 = vpack.c.bf16 %v390, %v388
    %398 = vrot.lane.b32.xlu0 %v196, 56
    %v399 = vpop.permute.xlu0 %398
    %v402 = vsel %vm256, %v397, 0
    %404 = vmatprep.subr.bf16.mxu0 0
    %405 = vmatpush1.bf16.msra.mxu0 %v399
    %406 = vmatprep.subr.bf16.mxu0 0
    %407 = vmatpush1.bf16.msra.mxu0 0
    %408 = vmatprep.subr.bf16.mxu0 0
    %409 = vmatpush1.bf16.msra.mxu0 0
    %410 = vmatprep.subr.bf16.mxu0 0
    %411 = vmatpush1.bf16.msra.mxu0 0
    %412 = vmatprep.subr.bf16.mxu0 0
    %413 = vmatpush1.bf16.msra.mxu0 0
    %414 = vmatprep.subr.bf16.mxu0 0
    %415 = vmatpush1.bf16.msra.mxu0 0
    %416 = vmatprep.subr.bf16.mxu0 0
    %417 = vmatpush1.bf16.msra.mxu0 0
    %418 = vmatprep.subr.bf16.mxu0 0
    %419 = vmatpush1.bf16.msra.mxu0 0
    %420 = vmatprep.subr.bf16.mxu0 0
    %421 = vmatpush1.bf16.msra.mxu0 0
    %422 = vmatprep.subr.bf16.mxu0 0
    %423 = vmatpush1.bf16.msra.mxu0 0
    %424 = vmatprep.subr.bf16.mxu0 0
    %425 = vmatpush1.bf16.msra.mxu0 0
    %426 = vmatprep.subr.bf16.mxu0 0
    %427 = vmatpush1.bf16.msra.mxu0 0
    %428 = vmatprep.subr.bf16.mxu0 0
    %429 = vmatpush1.bf16.msra.mxu0 0
    %430 = vmatprep.subr.bf16.mxu0 0
    %431 = vmatpush1.bf16.msra.mxu0 0
    %432 = vmatprep.subr.bf16.mxu0 0
    %433 = vmatpush1.bf16.msra.mxu0 0
    %434 = vmatprep.subr.bf16.mxu0 0
    %435 = vmatpush1.bf16.msra.mxu0 0
    %436 = vmatprep.mubr.bf16.mxu0 0
    %437 = vmatmul.mubr.bf16.gmra.mrb[0].mxu0 %v402
    %v438 = vpop.f32.mrb[0].mxu0
    %v439 = vadd.f32 0.0, %v438
    %v440 = vpop.f32.mrb[0].mxu0
    %v441 = vpop.f32.mrb[0].mxu0
    %v442 = vadd.f32 0.0, %v441
    %v443 = vpop.f32.mrb[0].mxu0
    %444 = vdwg.mxu0
    %v445 = vrcp.pop %v393
    %v446 = vrcp.pop %v396
    %v447 = vmul.f32 %v439, %v445
    %v448 = vmul.f32 %v442, %v446
    %v449 = vpack.c.bf16 %v448, %v447
    %v451 = vsel %vm208, %v449, 0
    %vm453 = vcmask 1043456
    %v455 = vsel %vm453, %v127, 0
    %457 = vmatprep.subr.bf16.mxu0 0
    %458 = vmatpush1.bf16.msra.mxu0 %v455
    %459 = vmatprep.subr.bf16.mxu0 0
    %460 = vmatpush1.bf16.msra.mxu0 0
    %461 = vmatprep.subr.bf16.mxu0 0
    %462 = vmatpush1.bf16.msra.mxu0 0
    %463 = vmatprep.subr.bf16.mxu0 0
    %464 = vmatpush1.bf16.msra.mxu0 0
    %465 = vmatprep.subr.bf16.mxu0 0
    %466 = vmatpush1.bf16.msra.mxu0 0
    %467 = vmatprep.subr.bf16.mxu0 0
    %468 = vmatpush1.bf16.msra.mxu0 0
    %469 = vmatprep.subr.bf16.mxu0 0
    %470 = vmatpush1.bf16.msra.mxu0 0
    %471 = vmatprep.subr.bf16.mxu0 0
    %472 = vmatpush1.bf16.msra.mxu0 0
    %473 = vmatprep.subr.bf16.mxu0 0
    %474 = vmatpush1.bf16.msra.mxu0 0
    %475 = vmatprep.subr.bf16.mxu0 0
    %476 = vmatpush1.bf16.msra.mxu0 0
    %477 = vmatprep.subr.bf16.mxu0 0
    %478 = vmatpush1.bf16.msra.mxu0 0
    %479 = vmatprep.subr.bf16.mxu0 0
    %480 = vmatpush1.bf16.msra.mxu0 0
    %481 = vmatprep.subr.bf16.mxu0 0
    %482 = vmatpush1.bf16.msra.mxu0 0
    %483 = vmatprep.subr.bf16.mxu0 0
    %484 = vmatpush1.bf16.msra.mxu0 0
    %485 = vmatprep.subr.bf16.mxu0 0
    %486 = vmatpush1.bf16.msra.mxu0 0
    %487 = vmatprep.subr.bf16.mxu0 0
    %488 = vmatpush1.bf16.msra.mxu0 0
    %489 = vmatprep.mubr.bf16.mxu0 0
    %490 = vmatmul.mubr.bf16.gmra.mrb[0].mxu0 %v451
    %v491 = vpop.f32.mrb[0].mxu0
    %v492 = vadd.f32 0.0, %v491
    %v493 = vpop.f32.mrb[0].mxu0
    %v494 = vpop.f32.mrb[0].mxu0
    %v495 = vadd.f32 0.0, %v494
    %v496 = vpop.f32.mrb[0].mxu0
    %497 = vdwg.mxu0
    %v499 = vsel %vm208, %v327, 0
    %v502 = vsel %vm453, %v126, 0
    %504 = vmatprep.subr.bf16.mxu0 0
    %505 = vmatpush1.bf16.msra.mxu0 %v502
    %506 = vmatprep.subr.bf16.mxu0 0
    %507 = vmatpush1.bf16.msra.mxu0 0
    %508 = vmatprep.subr.bf16.mxu0 0
    %509 = vmatpush1.bf16.msra.mxu0 0
    %510 = vmatprep.subr.bf16.mxu0 0
    %511 = vmatpush1.bf16.msra.mxu0 0
    %512 = vmatprep.subr.bf16.mxu0 0
    %513 = vmatpush1.bf16.msra.mxu0 0
    %514 = vmatprep.subr.bf16.mxu0 0
    %515 = vmatpush1.bf16.msra.mxu0 0
    %516 = vmatprep.subr.bf16.mxu0 0
    %517 = vmatpush1.bf16.msra.mxu0 0
    %518 = vmatprep.subr.bf16.mxu0 0
    %519 = vmatpush1.bf16.msra.mxu0 0
    %520 = vmatprep.subr.bf16.mxu0 0
    %521 = vmatpush1.bf16.msra.mxu0 0
    %522 = vmatprep.subr.bf16.mxu0 0
    %523 = vmatpush1.bf16.msra.mxu0 0
    %524 = vmatprep.subr.bf16.mxu0 0
    %525 = vmatpush1.bf16.msra.mxu0 0
    %526 = vmatprep.subr.bf16.mxu0 0
    %527 = vmatpush1.bf16.msra.mxu0 0
    %528 = vmatprep.subr.bf16.mxu0 0
    %529 = vmatpush1.bf16.msra.mxu0 0
    %530 = vmatprep.subr.bf16.mxu0 0
    %531 = vmatpush1.bf16.msra.mxu0 0
    %532 = vmatprep.subr.bf16.mxu0 0
    %533 = vmatpush1.bf16.msra.mxu0 0
    %534 = vmatprep.subr.bf16.mxu0 0
    %535 = vmatpush1.bf16.msra.mxu0 0
    %536 = vmatprep.mubr.bf16.mxu0 0
    %537 = vmatmul.mubr.bf16.gmra.mrb[0].mxu0 %v499
    %v538 = vpop.f32.mrb[0].mxu0
    %v539 = vadd.f32 %v492, %v538
    %v540 = vpop.f32.mrb[0].mxu0
    %v541 = vpop.f32.mrb[0].mxu0
    %v542 = vadd.f32 %v495, %v541
    %v543 = vpop.f32.mrb[0].mxu0
    %544 = vdwg.mxu0
    %545 = vrot.lane.b32.xlu0 %v196, 112
    %v546 = vpop.permute.xlu0 %545
    %547 = vrot.lane.b32.xlu0 %v196, 80
    %v548 = vpop.permute.xlu0 %547
    %v550 = vsel %vm208, %v546, 0
    %v553 = vsel %vm208, %v548, 0
    %555 = vmatprep.subr.bf16.mxu0 0
    %556 = vmatpush1.bf16.xpose.msra.mxu0 %v553
    %557 = vmatprep.subr.bf16.mxu0 0
    %558 = vmatpush1.bf16.xpose.msra.mxu0 0
    %559 = vmatprep.subr.bf16.mxu0 0
    %560 = vmatpush1.bf16.xpose.msra.mxu0 0
    %561 = vmatprep.subr.bf16.mxu0 0
    %562 = vmatpush1.bf16.xpose.msra.mxu0 0
    %563 = vmatprep.subr.bf16.mxu0 0
    %564 = vmatpush1.bf16.xpose.msra.mxu0 0
    %565 = vmatprep.subr.bf16.mxu0 0
    %566 = vmatpush1.bf16.xpose.msra.mxu0 0
    %567 = vmatprep.subr.bf16.mxu0 0
    %568 = vmatpush1.bf16.xpose.msra.mxu0 0
    %569 = vmatprep.subr.bf16.mxu0 0
    %570 = vmatpush1.bf16.xpose.msra.mxu0 0
    %571 = vmatprep.subr.bf16.mxu0 0
    %572 = vmatpush1.bf16.xpose.msra.mxu0 0
    %573 = vmatprep.subr.bf16.mxu0 0
    %574 = vmatpush1.bf16.xpose.msra.mxu0 0
    %575 = vmatprep.subr.bf16.mxu0 0
    %576 = vmatpush1.bf16.xpose.msra.mxu0 0
    %577 = vmatprep.subr.bf16.mxu0 0
    %578 = vmatpush1.bf16.xpose.msra.mxu0 0
    %579 = vmatprep.subr.bf16.mxu0 0
    %580 = vmatpush1.bf16.xpose.msra.mxu0 0
    %581 = vmatprep.subr.bf16.mxu0 0
    %582 = vmatpush1.bf16.xpose.msra.mxu0 0
    %583 = vmatprep.subr.bf16.mxu0 0
    %584 = vmatpush1.bf16.xpose.msra.mxu0 0
    %585 = vmatprep.subr.bf16.mxu0 0
    %586 = vmatpush1.bf16.xpose.msra.mxu0 0
    %587 = vmatprep.mubr.bf16.mxu0 0
    %588 = vmatmul.mubr.bf16.gmra.mrb[0].mxu0 %v550
    %v589 = vpop.f32.mrb[0].mxu0
    %v590 = vadd.f32 %v203, %v589
    %v591 = vpop.f32.mrb[0].mxu0
    %v592 = vpop.f32.mrb[0].mxu0
    %v593 = vadd.f32 %v205, %v592
    %v594 = vpop.f32.mrb[0].mxu0
    %595 = vdwg.mxu0
    %v596 = vsel %vm256, %v590, -inf
    %597 = vmax.xlane.f32.xlu0 %v596
    %v598 = vpop.xlane.xlu0 %597
    %v599 = vsel %vm256, %v593, -inf
    %600 = vmax.xlane.f32.xlu0 %v599
    %v601 = vpop.xlane.xlu0 %600
    %v602 = vsub.f32 %v590, %v598
    %v603 = vsub.f32 %v593, %v601
    %v604 = vmul.f32 %v602, 1.442695
    %v605 = vpow.pop %v604
    %v606 = vmul.f32 %v603, 1.442695
    %v607 = vpow.pop %v606
    %v608 = vsel %vm256, %v605, 0.0
    %609 = vadd.xlane.f32.xlu0 %v608
    %v610 = vpop.xlane.xlu0 %609
    %v611 = vsel %vm256, %v607, 0.0
    %612 = vadd.xlane.f32.xlu0 %v611
    %v613 = vpop.xlane.xlu0 %612
    %v614 = vpack.c.bf16 %v607, %v605
    %615 = vrot.lane.b32.xlu0 %v196, 48
    %v616 = vpop.permute.xlu0 %615
    %v619 = vsel %vm256, %v614, 0
    %621 = vmatprep.subr.bf16.mxu0 0
    %622 = vmatpush1.bf16.msra.mxu0 %v616
    %623 = vmatprep.subr.bf16.mxu0 0
    %624 = vmatpush1.bf16.msra.mxu0 0
    %625 = vmatprep.subr.bf16.mxu0 0
    %626 = vmatpush1.bf16.msra.mxu0 0
    %627 = vmatprep.subr.bf16.mxu0 0
    %628 = vmatpush1.bf16.msra.mxu0 0
    %629 = vmatprep.subr.bf16.mxu0 0
    %630 = vmatpush1.bf16.msra.mxu0 0
    %631 = vmatprep.subr.bf16.mxu0 0
    %632 = vmatpush1.bf16.msra.mxu0 0
    %633 = vmatprep.subr.bf16.mxu0 0
    %634 = vmatpush1.bf16.msra.mxu0 0
    %635 = vmatprep.subr.bf16.mxu0 0
    %636 = vmatpush1.bf16.msra.mxu0 0
    %637 = vmatprep.subr.bf16.mxu0 0
    %638 = vmatpush1.bf16.msra.mxu0 0
    %639 = vmatprep.subr.bf16.mxu0 0
    %640 = vmatpush1.bf16.msra.mxu0 0
    %641 = vmatprep.subr.bf16.mxu0 0
    %642 = vmatpush1.bf16.msra.mxu0 0
    %643 = vmatprep.subr.bf16.mxu0 0
    %644 = vmatpush1.bf16.msra.mxu0 0
    %645 = vmatprep.subr.bf16.mxu0 0
    %646 = vmatpush1.bf16.msra.mxu0 0
    %647 = vmatprep.subr.bf16.mxu0 0
    %648 = vmatpush1.bf16.msra.mxu0 0
    %649 = vmatprep.subr.bf16.mxu0 0
    %650 = vmatpush1.bf16.msra.mxu0 0
    %651 = vmatprep.subr.bf16.mxu0 0
    %652 = vmatpush1.bf16.msra.mxu0 0
    %653 = vmatprep.mubr.bf16.mxu0 0
    %654 = vmatmul.mubr.bf16.gmra.mrb[0].mxu0 %v619
    %v655 = vpop.f32.mrb[0].mxu0
    %v656 = vadd.f32 0.0, %v655
    %v657 = vpop.f32.mrb[0].mxu0
    %v658 = vpop.f32.mrb[0].mxu0
    %v659 = vadd.f32 0.0, %v658
    %v660 = vpop.f32.mrb[0].mxu0
    %661 = vdwg.mxu0
    %v662 = vrcp.pop %v610
    %v663 = vrcp.pop %v613
    %v664 = vmul.f32 %v656, %v662
    %v665 = vmul.f32 %v659, %v663
    %v666 = vpack.c.bf16 %v665, %v664
    %v668 = vsel %vm208, %v666, 0
    %v671 = vsel %vm453, %v128, 0
    %673 = vmatprep.subr.bf16.mxu0 0
    %674 = vmatpush1.bf16.msra.mxu0 %v671
    %675 = vmatprep.subr.bf16.mxu0 0
    %676 = vmatpush1.bf16.msra.mxu0 0
    %677 = vmatprep.subr.bf16.mxu0 0
    %678 = vmatpush1.bf16.msra.mxu0 0
    %679 = vmatprep.subr.bf16.mxu0 0
    %680 = vmatpush1.bf16.msra.mxu0 0
    %681 = vmatprep.subr.bf16.mxu0 0
    %682 = vmatpush1.bf16.msra.mxu0 0
    %683 = vmatprep.subr.bf16.mxu0 0
    %684 = vmatpush1.bf16.msra.mxu0 0
    %685 = vmatprep.subr.bf16.mxu0 0
    %686 = vmatpush1.bf16.msra.mxu0 0
    %687 = vmatprep.subr.bf16.mxu0 0
    %688 = vmatpush1.bf16.msra.mxu0 0
    %689 = vmatprep.subr.bf16.mxu0 0
    %690 = vmatpush1.bf16.msra.mxu0 0
    %691 = vmatprep.subr.bf16.mxu0 0
    %692 = vmatpush1.bf16.msra.mxu0 0
    %693 = vmatprep.subr.bf16.mxu0 0
    %694 = vmatpush1.bf16.msra.mxu0 0
    %695 = vmatprep.subr.bf16.mxu0 0
    %696 = vmatpush1.bf16.msra.mxu0 0
    %697 = vmatprep.subr.bf16.mxu0 0
    %698 = vmatpush1.bf16.msra.mxu0 0
    %699 = vmatprep.subr.bf16.mxu0 0
    %700 = vmatpush1.bf16.msra.mxu0 0
    %701 = vmatprep.subr.bf16.mxu0 0
    %702 = vmatpush1.bf16.msra.mxu0 0
    %703 = vmatprep.subr.bf16.mxu0 0
    %704 = vmatpush1.bf16.msra.mxu0 0
    %705 = vmatprep.mubr.bf16.mxu0 0
    %706 = vmatmul.mubr.bf16.gmra.mrb[0].mxu0 %v668
    %v707 = vpop.f32.mrb[0].mxu0
    %v708 = vadd.f32 0.0, %v707
    %v709 = vpop.f32.mrb[0].mxu0
    %v710 = vpop.f32.mrb[0].mxu0
    %v711 = vadd.f32 0.0, %v710
    %v712 = vpop.f32.mrb[0].mxu0
    %713 = vdwg.mxu0
    %v714 = vadd.f32 %v539, %v708
    %v715 = vadd.f32 %v542, %v711
    %716 = vrot.lane.b32.xlu0 %v196, 104
    %v717 = vpop.permute.xlu0 %716
    %718 = vrot.lane.b32.xlu0 %v196, 72
    %v719 = vpop.permute.xlu0 %718
    %v721 = vsel %vm208, %v717, 0
    %v724 = vsel %vm208, %v719, 0
    %726 = vmatprep.subr.bf16.mxu0 0
    %727 = vmatpush1.bf16.xpose.msra.mxu0 %v724
    %728 = vmatprep.subr.bf16.mxu0 0
    %729 = vmatpush1.bf16.xpose.msra.mxu0 0
    %730 = vmatprep.subr.bf16.mxu0 0
    %731 = vmatpush1.bf16.xpose.msra.mxu0 0
    %732 = vmatprep.subr.bf16.mxu0 0
    %733 = vmatpush1.bf16.xpose.msra.mxu0 0
    %734 = vmatprep.subr.bf16.mxu0 0
    %735 = vmatpush1.bf16.xpose.msra.mxu0 0
    %736 = vmatprep.subr.bf16.mxu0 0
    %737 = vmatpush1.bf16.xpose.msra.mxu0 0
    %738 = vmatprep.subr.bf16.mxu0 0
    %739 = vmatpush1.bf16.xpose.msra.mxu0 0
    %740 = vmatprep.subr.bf16.mxu0 0
    %741 = vmatpush1.bf16.xpose.msra.mxu0 0
    %742 = vmatprep.subr.bf16.mxu0 0
    %743 = vmatpush1.bf16.xpose.msra.mxu0 0
    %744 = vmatprep.subr.bf16.mxu0 0
    %745 = vmatpush1.bf16.xpose.msra.mxu0 0
    %746 = vmatprep.subr.bf16.mxu0 0
    %747 = vmatpush1.bf16.xpose.msra.mxu0 0
    %748 = vmatprep.subr.bf16.mxu0 0
    %749 = vmatpush1.bf16.xpose.msra.mxu0 0
    %750 = vmatprep.subr.bf16.mxu0 0
    %751 = vmatpush1.bf16.xpose.msra.mxu0 0
    %752 = vmatprep.subr.bf16.mxu0 0
    %753 = vmatpush1.bf16.xpose.msra.mxu0 0
    %754 = vmatprep.subr.bf16.mxu0 0
    %755 = vmatpush1.bf16.xpose.msra.mxu0 0
    %756 = vmatprep.subr.bf16.mxu0 0
    %757 = vmatpush1.bf16.xpose.msra.mxu0 0
    %758 = vmatprep.mubr.bf16.mxu0 0
    %759 = vmatmul.mubr.bf16.gmra.mrb[0].mxu0 %v721
    %v760 = vpop.f32.mrb[0].mxu0
    %v761 = vadd.f32 %v203, %v760
    %v762 = vpop.f32.mrb[0].mxu0
    %v763 = vpop.f32.mrb[0].mxu0
    %v764 = vadd.f32 %v205, %v763
    %v765 = vpop.f32.mrb[0].mxu0
    %766 = vdwg.mxu0
    %v767 = vsel %vm256, %v761, -inf
    %768 = vmax.xlane.f32.xlu0 %v767
    %v769 = vpop.xlane.xlu0 %768
    %v770 = vsel %vm256, %v764, -inf
    %771 = vmax.xlane.f32.xlu0 %v770
    %v772 = vpop.xlane.xlu0 %771
    %v773 = vsub.f32 %v761, %v769
    %v774 = vsub.f32 %v764, %v772
    %v775 = vmul.f32 %v773, 1.442695
    %v776 = vpow.pop %v775
    %v777 = vmul.f32 %v774, 1.442695
    %v778 = vpow.pop %v777
    %v779 = vsel %vm256, %v776, 0.0
    %780 = vadd.xlane.f32.xlu0 %v779
    %v781 = vpop.xlane.xlu0 %780
    %v782 = vsel %vm256, %v778, 0.0
    %783 = vadd.xlane.f32.xlu0 %v782
    %v784 = vpop.xlane.xlu0 %783
    %v785 = vpack.c.bf16 %v778, %v776
    %786 = vrot.lane.b32.xlu0 %v196, 40
    %v787 = vpop.permute.xlu0 %786
    %v790 = vsel %vm256, %v785, 0
    %792 = vmatprep.subr.bf16.mxu0 0
    %793 = vmatpush1.bf16.msra.mxu0 %v787
    %794 = vmatprep.subr.bf16.mxu0 0
    %795 = vmatpush1.bf16.msra.mxu0 0
    %796 = vmatprep.subr.bf16.mxu0 0
    %797 = vmatpush1.bf16.msra.mxu0 0
    %798 = vmatprep.subr.bf16.mxu0 0
    %799 = vmatpush1.bf16.msra.mxu0 0
    %800 = vmatprep.subr.bf16.mxu0 0
    %801 = vmatpush1.bf16.msra.mxu0 0
    %802 = vmatprep.subr.bf16.mxu0 0
    %803 = vmatpush1.bf16.msra.mxu0 0
    %804 = vmatprep.subr.bf16.mxu0 0
    %805 = vmatpush1.bf16.msra.mxu0 0
    %806 = vmatprep.subr.bf16.mxu0 0
    %807 = vmatpush1.bf16.msra.mxu0 0
    %808 = vmatprep.subr.bf16.mxu0 0
    %809 = vmatpush1.bf16.msra.mxu0 0
    %810 = vmatprep.subr.bf16.mxu0 0
    %811 = vmatpush1.bf16.msra.mxu0 0
    %812 = vmatprep.subr.bf16.mxu0 0
    %813 = vmatpush1.bf16.msra.mxu0 0
    %814 = vmatprep.subr.bf16.mxu0 0
    %815 = vmatpush1.bf16.msra.mxu0 0
    %816 = vmatprep.subr.bf16.mxu0 0
    %817 = vmatpush1.bf16.msra.mxu0 0
    %818 = vmatprep.subr.bf16.mxu0 0
    %819 = vmatpush1.bf16.msra.mxu0 0
    %820 = vmatprep.subr.bf16.mxu0 0
    %821 = vmatpush1.bf16.msra.mxu0 0
    %822 = vmatprep.subr.bf16.mxu0 0
    %823 = vmatpush1.bf16.msra.mxu0 0
    %824 = vmatprep.mubr.bf16.mxu0 0
    %825 = vmatmul.mubr.bf16.gmra.mrb[0].mxu0 %v790
    %v826 = vpop.f32.mrb[0].mxu0
    %v827 = vadd.f32 0.0, %v826
    %v828 = vpop.f32.mrb[0].mxu0
    %v829 = vpop.f32.mrb[0].mxu0
    %v830 = vadd.f32 0.0, %v829
    %v831 = vpop.f32.mrb[0].mxu0
    %832 = vdwg.mxu0
    %v833 = vrcp.pop %v781
    %v834 = vrcp.pop %v784
    %v835 = vmul.f32 %v827, %v833
    %v836 = vmul.f32 %v830, %v834
    %v837 = vpack.c.bf16 %v836, %v835
    %v839 = vsel %vm208, %v837, 0
    %v842 = vsel %vm453, %v129, 0
    %844 = vmatprep.subr.bf16.mxu0 0
    %845 = vmatpush1.bf16.msra.mxu0 %v842
    %846 = vmatprep.subr.bf16.mxu0 0
    %847 = vmatpush1.bf16.msra.mxu0 0
    %848 = vmatprep.subr.bf16.mxu0 0
    %849 = vmatpush1.bf16.msra.mxu0 0
    %850 = vmatprep.subr.bf16.mxu0 0
    %851 = vmatpush1.bf16.msra.mxu0 0
    %852 = vmatprep.subr.bf16.mxu0 0
    %853 = vmatpush1.bf16.msra.mxu0 0
    %854 = vmatprep.subr.bf16.mxu0 0
    %855 = vmatpush1.bf16.msra.mxu0 0
    %856 = vmatprep.subr.bf16.mxu0 0
    %857 = vmatpush1.bf16.msra.mxu0 0
    %858 = vmatprep.subr.bf16.mxu0 0
    %859 = vmatpush1.bf16.msra.mxu0 0
    %860 = vmatprep.subr.bf16.mxu0 0
    %861 = vmatpush1.bf16.msra.mxu0 0
    %862 = vmatprep.subr.bf16.mxu0 0
    %863 = vmatpush1.bf16.msra.mxu0 0
    %864 = vmatprep.subr.bf16.mxu0 0
    %865 = vmatpush1.bf16.msra.mxu0 0
    %866 = vmatprep.subr.bf16.mxu0 0
    %867 = vmatpush1.bf16.msra.mxu0 0
    %868 = vmatprep.subr.bf16.mxu0 0
    %869 = vmatpush1.bf16.msra.mxu0 0
    %870 = vmatprep.subr.bf16.mxu0 0
    %871 = vmatpush1.bf16.msra.mxu0 0
    %872 = vmatprep.subr.bf16.mxu0 0
    %873 = vmatpush1.bf16.msra.mxu0 0
    %874 = vmatprep.subr.bf16.mxu0 0
    %875 = vmatpush1.bf16.msra.mxu0 0
    %876 = vmatprep.mubr.bf16.mxu0 0
    %877 = vmatmul.mubr.bf16.gmra.mrb[0].mxu0 %v839
    %v878 = vpop.f32.mrb[0].mxu0
    %v879 = vadd.f32 0.0, %v878
    %v880 = vpop.f32.mrb[0].mxu0
    %v881 = vpop.f32.mrb[0].mxu0
    %v882 = vadd.f32 0.0, %v881
    %v883 = vpop.f32.mrb[0].mxu0
    %884 = vdwg.mxu0
    %v885 = vadd.f32 %v714, %v879
    %v886 = vadd.f32 %v715, %v882
    %v887 = vlaneseq
    %v888 = vshrl.u32 %v887, 7
    %v889 = vsub.s32 0, %v888
    %v890 = vrot.slane %v131, %v889
    %v891 = vadd.f32 %v885, %v890
    %v892 = vadd.f32 %v886, %v890
    %v893 = vadd.f32 %v57, %v891
    %v894 = vadd.f32 %v58, %v892
    %v895 = vsel %vm81, %v893, 0.0
    %896 = vadd.xlane.f32.xlu0 %v895
    %v897 = vpop.xlane.xlu0 %896
    %v898 = vsel %vm81, %v894, 0.0
    %899 = vadd.xlane.f32.xlu0 %v898
    %v900 = vpop.xlane.xlu0 %899
    %v901 = vrcp.pop 32.0
    %v902 = vmul.f32 %v897, %v901
    %v903 = vmul.f32 %v900, %v901
    %v904 = vsub.f32 %v893, %v902
    %v905 = vsub.f32 %v894, %v903
    %v906 = vmul.f32 %v904, %v904
    %v907 = vmul.f32 %v905, %v905
    %v908 = vsel %vm81, %v906, 0.0
    %909 = vadd.xlane.f32.xlu0 %v908
    %v910 = vpop.xlane.xlu0 %909
    %v911 = vsel %vm81, %v907, 0.0
    %912 = vadd.xlane.f32.xlu0 %v911
    %v913 = vpop.xlane.xlu0 %912
    %v914 = vmul.f32 %v910, %v901
    %v915 = vmul.f32 %v913, %v901
    %v916 = vadd.f32 %v914, 1e-05
    %v917 = vadd.f32 %v915, 1e-05
    %v918 = vrsqrt.pop %v916
    %v919 = vrsqrt.pop %v917
    %v920 = vmul.f32 %v904, %v918
    %v921 = vmul.f32 %v905, %v919
    %v922 = vlaneseq
    %v923 = vshrl.u32 %v922, 7
    %v924 = vsub.s32 0, %v923
    %v925 = vrot.slane %v133, %v924
    %v926 = vmul.f32 %v920, %v925
    %v927 = vmul.f32 %v921, %v925
    %929 = vrot.lane.b32.xlu0 %v925, 96
    %v930 = vpop.permute.xlu0 %929
    %v932 = vadd.f32 %v926, %v930
    %v933 = vadd.f32 %v927, %v930
    %v934 = vpack.c.bf16 %v933, %v932
    %v939 = vunpack.c.l.b16 %v126
    %v940 = vunpack.c.l.b16 %v127
    %v941 = vunpack.c.l.b16 %v128
    %v942 = vunpack.c.l.b16 %v129
    %v943 = vpack.c.b16 %v940, %v939
    %v944 = vpack.c.b16 %v942, %v941
    %945 = vrot.lane.b32.xlu0 %v943, 96
    %v946 = vpop.permute.xlu0 %945
    %947 = vrot.lane.b32.xlu0 %v944, 96
    %v948 = vpop.permute.xlu0 %947
    %952 = vrot.lane.b32.xlu0 %v890, 96
    %v953 = vpop.permute.xlu0 %952
    %v956 = vsel %vm81, %v934, 0
    %958 = vmatprep.subr.bf16.mxu0 0
    %959 = vmatpush1.bf16.msra.mxu0 %v946
    %960 = vmatprep.subr.bf16.mxu0 0
    %961 = vmatpush1.bf16.msra.mxu0 %v948
    %962 = vmatprep.subr.bf16.mxu0 0
    %963 = vmatpush1.bf16.msra.mxu0 0
    %964 = vmatprep.subr.bf16.mxu0 0
    %965 = vmatpush1.bf16.msra.mxu0 0
    %966 = vmatprep.subr.bf16.mxu0 0
    %967 = vmatpush1.bf16.msra.mxu0 0
    %968 = vmatprep.subr.bf16.mxu0 0
    %969 = vmatpush1.bf16.msra.mxu0 0
    %970 = vmatprep.subr.bf16.mxu0 0
    %971 = vmatpush1.bf16.msra.mxu0 0
    %972 = vmatprep.subr.bf16.mxu0 0
    %973 = vmatpush1.bf16.msra.mxu0 0
    %974 = vmatprep.subr.bf16.mxu0 0
    %975 = vmatpush1.bf16.msra.mxu0 0
    %976 = vmatprep.subr.bf16.mxu0 0
    %977 = vmatpush1.bf16.msra.mxu0 0
    %978 = vmatprep.subr.bf16.mxu0 0
    %979 = vmatpush1.bf16.msra.mxu0 0
    %980 = vmatprep.subr.bf16.mxu0 0
    %981 = vmatpush1.bf16.msra.mxu0 0
    %982 = vmatprep.subr.bf16.mxu0 0
    %983 = vmatpush1.bf16.msra.mxu0 0
    %984 = vmatprep.subr.bf16.mxu0 0
    %985 = vmatpush1.bf16.msra.mxu0 0
    %986 = vmatprep.subr.bf16.mxu0 0
    %987 = vmatpush1.bf16.msra.mxu0 0
    %988 = vmatprep.subr.bf16.mxu0 0
    %989 = vmatpush1.bf16.msra.mxu0 0
    %990 = vmatprep.mubr.bf16.mxu0 0
    %991 = vmatmul.mubr.bf16.gmra.mrb[0].mxu0 %v956
    %v992 = vpop.f32.mrb[0].mxu0
    %v993 = vadd.f32 %v953, %v992
    %v994 = vpop.f32.mrb[0].mxu0
    %v995 = vpop.f32.mrb[0].mxu0
    %v996 = vadd.f32 %v953, %v995
    %v997 = vpop.f32.mrb[0].mxu0
    %998 = vdwg.mxu0
    %v999 = vpack.c.bf16 %v996, %v993
    %v1000 = vpack.c.bf16 %v123, %v120
    %v1002 = vsel %vm208, %v999, 0
    %v1005 = vsel %vm208, %v1000, 0
    %1007 = vmatprep.subr.bf16.mxu0 0
    %1008 = vmatpush1.bf16.xpose.msra.mxu0 %v1005
    %1009 = vmatprep.subr.bf16.mxu0 0
    %1010 = vmatpush1.bf16.xpose.msra.mxu0 0
    %1011 = vmatprep.subr.bf16.mxu0 0
    %1012 = vmatpush1.bf16.xpose.msra.mxu0 0
    %1013 = vmatprep.subr.bf16.mxu0 0
    %1014 = vmatpush1.bf16.xpose.msra.mxu0 0
    %1015 = vmatprep.subr.bf16.mxu0 0
    %1016 = vmatpush1.bf16.xpose.msra.mxu0 0
    %1017 = vmatprep.subr.bf16.mxu0 0
    %1018 = vmatpush1.bf16.xpose.msra.mxu0 0
    %1019 = vmatprep.subr.bf16.mxu0 0
    %1020 = vmatpush1.bf16.xpose.msra.mxu0 0
    %1021 = vmatprep.subr.bf16.mxu0 0
    %1022 = vmatpush1.bf16.xpose.msra.mxu0 0
    %1023 = vmatprep.subr.bf16.mxu0 0
    %1024 = vmatpush1.bf16.xpose.msra.mxu0 0
    %1025 = vmatprep.subr.bf16.mxu0 0
    %1026 = vmatpush1.bf16.xpose.msra.mxu0 0
    %1027 = vmatprep.subr.bf16.mxu0 0
    %1028 = vmatpush1.bf16.xpose.msra.mxu0 0
    %1029 = vmatprep.subr.bf16.mxu0 0
    %1030 = vmatpush1.bf16.xpose.msra.mxu0 0
    %1031 = vmatprep.subr.bf16.mxu0 0
    %1032 = vmatpush1.bf16.xpose.msra.mxu0 0
    %1033 = vmatprep.subr.bf16.mxu0 0
    %1034 = vmatpush1.bf16.xpose.msra.mxu0 0
    %1035 = vmatprep.subr.bf16.mxu0 0
    %1036 = vmatpush1.bf16.xpose.msra.mxu0 0
    %1037 = vmatprep.subr.bf16.mxu0 0
    %1038 = vmatpush1.bf16.xpose.msra.mxu0 0
    %1039 = vmatprep.mubr.bf16.mxu0 0
    %1040 = vmatmul.mubr.bf16.gmra.mrb[0].mxu0 %v1002
    %v1041 = vpop.f32.mrb[0].mxu0
    %v1042 = vadd.f32 %v203, %v1041
    %v1043 = vpop.f32.mrb[0].mxu0
    %v1044 = vpop.f32.mrb[0].mxu0
    %v1045 = vadd.f32 %v205, %v1044
    %v1046 = vpop.f32.mrb[0].mxu0
    %1047 = vdwg.mxu0
    %v1048 = vsel %vm256, %v1042, -inf
    %1049 = vmax.xlane.f32.xlu0 %v1048
    %v1050 = vpop.xlane.xlu0 %1049
    %v1051 = vsel %vm256, %v1045, -inf
    %1052 = vmax.xlane.f32.xlu0 %v1051
    %v1053 = vpop.xlane.xlu0 %1052
    %v1054 = vsub.f32 %v1042, %v1050
    %v1055 = vsub.f32 %v1045, %v1053
    %v1056 = vmul.f32 %v1054, 1.442695
    %v1057 = vpow.pop %v1056
    %v1058 = vmul.f32 %v1055, 1.442695
    %v1059 = vpow.pop %v1058
    %v1060 = vsel %vm256, %v1057, 0.0
    %1061 = vadd.xlane.f32.xlu0 %v1060
    %v1062 = vpop.xlane.xlu0 %1061
    %v1063 = vsel %vm256, %v1059, 0.0
    %1064 = vadd.xlane.f32.xlu0 %v1063
    %v1065 = vpop.xlane.xlu0 %1064
    %v1066 = vpack.c.bf16 %v1059, %v1057
    %1068 = vrot.lane.b32.xlu0 %v1000, 96
    %v1069 = vpop.permute.xlu0 %1068
    %v1072 = vsel %vm256, %v1066, 0
    %1074 = vmatprep.subr.bf16.mxu0 0
    %1075 = vmatpush1.bf16.msra.mxu0 %v1069
    %1076 = vmatprep.subr.bf16.mxu0 0
    %1077 = vmatpush1.bf16.msra.mxu0 0
    %1078 = vmatprep.subr.bf16.mxu0 0
    %1079 = vmatpush1.bf16.msra.mxu0 0
    %1080 = vmatprep.subr.bf16.mxu0 0
    %1081 = vmatpush1.bf16.msra.mxu0 0
    %1082 = vmatprep.subr.bf16.mxu0 0
    %1083 = vmatpush1.bf16.msra.mxu0 0
    %1084 = vmatprep.subr.bf16.mxu0 0
    %1085 = vmatpush1.bf16.msra.mxu0 0
    %1086 = vmatprep.subr.bf16.mxu0 0
    %1087 = vmatpush1.bf16.msra.mxu0 0
    %1088 = vmatprep.subr.bf16.mxu0 0
    %1089 = vmatpush1.bf16.msra.mxu0 0
    %1090 = vmatprep.subr.bf16.mxu0 0
    %1091 = vmatpush1.bf16.msra.mxu0 0
    %1092 = vmatprep.subr.bf16.mxu0 0
    %1093 = vmatpush1.bf16.msra.mxu0 0
    %1094 = vmatprep.subr.bf16.mxu0 0
    %1095 = vmatpush1.bf16.msra.mxu0 0
    %1096 = vmatprep.subr.bf16.mxu0 0
    %1097 = vmatpush1.bf16.msra.mxu0 0
    %1098 = vmatprep.subr.bf16.mxu0 0
    %1099 = vmatpush1.bf16.msra.mxu0 0
    %1100 = vmatprep.subr.bf16.mxu0 0
    %1101 = vmatpush1.bf16.msra.mxu0 0
    %1102 = vmatprep.subr.bf16.mxu0 0
    %1103 = vmatpush1.bf16.msra.mxu0 0
    %1104 = vmatprep.subr.bf16.mxu0 0
    %1105 = vmatpush1.bf16.msra.mxu0 0
    %1106 = vmatprep.mubr.bf16.mxu0 0
    %1107 = vmatmul.mubr.bf16.gmra.mrb[0].mxu0 %v1072
    %v1108 = vpop.f32.mrb[0].mxu0
    %v1109 = vadd.f32 0.0, %v1108
    %v1110 = vpop.f32.mrb[0].mxu0
    %v1111 = vpop.f32.mrb[0].mxu0
    %v1112 = vadd.f32 0.0, %v1111
    %v1113 = vpop.f32.mrb[0].mxu0
    %1114 = vdwg.mxu0
    %v1115 = vrcp.pop %v1062
    %v1116 = vrcp.pop %v1065
    %v1117 = vmul.f32 %v1109, %v1115
    %v1118 = vmul.f32 %v1112, %v1116
    %v1119 = vpack.c.bf16 %v1118, %v1117
    %1121 = vrot.lane.b32.xlu0 %v999, 120
    %v1122 = vpop.permute.xlu0 %1121
    %1123 = vrot.lane.b32.xlu0 %v1000, 120
    %v1124 = vpop.permute.xlu0 %1123
    %v1126 = vsel %vm208, %v1122, 0
    %v1129 = vsel %vm208, %v1124, 0
    %1131 = vmatprep.subr.bf16.mxu0 0
    %1132 = vmatpush1.bf16.xpose.msra.mxu0 %v1129
    %1133 = vmatprep.subr.bf16.mxu0 0
    %1134 = vmatpush1.bf16.xpose.msra.mxu0 0
    %1135 = vmatprep.subr.bf16.mxu0 0
    %1136 = vmatpush1.bf16.xpose.msra.mxu0 0
    %1137 = vmatprep.subr.bf16.mxu0 0
    %1138 = vmatpush1.bf16.xpose.msra.mxu0 0
    %1139 = vmatprep.subr.bf16.mxu0 0
    %1140 = vmatpush1.bf16.xpose.msra.mxu0 0
    %1141 = vmatprep.subr.bf16.mxu0 0
    %1142 = vmatpush1.bf16.xpose.msra.mxu0 0
    %1143 = vmatprep.subr.bf16.mxu0 0
    %1144 = vmatpush1.bf16.xpose.msra.mxu0 0
    %1145 = vmatprep.subr.bf16.mxu0 0
    %1146 = vmatpush1.bf16.xpose.msra.mxu0 0
    %1147 = vmatprep.subr.bf16.mxu0 0
    %1148 = vmatpush1.bf16.xpose.msra.mxu0 0
    %1149 = vmatprep.subr.bf16.mxu0 0
    %1150 = vmatpush1.bf16.xpose.msra.mxu0 0
    %1151 = vmatprep.subr.bf16.mxu0 0
    %1152 = vmatpush1.bf16.xpose.msra.mxu0 0
    %1153 = vmatprep.subr.bf16.mxu0 0
    %1154 = vmatpush1.bf16.xpose.msra.mxu0 0
    %1155 = vmatprep.subr.bf16.mxu0 0
    %1156 = vmatpush1.bf16.xpose.msra.mxu0 0
    %1157 = vmatprep.subr.bf16.mxu0 0
    %1158 = vmatpush1.bf16.xpose.msra.mxu0 0
    %1159 = vmatprep.subr.bf16.mxu0 0
    %1160 = vmatpush1.bf16.xpose.msra.mxu0 0
    %1161 = vmatprep.subr.bf16.mxu0 0
    %1162 = vmatpush1.bf16.xpose.msra.mxu0 0
    %1163 = vmatprep.mubr.bf16.mxu0 0
    %1164 = vmatmul.mubr.bf16.gmra.mrb[0].mxu0 %v1126
    %v1165 = vpop.f32.mrb[0].mxu0
    %v1166 = vadd.f32 %v203, %v1165
    %v1167 = vpop.f32.mrb[0].mxu0
    %v1168 = vpop.f32.mrb[0].mxu0
    %v1169 = vadd.f32 %v205, %v1168
    %v1170 = vpop.f32.mrb[0].mxu0
    %1171 = vdwg.mxu0
    %v1172 = vsel %vm256, %v1166, -inf
    %1173 = vmax.xlane.f32.xlu0 %v1172
    %v1174 = vpop.xlane.xlu0 %1173
    %v1175 = vsel %vm256, %v1169, -inf
    %1176 = vmax.xlane.f32.xlu0 %v1175
    %v1177 = vpop.xlane.xlu0 %1176
    %v1178 = vsub.f32 %v1166, %v1174
    %v1179 = vsub.f32 %v1169, %v1177
    %v1180 = vmul.f32 %v1178, 1.442695
    %v1181 = vpow.pop %v1180
    %v1182 = vmul.f32 %v1179, 1.442695
    %v1183 = vpow.pop %v1182
    %v1184 = vsel %vm256, %v1181, 0.0
    %1185 = vadd.xlane.f32.xlu0 %v1184
    %v1186 = vpop.xlane.xlu0 %1185
    %v1187 = vsel %vm256, %v1183, 0.0
    %1188 = vadd.xlane.f32.xlu0 %v1187
    %v1189 = vpop.xlane.xlu0 %1188
    %v1190 = vpack.c.bf16 %v1183, %v1181
    %1191 = vrot.lane.b32.xlu0 %v1000, 88
    %v1192 = vpop.permute.xlu0 %1191
    %v1195 = vsel %vm256, %v1190, 0
    %1197 = vmatprep.subr.bf16.mxu0 0
    %1198 = vmatpush1.bf16.msra.mxu0 %v1192
    %1199 = vmatprep.subr.bf16.mxu0 0
    %1200 = vmatpush1.bf16.msra.mxu0 0
    %1201 = vmatprep.subr.bf16.mxu0 0
    %1202 = vmatpush1.bf16.msra.mxu0 0
    %1203 = vmatprep.subr.bf16.mxu0 0
    %1204 = vmatpush1.bf16.msra.mxu0 0
    %1205 = vmatprep.subr.bf16.mxu0 0
    %1206 = vmatpush1.bf16.msra.mxu0 0
    %1207 = vmatprep.subr.bf16.mxu0 0
    %1208 = vmatpush1.bf16.msra.mxu0 0
    %1209 = vmatprep.subr.bf16.mxu0 0
    %1210 = vmatpush1.bf16.msra.mxu0 0
    %1211 = vmatprep.subr.bf16.mxu0 0
    %1212 = vmatpush1.bf16.msra.mxu0 0
    %1213 = vmatprep.subr.bf16.mxu0 0
    %1214 = vmatpush1.bf16.msra.mxu0 0
    %1215 = vmatprep.subr.bf16.mxu0 0
    %1216 = vmatpush1.bf16.msra.mxu0 0
    %1217 = vmatprep.subr.bf16.mxu0 0
    %1218 = vmatpush1.bf16.msra.mxu0 0
    %1219 = vmatprep.subr.bf16.mxu0 0
    %1220 = vmatpush1.bf16.msra.mxu0 0
    %1221 = vmatprep.subr.bf16.mxu0 0
    %1222 = vmatpush1.bf16.msra.mxu0 0
    %1223 = vmatprep.subr.bf16.mxu0 0
    %1224 = vmatpush1.bf16.msra.mxu0 0
    %1225 = vmatprep.subr.bf16.mxu0 0
    %1226 = vmatpush1.bf16.msra.mxu0 0
    %1227 = vmatprep.subr.bf16.mxu0 0
    %1228 = vmatpush1.bf16.msra.mxu0 0
    %1229 = vmatprep.mubr.bf16.mxu0 0
    %1230 = vmatmul.mubr.bf16.gmra.mrb[0].mxu0 %v1195
    %v1231 = vpop.f32.mrb[0].mxu0
    %v1232 = vadd.f32 0.0, %v1231
    %v1233 = vpop.f32.mrb[0].mxu0
    %v1234 = vpop.f32.mrb[0].mxu0
    %v1235 = vadd.f32 0.0, %v1234
    %v1236 = vpop.f32.mrb[0].mxu0
    %1237 = vdwg.mxu0
    %v1238 = vrcp.pop %v1186
    %v1239 = vrcp.pop %v1189
    %v1240 = vmul.f32 %v1232, %v1238
    %v1241 = vmul.f32 %v1235, %v1239
    %v1242 = vpack.c.bf16 %v1241, %v1240
    %v1243 = vpack.c.b16 %v940, %v940
    %1244 = vrot.lane.b32.xlu0 %v1243, 64
    %v1245 = vpop.permute.xlu0 %1244
    %v1247 = vsel %vm208, %v1242, 0
    %v1250 = vsel %vm453, %v1245, 0
    %1252 = vmatprep.subr.bf16.mxu0 0
    %1253 = vmatpush1.bf16.msra.mxu0 %v1250
    %1254 = vmatprep.subr.bf16.mxu0 0
    %1255 = vmatpush1.bf16.msra.mxu0 0
    %1256 = vmatprep.subr.bf16.mxu0 0
    %1257 = vmatpush1.bf16.msra.mxu0 0
    %1258 = vmatprep.subr.bf16.mxu0 0
    %1259 = vmatpush1.bf16.msra.mxu0 0
    %1260 = vmatprep.subr.bf16.mxu0 0
    %1261 = vmatpush1.bf16.msra.mxu0 0
    %1262 = vmatprep.subr.bf16.mxu0 0
    %1263 = vmatpush1.bf16.msra.mxu0 0
    %1264 = vmatprep.subr.bf16.mxu0 0
    %1265 = vmatpush1.bf16.msra.mxu0 0
    %1266 = vmatprep.subr.bf16.mxu0 0
    %1267 = vmatpush1.bf16.msra.mxu0 0
    %1268 = vmatprep.subr.bf16.mxu0 0
    %1269 = vmatpush1.bf16.msra.mxu0 0
    %1270 = vmatprep.subr.bf16.mxu0 0
    %1271 = vmatpush1.bf16.msra.mxu0 0
    %1272 = vmatprep.subr.bf16.mxu0 0
    %1273 = vmatpush1.bf16.msra.mxu0 0
    %1274 = vmatprep.subr.bf16.mxu0 0
    %1275 = vmatpush1.bf16.msra.mxu0 0
    %1276 = vmatprep.subr.bf16.mxu0 0
    %1277 = vmatpush1.bf16.msra.mxu0 0
    %1278 = vmatprep.subr.bf16.mxu0 0
    %1279 = vmatpush1.bf16.msra.mxu0 0
    %1280 = vmatprep.subr.bf16.mxu0 0
    %1281 = vmatpush1.bf16.msra.mxu0 0
    %1282 = vmatprep.subr.bf16.mxu0 0
    %1283 = vmatpush1.bf16.msra.mxu0 0
    %1284 = vmatprep.mubr.bf16.mxu0 0
    %1285 = vmatmul.mubr.bf16.gmra.mrb[0].mxu0 %v1247
    %v1286 = vpop.f32.mrb[0].mxu0
    %v1287 = vadd.f32 0.0, %v1286
    %v1288 = vpop.f32.mrb[0].mxu0
    %v1289 = vpop.f32.mrb[0].mxu0
    %v1290 = vadd.f32 0.0, %v1289
    %v1291 = vpop.f32.mrb[0].mxu0
    %1292 = vdwg.mxu0
    %v1293 = vpack.c.b16 %v939, %v939
    %1294 = vrot.lane.b32.xlu0 %v1293, 64
    %v1295 = vpop.permute.xlu0 %1294
    %v1297 = vsel %vm208, %v1119, 0
    %v1300 = vsel %vm453, %v1295, 0
    %1302 = vmatprep.subr.bf16.mxu0 0
    %1303 = vmatpush1.bf16.msra.mxu0 %v1300
    %1304 = vmatprep.subr.bf16.mxu0 0
    %1305 = vmatpush1.bf16.msra.mxu0 0
    %1306 = vmatprep.subr.bf16.mxu0 0
    %1307 = vmatpush1.bf16.msra.mxu0 0
    %1308 = vmatprep.subr.bf16.mxu0 0
    %1309 = vmatpush1.bf16.msra.mxu0 0
    %1310 = vmatprep.subr.bf16.mxu0 0
    %1311 = vmatpush1.bf16.msra.mxu0 0
    %1312 = vmatprep.subr.bf16.mxu0 0
    %1313 = vmatpush1.bf16.msra.mxu0 0
    %1314 = vmatprep.subr.bf16.mxu0 0
    %1315 = vmatpush1.bf16.msra.mxu0 0
    %1316 = vmatprep.subr.bf16.mxu0 0
    %1317 = vmatpush1.bf16.msra.mxu0 0
    %1318 = vmatprep.subr.bf16.mxu0 0
    %1319 = vmatpush1.bf16.msra.mxu0 0
    %1320 = vmatprep.subr.bf16.mxu0 0
    %1321 = vmatpush1.bf16.msra.mxu0 0
    %1322 = vmatprep.subr.bf16.mxu0 0
    %1323 = vmatpush1.bf16.msra.mxu0 0
    %1324 = vmatprep.subr.bf16.mxu0 0
    %1325 = vmatpush1.bf16.msra.mxu0 0
    %1326 = vmatprep.subr.bf16.mxu0 0
    %1327 = vmatpush1.bf16.msra.mxu0 0
    %1328 = vmatprep.subr.bf16.mxu0 0
    %1329 = vmatpush1.bf16.msra.mxu0 0
    %1330 = vmatprep.subr.bf16.mxu0 0
    %1331 = vmatpush1.bf16.msra.mxu0 0
    %1332 = vmatprep.subr.bf16.mxu0 0
    %1333 = vmatpush1.bf16.msra.mxu0 0
    %1334 = vmatprep.mubr.bf16.mxu0 0
    %1335 = vmatmul.mubr.bf16.gmra.mrb[0].mxu0 %v1297
    %v1336 = vpop.f32.mrb[0].mxu0
    %v1337 = vadd.f32 %v1287, %v1336
    %v1338 = vpop.f32.mrb[0].mxu0
    %v1339 = vpop.f32.mrb[0].mxu0
    %v1340 = vadd.f32 %v1290, %v1339
    %v1341 = vpop.f32.mrb[0].mxu0
    %1342 = vdwg.mxu0
    %1343 = vrot.lane.b32.xlu0 %v999, 112
    %v1344 = vpop.permute.xlu0 %1343
    %1345 = vrot.lane.b32.xlu0 %v1000, 112
    %v1346 = vpop.permute.xlu0 %1345
    %v1348 = vsel %vm208, %v1344, 0
    %v1351 = vsel %vm208, %v1346, 0
    %1353 = vmatprep.subr.bf16.mxu0 0
    %1354 = vmatpush1.bf16.xpose.msra.mxu0 %v1351
    %1355 = vmatprep.subr.bf16.mxu0 0
    %1356 = vmatpush1.bf16.xpose.msra.mxu0 0
    %1357 = vmatprep.subr.bf16.mxu0 0
    %1358 = vmatpush1.bf16.xpose.msra.mxu0 0
    %1359 = vmatprep.subr.bf16.mxu0 0
    %1360 = vmatpush1.bf16.xpose.msra.mxu0 0
    %1361 = vmatprep.subr.bf16.mxu0 0
    %1362 = vmatpush1.bf16.xpose.msra.mxu0 0
    %1363 = vmatprep.subr.bf16.mxu0 0
    %1364 = vmatpush1.bf16.xpose.msra.mxu0 0
    %1365 = vmatprep.subr.bf16.mxu0 0
    %1366 = vmatpush1.bf16.xpose.msra.mxu0 0
    %1367 = vmatprep.subr.bf16.mxu0 0
    %1368 = vmatpush1.bf16.xpose.msra.mxu0 0
    %1369 = vmatprep.subr.bf16.mxu0 0
    %1370 = vmatpush1.bf16.xpose.msra.mxu0 0
    %1371 = vmatprep.subr.bf16.mxu0 0
    %1372 = vmatpush1.bf16.xpose.msra.mxu0 0
    %1373 = vmatprep.subr.bf16.mxu0 0
    %1374 = vmatpush1.bf16.xpose.msra.mxu0 0
    %1375 = vmatprep.subr.bf16.mxu0 0
    %1376 = vmatpush1.bf16.xpose.msra.mxu0 0
    %1377 = vmatprep.subr.bf16.mxu0 0
    %1378 = vmatpush1.bf16.xpose.msra.mxu0 0
    %1379 = vmatprep.subr.bf16.mxu0 0
    %1380 = vmatpush1.bf16.xpose.msra.mxu0 0
    %1381 = vmatprep.subr.bf16.mxu0 0
    %1382 = vmatpush1.bf16.xpose.msra.mxu0 0
    %1383 = vmatprep.subr.bf16.mxu0 0
    %1384 = vmatpush1.bf16.xpose.msra.mxu0 0
    %1385 = vmatprep.mubr.bf16.mxu0 0
    %1386 = vmatmul.mubr.bf16.gmra.mrb[0].mxu0 %v1348
    %v1387 = vpop.f32.mrb[0].mxu0
    %v1388 = vadd.f32 %v203, %v1387
    %v1389 = vpop.f32.mrb[0].mxu0
    %v1390 = vpop.f32.mrb[0].mxu0
    %v1391 = vadd.f32 %v205, %v1390
    %v1392 = vpop.f32.mrb[0].mxu0
    %1393 = vdwg.mxu0
    %v1394 = vsel %vm256, %v1388, -inf
    %1395 = vmax.xlane.f32.xlu0 %v1394
    %v1396 = vpop.xlane.xlu0 %1395
    %v1397 = vsel %vm256, %v1391, -inf
    %1398 = vmax.xlane.f32.xlu0 %v1397
    %v1399 = vpop.xlane.xlu0 %1398
    %v1400 = vsub.f32 %v1388, %v1396
    %v1401 = vsub.f32 %v1391, %v1399
    %v1402 = vmul.f32 %v1400, 1.442695
    %v1403 = vpow.pop %v1402
    %v1404 = vmul.f32 %v1401, 1.442695
    %v1405 = vpow.pop %v1404
    %v1406 = vsel %vm256, %v1403, 0.0
    %1407 = vadd.xlane.f32.xlu0 %v1406
    %v1408 = vpop.xlane.xlu0 %1407
    %v1409 = vsel %vm256, %v1405, 0.0
    %1410 = vadd.xlane.f32.xlu0 %v1409
    %v1411 = vpop.xlane.xlu0 %1410
    %v1412 = vpack.c.bf16 %v1405, %v1403
    %1413 = vrot.lane.b32.xlu0 %v1000, 80
    %v1414 = vpop.permute.xlu0 %1413
    %v1417 = vsel %vm256, %v1412, 0
    %1419 = vmatprep.subr.bf16.mxu0 0
    %1420 = vmatpush1.bf16.msra.mxu0 %v1414
    %1421 = vmatprep.subr.bf16.mxu0 0
    %1422 = vmatpush1.bf16.msra.mxu0 0
    %1423 = vmatprep.subr.bf16.mxu0 0
    %1424 = vmatpush1.bf16.msra.mxu0 0
    %1425 = vmatprep.subr.bf16.mxu0 0
    %1426 = vmatpush1.bf16.msra.mxu0 0
    %1427 = vmatprep.subr.bf16.mxu0 0
    %1428 = vmatpush1.bf16.msra.mxu0 0
    %1429 = vmatprep.subr.bf16.mxu0 0
    %1430 = vmatpush1.bf16.msra.mxu0 0
    %1431 = vmatprep.subr.bf16.mxu0 0
    %1432 = vmatpush1.bf16.msra.mxu0 0
    %1433 = vmatprep.subr.bf16.mxu0 0
    %1434 = vmatpush1.bf16.msra.mxu0 0
    %1435 = vmatprep.subr.bf16.mxu0 0
    %1436 = vmatpush1.bf16.msra.mxu0 0
    %1437 = vmatprep.subr.bf16.mxu0 0
    %1438 = vmatpush1.bf16.msra.mxu0 0
    %1439 = vmatprep.subr.bf16.mxu0 0
    %1440 = vmatpush1.bf16.msra.mxu0 0
    %1441 = vmatprep.subr.bf16.mxu0 0
    %1442 = vmatpush1.bf16.msra.mxu0 0
    %1443 = vmatprep.subr.bf16.mxu0 0
    %1444 = vmatpush1.bf16.msra.mxu0 0
    %1445 = vmatprep.subr.bf16.mxu0 0
    %1446 = vmatpush1.bf16.msra.mxu0 0
    %1447 = vmatprep.subr.bf16.mxu0 0
    %1448 = vmatpush1.bf16.msra.mxu0 0
    %1449 = vmatprep.subr.bf16.mxu0 0
    %1450 = vmatpush1.bf16.msra.mxu0 0
    %1451 = vmatprep.mubr.bf16.mxu0 0
    %1452 = vmatmul.mubr.bf16.gmra.mrb[0].mxu0 %v1417
    %v1453 = vpop.f32.mrb[0].mxu0
    %v1454 = vadd.f32 0.0, %v1453
    %v1455 = vpop.f32.mrb[0].mxu0
    %v1456 = vpop.f32.mrb[0].mxu0
    %v1457 = vadd.f32 0.0, %v1456
    %v1458 = vpop.f32.mrb[0].mxu0
    %1459 = vdwg.mxu0
    %v1460 = vrcp.pop %v1408
    %v1461 = vrcp.pop %v1411
    %v1462 = vmul.f32 %v1454, %v1460
    %v1463 = vmul.f32 %v1457, %v1461
    %v1464 = vpack.c.bf16 %v1463, %v1462
    %v1465 = vpack.c.b16 %v941, %v941
    %1466 = vrot.lane.b32.xlu0 %v1465, 64
    %v1467 = vpop.permute.xlu0 %1466
    %v1469 = vsel %vm208, %v1464, 0
    %v1472 = vsel %vm453, %v1467, 0
    %1474 = vmatprep.subr.bf16.mxu0 0
    %1475 = vmatpush1.bf16.msra.mxu0 %v1472
    %1476 = vmatprep.subr.bf16.mxu0 0
    %1477 = vmatpush1.bf16.msra.mxu0 0
    %1478 = vmatprep.subr.bf16.mxu0 0
    %1479 = vmatpush1.bf16.msra.mxu0 0
    %1480 = vmatprep.subr.bf16.mxu0 0
    %1481 = vmatpush1.bf16.msra.mxu0 0
    %1482 = vmatprep.subr.bf16.mxu0 0
    %1483 = vmatpush1.bf16.msra.mxu0 0
    %1484 = vmatprep.subr.bf16.mxu0 0
    %1485 = vmatpush1.bf16.msra.mxu0 0
    %1486 = vmatprep.subr.bf16.mxu0 0
    %1487 = vmatpush1.bf16.msra.mxu0 0
    %1488 = vmatprep.subr.bf16.mxu0 0
    %1489 = vmatpush1.bf16.msra.mxu0 0
    %1490 = vmatprep.subr.bf16.mxu0 0
    %1491 = vmatpush1.bf16.msra.mxu0 0
    %1492 = vmatprep.subr.bf16.mxu0 0
    %1493 = vmatpush1.bf16.msra.mxu0 0
    %1494 = vmatprep.subr.bf16.mxu0 0
    %1495 = vmatpush1.bf16.msra.mxu0 0
    %1496 = vmatprep.subr.bf16.mxu0 0
    %1497 = vmatpush1.bf16.msra.mxu0 0
    %1498 = vmatprep.subr.bf16.mxu0 0
    %1499 = vmatpush1.bf16.msra.mxu0 0
    %1500 = vmatprep.subr.bf16.mxu0 0
    %1501 = vmatpush1.bf16.msra.mxu0 0
    %1502 = vmatprep.subr.bf16.mxu0 0
    %1503 = vmatpush1.bf16.msra.mxu0 0
    %1504 = vmatprep.subr.bf16.mxu0 0
    %1505 = vmatpush1.bf16.msra.mxu0 0
    %1506 = vmatprep.mubr.bf16.mxu0 0
    %1507 = vmatmul.mubr.bf16.gmra.mrb[0].mxu0 %v1469
    %v1508 = vpop.f32.mrb[0].mxu0
    %v1509 = vadd.f32 0.0, %v1508
    %v1510 = vpop.f32.mrb[0].mxu0
    %v1511 = vpop.f32.mrb[0].mxu0
    %v1512 = vadd.f32 0.0, %v1511
    %v1513 = vpop.f32.mrb[0].mxu0
    %1514 = vdwg.mxu0
    %v1515 = vadd.f32 %v1337, %v1509
    %v1516 = vadd.f32 %v1340, %v1512
    %1517 = vrot.lane.b32.xlu0 %v999, 104
    %v1518 = vpop.permute.xlu0 %1517
    %1519 = vrot.lane.b32.xlu0 %v1000, 104
    %v1520 = vpop.permute.xlu0 %1519
    %v1522 = vsel %vm208, %v1518, 0
    %v1525 = vsel %vm208, %v1520, 0
    %1527 = vmatprep.subr.bf16.mxu0 0
    %1528 = vmatpush1.bf16.xpose.msra.mxu0 %v1525
    %1529 = vmatprep.subr.bf16.mxu0 0
    %1530 = vmatpush1.bf16.xpose.msra.mxu0 0
    %1531 = vmatprep.subr.bf16.mxu0 0
    %1532 = vmatpush1.bf16.xpose.msra.mxu0 0
    %1533 = vmatprep.subr.bf16.mxu0 0
    %1534 = vmatpush1.bf16.xpose.msra.mxu0 0
    %1535 = vmatprep.subr.bf16.mxu0 0
    %1536 = vmatpush1.bf16.xpose.msra.mxu0 0
    %1537 = vmatprep.subr.bf16.mxu0 0
    %1538 = vmatpush1.bf16.xpose.msra.mxu0 0
    %1539 = vmatprep.subr.bf16.mxu0 0
    %1540 = vmatpush1.bf16.xpose.msra.mxu0 0
    %1541 = vmatprep.subr.bf16.mxu0 0
    %1542 = vmatpush1.bf16.xpose.msra.mxu0 0
    %1543 = vmatprep.subr.bf16.mxu0 0
    %1544 = vmatpush1.bf16.xpose.msra.mxu0 0
    %1545 = vmatprep.subr.bf16.mxu0 0
    %1546 = vmatpush1.bf16.xpose.msra.mxu0 0
    %1547 = vmatprep.subr.bf16.mxu0 0
    %1548 = vmatpush1.bf16.xpose.msra.mxu0 0
    %1549 = vmatprep.subr.bf16.mxu0 0
    %1550 = vmatpush1.bf16.xpose.msra.mxu0 0
    %1551 = vmatprep.subr.bf16.mxu0 0
    %1552 = vmatpush1.bf16.xpose.msra.mxu0 0
    %1553 = vmatprep.subr.bf16.mxu0 0
    %1554 = vmatpush1.bf16.xpose.msra.mxu0 0
    %1555 = vmatprep.subr.bf16.mxu0 0
    %1556 = vmatpush1.bf16.xpose.msra.mxu0 0
    %1557 = vmatprep.subr.bf16.mxu0 0
    %1558 = vmatpush1.bf16.xpose.msra.mxu0 0
    %1559 = vmatprep.mubr.bf16.mxu0 0
    %1560 = vmatmul.mubr.bf16.gmra.mrb[0].mxu0 %v1522
    %v1561 = vpop.f32.mrb[0].mxu0
    %v1562 = vadd.f32 %v203, %v1561
    %v1563 = vpop.f32.mrb[0].mxu0
    %v1564 = vpop.f32.mrb[0].mxu0
    %v1565 = vadd.f32 %v205, %v1564
    %v1566 = vpop.f32.mrb[0].mxu0
    %1567 = vdwg.mxu0
    %v1568 = vsel %vm256, %v1562, -inf
    %1569 = vmax.xlane.f32.xlu0 %v1568
    %v1570 = vpop.xlane.xlu0 %1569
    %v1571 = vsel %vm256, %v1565, -inf
    %1572 = vmax.xlane.f32.xlu0 %v1571
    %v1573 = vpop.xlane.xlu0 %1572
    %v1574 = vsub.f32 %v1562, %v1570
    %v1575 = vsub.f32 %v1565, %v1573
    %v1576 = vmul.f32 %v1574, 1.442695
    %v1577 = vpow.pop %v1576
    %v1578 = vmul.f32 %v1575, 1.442695
    %v1579 = vpow.pop %v1578
    %v1580 = vsel %vm256, %v1577, 0.0
    %1581 = vadd.xlane.f32.xlu0 %v1580
    %v1582 = vpop.xlane.xlu0 %1581
    %v1583 = vsel %vm256, %v1579, 0.0
    %1584 = vadd.xlane.f32.xlu0 %v1583
    %v1585 = vpop.xlane.xlu0 %1584
    %v1586 = vpack.c.bf16 %v1579, %v1577
    %1587 = vrot.lane.b32.xlu0 %v1000, 72
    %v1588 = vpop.permute.xlu0 %1587
    %v1591 = vsel %vm256, %v1586, 0
    %1593 = vmatprep.subr.bf16.mxu0 0
    %1594 = vmatpush1.bf16.msra.mxu0 %v1588
    %1595 = vmatprep.subr.bf16.mxu0 0
    %1596 = vmatpush1.bf16.msra.mxu0 0
    %1597 = vmatprep.subr.bf16.mxu0 0
    %1598 = vmatpush1.bf16.msra.mxu0 0
    %1599 = vmatprep.subr.bf16.mxu0 0
    %1600 = vmatpush1.bf16.msra.mxu0 0
    %1601 = vmatprep.subr.bf16.mxu0 0
    %1602 = vmatpush1.bf16.msra.mxu0 0
    %1603 = vmatprep.subr.bf16.mxu0 0
    %1604 = vmatpush1.bf16.msra.mxu0 0
    %1605 = vmatprep.subr.bf16.mxu0 0
    %1606 = vmatpush1.bf16.msra.mxu0 0
    %1607 = vmatprep.subr.bf16.mxu0 0
    %1608 = vmatpush1.bf16.msra.mxu0 0
    %1609 = vmatprep.subr.bf16.mxu0 0
    %1610 = vmatpush1.bf16.msra.mxu0 0
    %1611 = vmatprep.subr.bf16.mxu0 0
    %1612 = vmatpush1.bf16.msra.mxu0 0
    %1613 = vmatprep.subr.bf16.mxu0 0
    %1614 = vmatpush1.bf16.msra.mxu0 0
    %1615 = vmatprep.subr.bf16.mxu0 0
    %1616 = vmatpush1.bf16.msra.mxu0 0
    %1617 = vmatprep.subr.bf16.mxu0 0
    %1618 = vmatpush1.bf16.msra.mxu0 0
    %1619 = vmatprep.subr.bf16.mxu0 0
    %1620 = vmatpush1.bf16.msra.mxu0 0
    %1621 = vmatprep.subr.bf16.mxu0 0
    %1622 = vmatpush1.bf16.msra.mxu0 0
    %1623 = vmatprep.subr.bf16.mxu0 0
    %1624 = vmatpush1.bf16.msra.mxu0 0
    %1625 = vmatprep.mubr.bf16.mxu0 0
    %1626 = vmatmul.mubr.bf16.gmra.mrb[0].mxu0 %v1591
    %v1627 = vpop.f32.mrb[0].mxu0
    %v1628 = vadd.f32 0.0, %v1627
    %v1629 = vpop.f32.mrb[0].mxu0
    %v1630 = vpop.f32.mrb[0].mxu0
    %v1631 = vadd.f32 0.0, %v1630
    %v1632 = vpop.f32.mrb[0].mxu0
    %1633 = vdwg.mxu0
    %v1634 = vrcp.pop %v1582
    %v1635 = vrcp.pop %v1585
    %v1636 = vmul.f32 %v1628, %v1634
    %v1637 = vmul.f32 %v1631, %v1635
    %v1638 = vpack.c.bf16 %v1637, %v1636
    %v1639 = vpack.c.b16 %v942, %v942
    %1640 = vrot.lane.b32.xlu0 %v1639, 64
    %v1641 = vpop.permute.xlu0 %1640
    %v1643 = vsel %vm208, %v1638, 0
    %v1646 = vsel %vm453, %v1641, 0
    %1648 = vmatprep.subr.bf16.mxu0 0
    %1649 = vmatpush1.bf16.msra.mxu0 %v1646
    %1650 = vmatprep.subr.bf16.mxu0 0
    %1651 = vmatpush1.bf16.msra.mxu0 0
    %1652 = vmatprep.subr.bf16.mxu0 0
    %1653 = vmatpush1.bf16.msra.mxu0 0
    %1654 = vmatprep.subr.bf16.mxu0 0
    %1655 = vmatpush1.bf16.msra.mxu0 0
    %1656 = vmatprep.subr.bf16.mxu0 0
    %1657 = vmatpush1.bf16.msra.mxu0 0
    %1658 = vmatprep.subr.bf16.mxu0 0
    %1659 = vmatpush1.bf16.msra.mxu0 0
    %1660 = vmatprep.subr.bf16.mxu0 0
    %1661 = vmatpush1.bf16.msra.mxu0 0
    %1662 = vmatprep.subr.bf16.mxu0 0
    %1663 = vmatpush1.bf16.msra.mxu0 0
    %1664 = vmatprep.subr.bf16.mxu0 0
    %1665 = vmatpush1.bf16.msra.mxu0 0
    %1666 = vmatprep.subr.bf16.mxu0 0
    %1667 = vmatpush1.bf16.msra.mxu0 0
    %1668 = vmatprep.subr.bf16.mxu0 0
    %1669 = vmatpush1.bf16.msra.mxu0 0
    %1670 = vmatprep.subr.bf16.mxu0 0
    %1671 = vmatpush1.bf16.msra.mxu0 0
    %1672 = vmatprep.subr.bf16.mxu0 0
    %1673 = vmatpush1.bf16.msra.mxu0 0
    %1674 = vmatprep.subr.bf16.mxu0 0
    %1675 = vmatpush1.bf16.msra.mxu0 0
    %1676 = vmatprep.subr.bf16.mxu0 0
    %1677 = vmatpush1.bf16.msra.mxu0 0
    %1678 = vmatprep.subr.bf16.mxu0 0
    %1679 = vmatpush1.bf16.msra.mxu0 0
    %1680 = vmatprep.mubr.bf16.mxu0 0
    %1681 = vmatmul.mubr.bf16.gmra.mrb[0].mxu0 %v1643
    %v1682 = vpop.f32.mrb[0].mxu0
    %v1683 = vadd.f32 0.0, %v1682
    %v1684 = vpop.f32.mrb[0].mxu0
    %v1685 = vpop.f32.mrb[0].mxu0
    %v1686 = vadd.f32 0.0, %v1685
    %v1687 = vpop.f32.mrb[0].mxu0
    %1688 = vdwg.mxu0
    %v1689 = vadd.f32 %v1515, %v1683
    %v1690 = vadd.f32 %v1516, %v1686
    %1691 = vrot.lane.b32.xlu0 %v890, 64
    %v1692 = vpop.permute.xlu0 %1691
    %v1694 = vadd.f32 %v1689, %v1692
    %v1695 = vadd.f32 %v1690, %v1692
    %v1696 = vadd.f32 %v932, %v1694
    %v1697 = vadd.f32 %v933, %v1695
    %v1698 = vsel %vm81, %v1696, 0.0
    %1699 = vadd.xlane.f32.xlu0 %v1698
    %v1700 = vpop.xlane.xlu0 %1699
    %v1701 = vsel %vm81, %v1697, 0.0
    %1702 = vadd.xlane.f32.xlu0 %v1701
    %v1703 = vpop.xlane.xlu0 %1702
    %v1704 = vmul.f32 %v1700, %v901
    %v1705 = vmul.f32 %v1703, %v901
    %v1706 = vsub.f32 %v1696, %v1704
    %v1707 = vsub.f32 %v1697, %v1705
    %v1708 = vmul.f32 %v1706, %v1706
    %v1709 = vmul.f32 %v1707, %v1707
    %v1710 = vsel %vm81, %v1708, 0.0
    %1711 = vadd.xlane.f32.xlu0 %v1710
    %v1712 = vpop.xlane.xlu0 %1711
    %v1713 = vsel %vm81, %v1709, 0.0
    %1714 = vadd.xlane.f32.xlu0 %v1713
    %v1715 = vpop.xlane.xlu0 %1714
    %v1716 = vmul.f32 %v1712, %v901
    %v1717 = vmul.f32 %v1715, %v901
    %v1718 = vadd.f32 %v1716, 1e-05
    %v1719 = vadd.f32 %v1717, 1e-05
    %v1720 = vrsqrt.pop %v1718
    %v1721 = vrsqrt.pop %v1719
    %v1722 = vmul.f32 %v1706, %v1720
    %v1723 = vmul.f32 %v1707, %v1721
    %1724 = vrot.lane.b32.xlu0 %v925, 64
    %v1725 = vpop.permute.xlu0 %1724
    %v1727 = vmul.f32 %v1722, %v1725
    %v1728 = vmul.f32 %v1723, %v1725
    %1729 = vrot.lane.b32.xlu0 %v925, 32
    %v1730 = vpop.permute.xlu0 %1729
    %v1732 = vadd.f32 %v1727, %v1730
    %v1733 = vadd.f32 %v1728, %v1730
    %v1734 = vpack.c.bf16 %v1733, %v1732
    %v1735 = vld [vmem:[#allocation5 + $0x40] sm:$0xf]
    %v1736 = vld [vmem:[#allocation5 + $0x44] sm:$0xf]
    %v1737 = vld [vmem:[#allocation5 + $0x48] sm:$0xf]
    %v1738 = vld [vmem:[#allocation5 + $0x4c] sm:$0xf]
    %v1739 = vlaneseq
    %v1740 = vshrl.u32 %v1739, 7
    %v1741 = vsub.s32 0, %v1740
    %v1742 = vrot.slane %v132, %v1741
    %v1747 = vunpack.c.l.b16 %v1735
    %v1748 = vunpack.c.l.b16 %v1736
    %v1749 = vunpack.c.l.b16 %v1737
    %v1750 = vunpack.c.l.b16 %v1738
    %v1751 = vpack.c.b16 %v1748, %v1747
    %v1752 = vpack.c.b16 %v1750, %v1749
    %v1756 = vsel %vm81, %v1734, 0
    %1758 = vmatprep.subr.bf16.mxu0 0
    %1759 = vmatpush1.bf16.msra.mxu0 %v1751
    %1760 = vmatprep.subr.bf16.mxu0 0
    %1761 = vmatpush1.bf16.msra.mxu0 %v1752
    %1762 = vmatprep.subr.bf16.mxu0 0
    %1763 = vmatpush1.bf16.msra.mxu0 0
    %1764 = vmatprep.subr.bf16.mxu0 0
    %1765 = vmatpush1.bf16.msra.mxu0 0
    %1766 = vmatprep.subr.bf16.mxu0 0
    %1767 = vmatpush1.bf16.msra.mxu0 0
    %1768 = vmatprep.subr.bf16.mxu0 0
    %1769 = vmatpush1.bf16.msra.mxu0 0
    %1770 = vmatprep.subr.bf16.mxu0 0
    %1771 = vmatpush1.bf16.msra.mxu0 0
    %1772 = vmatprep.subr.bf16.mxu0 0
    %1773 = vmatpush1.bf16.msra.mxu0 0
    %1774 = vmatprep.subr.bf16.mxu0 0
    %1775 = vmatpush1.bf16.msra.mxu0 0
    %1776 = vmatprep.subr.bf16.mxu0 0
    %1777 = vmatpush1.bf16.msra.mxu0 0
    %1778 = vmatprep.subr.bf16.mxu0 0
    %1779 = vmatpush1.bf16.msra.mxu0 0
    %1780 = vmatprep.subr.bf16.mxu0 0
    %1781 = vmatpush1.bf16.msra.mxu0 0
    %1782 = vmatprep.subr.bf16.mxu0 0
    %1783 = vmatpush1.bf16.msra.mxu0 0
    %1784 = vmatprep.subr.bf16.mxu0 0
    %1785 = vmatpush1.bf16.msra.mxu0 0
    %1786 = vmatprep.subr.bf16.mxu0 0
    %1787 = vmatpush1.bf16.msra.mxu0 0
    %1788 = vmatprep.subr.bf16.mxu0 0
    %1789 = vmatpush1.bf16.msra.mxu0 0
    %1790 = vmatprep.mubr.bf16.mxu0 0
    %1791 = vmatmul.mubr.bf16.gmra.mrb[0].mxu0 %v1756
    %v1792 = vpop.f32.mrb[0].mxu0
    %v1793 = vadd.f32 %v1742, %v1792
    %v1794 = vpop.f32.mrb[0].mxu0
    %v1795 = vpop.f32.mrb[0].mxu0
    %v1796 = vadd.f32 %v1742, %v1795
    %v1797 = vpop.f32.mrb[0].mxu0
    %1798 = vdwg.mxu0
    %v1799 = vmax.f32 %v1793, 0.0
    %v1800 = vmax.f32 %v1796, 0.0
    %v1801 = vpack.c.bf16 %v1800, %v1799
    %v1802 = vld [vmem:[#allocation5 + $0x50] sm:$0xf]
    %v1803 = vld [vmem:[#allocation5 + $0x54] sm:$0xf]
    %v1804 = vld [vmem:[#allocation5 + $0x58] sm:$0xf]
    %v1805 = vld [vmem:[#allocation5 + $0x5c] sm:$0xf]
    %v1806 = vlaneseq
    %v1807 = vshrl.u32 %v1806, 7
    %v1808 = vsub.s32 0, %v1807
    %v1809 = vrot.slane %v134, %v1808
    %v1814 = vunpack.c.l.b16 %v1802
    %v1815 = vunpack.c.l.b16 %v1803
    %v1816 = vunpack.c.l.b16 %v1804
    %v1817 = vunpack.c.l.b16 %v1805
    %v1818 = vpack.c.b16 %v1815, %v1814
    %v1819 = vpack.c.b16 %v1817, %v1816
    %1823 = vrot.lane.b32.xlu0 %v1809, 64
    %v1824 = vpop.permute.xlu0 %1823
    %1826 = vmatprep.subr.bf16.mxu0 0
    %1827 = vmatpush1.bf16.xpose.msra.mxu0 %v1818
    %1828 = vmatprep.subr.bf16.mxu0 0
    %1829 = vmatpush1.bf16.xpose.msra.mxu0 %v1819
    %1830 = vmatprep.subr.bf16.mxu0 0
    %1831 = vmatpush1.bf16.xpose.msra.mxu0 0
    %1832 = vmatprep.subr.bf16.mxu0 0
    %1833 = vmatpush1.bf16.xpose.msra.mxu0 0
    %1834 = vmatprep.subr.bf16.mxu0 0
    %1835 = vmatpush1.bf16.xpose.msra.mxu0 0
    %1836 = vmatprep.subr.bf16.mxu0 0
    %1837 = vmatpush1.bf16.xpose.msra.mxu0 0
    %1838 = vmatprep.subr.bf16.mxu0 0
    %1839 = vmatpush1.bf16.xpose.msra.mxu0 0
    %1840 = vmatprep.subr.bf16.mxu0 0
    %1841 = vmatpush1.bf16.xpose.msra.mxu0 0
    %1842 = vmatprep.subr.bf16.mxu0 0
    %1843 = vmatpush1.bf16.xpose.msra.mxu0 0
    %1844 = vmatprep.subr.bf16.mxu0 0
    %1845 = vmatpush1.bf16.xpose.msra.mxu0 0
    %1846 = vmatprep.subr.bf16.mxu0 0
    %1847 = vmatpush1.bf16.xpose.msra.mxu0 0
    %1848 = vmatprep.subr.bf16.mxu0 0
    %1849 = vmatpush1.bf16.xpose.msra.mxu0 0
    %1850 = vmatprep.subr.bf16.mxu0 0
    %1851 = vmatpush1.bf16.xpose.msra.mxu0 0
    %1852 = vmatprep.subr.bf16.mxu0 0
    %1853 = vmatpush1.bf16.xpose.msra.mxu0 0
    %1854 = vmatprep.subr.bf16.mxu0 0
    %1855 = vmatpush1.bf16.xpose.msra.mxu0 0
    %1856 = vmatprep.subr.bf16.mxu0 0
    %1857 = vmatpush1.bf16.xpose.msra.mxu0 0
    %1858 = vmatprep.mubr.bf16.mxu0 0
    %1859 = vmatmul.mubr.bf16.gmra.mrb[0].mxu0 %v1801
    %v1860 = vpop.f32.mrb[0].mxu0
    %v1861 = vadd.f32 %v1824, %v1860
    %v1862 = vpop.f32.mrb[0].mxu0
    %v1863 = vpop.f32.mrb[0].mxu0
    %v1864 = vadd.f32 %v1824, %v1863
    %v1865 = vpop.f32.mrb[0].mxu0
    %1866 = vdwg.mxu0
    %v1867 = vadd.f32 %v1732, %v1861
    %v1868 = vadd.f32 %v1733, %v1864
    %v1869 = vsel %vm81, %v1867, 0.0
    %1870 = vadd.xlane.f32.xlu0 %v1869
    %v1871 = vpop.xlane.xlu0 %1870
    %v1872 = vsel %vm81, %v1868, 0.0
    %1873 = vadd.xlane.f32.xlu0 %v1872
    %v1874 = vpop.xlane.xlu0 %1873
    %v1875 = vmul.f32 %v1871, %v901
    %v1876 = vmul.f32 %v1874, %v901
    %v1877 = vsub.f32 %v1867, %v1875
    %v1878 = vsub.f32 %v1868, %v1876
    %v1879 = vmul.f32 %v1877, %v1877
    %v1880 = vmul.f32 %v1878, %v1878
    %v1881 = vsel %vm81, %v1879, 0.0
    %1882 = vadd.xlane.f32.xlu0 %v1881
    %v1883 = vpop.xlane.xlu0 %1882
    %v1884 = vsel %vm81, %v1880, 0.0
    %1885 = vadd.xlane.f32.xlu0 %v1884
    %v1886 = vpop.xlane.xlu0 %1885
    %v1887 = vmul.f32 %v1883, %v901
    %v1888 = vmul.f32 %v1886, %v901
    %v1889 = vadd.f32 %v1887, 1e-05
    %v1890 = vadd.f32 %v1888, 1e-05
    %v1891 = vrsqrt.pop %v1889
    %v1892 = vrsqrt.pop %v1890
    %v1893 = vmul.f32 %v1877, %v1891
    %v1894 = vmul.f32 %v1878, %v1892
    %v1895 = vmul.f32 %v1893, %v1809
    %v1896 = vmul.f32 %v1894, %v1809
    %1897 = vrot.lane.b32.xlu0 %v1809, 96
    %v1898 = vpop.permute.xlu0 %1897
    %v1900 = vadd.f32 %v1895, %v1898
    %v1901 = vadd.f32 %v1896, %v1898
    %v1902 = vld [vmem:[#allocation5 + $0x70] sm:$0xf]
    %v1903 = vld [vmem:[#allocation5 + $0x74] sm:$0xf]
    %v1904 = vld [vmem:[#allocation5 + $0x78] sm:$0xf]
    %v1905 = vld [vmem:[#allocation5 + $0x7c] sm:$0xf]
    %v1906 = vld [vmem:[#allocation7 + $0x6] sm:$0x1]
    %v1907 = vld [vmem:[#allocation7 + $0x7] sm:$0x1]
    %v1908 = vld [vmem:[#allocation7 + $0x8] sm:$0x1]
    %v1909 = vld [vmem:[#allocation7 + $0x9] sm:$0x1]
    %v1910 = vld [vmem:[#allocation7 + $0xa] sm:$0x1]
    %v1911 = vpack.c.bf16 %v1901, %v1900
    %v1912 = vld [vmem:[#allocation5 + $0x60] sm:$0xf]
    %v1913 = vld [vmem:[#allocation5 + $0x64] sm:$0xf]
    %v1914 = vld [vmem:[#allocation5 + $0x68] sm:$0xf]
    %v1915 = vld [vmem:[#allocation5 + $0x6c] sm:$0xf]
    %v1916 = vlaneseq
    %v1917 = vshrl.u32 %v1916, 7
    %v1918 = vsub.s32 0, %v1917
    %v1919 = vrot.slane %v1906, %v1918
    %v1924 = vunpack.c.l.b16 %v1912
    %v1925 = vunpack.c.l.b16 %v1913
    %v1926 = vunpack.c.l.b16 %v1914
    %v1927 = vunpack.c.l.b16 %v1915
    %v1928 = vpack.c.b16 %v1925, %v1924
    %v1929 = vpack.c.b16 %v1927, %v1926
    %v1933 = vsel %vm81, %v1911, 0
    %1935 = vmatprep.subr.bf16.mxu0 0
    %1936 = vmatpush1.bf16.msra.mxu0 %v1928
    %1937 = vmatprep.subr.bf16.mxu0 0
    %1938 = vmatpush1.bf16.msra.mxu0 %v1929
    %1939 = vmatprep.subr.bf16.mxu0 0
    %1940 = vmatpush1.bf16.msra.mxu0 0
    %1941 = vmatprep.subr.bf16.mxu0 0
    %1942 = vmatpush1.bf16.msra.mxu0 0
    %1943 = vmatprep.subr.bf16.mxu0 0
    %1944 = vmatpush1.bf16.msra.mxu0 0
    %1945 = vmatprep.subr.bf16.mxu0 0
    %1946 = vmatpush1.bf16.msra.mxu0 0
    %1947 = vmatprep.subr.bf16.mxu0 0
    %1948 = vmatpush1.bf16.msra.mxu0 0
    %1949 = vmatprep.subr.bf16.mxu0 0
    %1950 = vmatpush1.bf16.msra.mxu0 0
    %1951 = vmatprep.subr.bf16.mxu0 0
    %1952 = vmatpush1.bf16.msra.mxu0 0
    %1953 = vmatprep.subr.bf16.mxu0 0
    %1954 = vmatpush1.bf16.msra.mxu0 0
    %1955 = vmatprep.subr.bf16.mxu0 0
    %1956 = vmatpush1.bf16.msra.mxu0 0
    %1957 = vmatprep.subr.bf16.mxu0 0
    %1958 = vmatpush1.bf16.msra.mxu0 0
    %1959 = vmatprep.subr.bf16.mxu0 0
    %1960 = vmatpush1.bf16.msra.mxu0 0
    %1961 = vmatprep.subr.bf16.mxu0 0
    %1962 = vmatpush1.bf16.msra.mxu0 0
    %1963 = vmatprep.subr.bf16.mxu0 0
    %1964 = vmatpush1.bf16.msra.mxu0 0
    %1965 = vmatprep.subr.bf16.mxu0 0
    %1966 = vmatpush1.bf16.msra.mxu0 0
    %1967 = vmatprep.mubr.bf16.mxu0 0
    %1968 = vmatmul.mubr.bf16.gmra.mrb[0].mxu0 %v1933
    %v1969 = vpop.f32.mrb[0].mxu0
    %v1970 = vadd.f32 %v1919, %v1969
    %v1971 = vpop.f32.mrb[0].mxu0
    %v1972 = vpop.f32.mrb[0].mxu0
    %v1973 = vadd.f32 %v1919, %v1972
    %v1974 = vpop.f32.mrb[0].mxu0
    %1975 = vdwg.mxu0
    %v1976 = vpack.c.bf16 %v1973, %v1970
    %1978 = vrot.lane.b32.xlu0 %v1976, 96
    %v1979 = vpop.permute.xlu0 %1978
    %v1981 = vsel %vm208, %v1976, 0
    %v1984 = vsel %vm208, %v1979, 0
    %1986 = vmatprep.subr.bf16.mxu0 0
    %1987 = vmatpush1.bf16.xpose.msra.mxu0 %v1984
    %1988 = vmatprep.subr.bf16.mxu0 0
    %1989 = vmatpush1.bf16.xpose.msra.mxu0 0
    %1990 = vmatprep.subr.bf16.mxu0 0
    %1991 = vmatpush1.bf16.xpose.msra.mxu0 0
    %1992 = vmatprep.subr.bf16.mxu0 0
    %1993 = vmatpush1.bf16.xpose.msra.mxu0 0
    %1994 = vmatprep.subr.bf16.mxu0 0
    %1995 = vmatpush1.bf16.xpose.msra.mxu0 0
    %1996 = vmatprep.subr.bf16.mxu0 0
    %1997 = vmatpush1.bf16.xpose.msra.mxu0 0
    %1998 = vmatprep.subr.bf16.mxu0 0
    %1999 = vmatpush1.bf16.xpose.msra.mxu0 0
    %2000 = vmatprep.subr.bf16.mxu0 0
    %2001 = vmatpush1.bf16.xpose.msra.mxu0 0
    %2002 = vmatprep.subr.bf16.mxu0 0
    %2003 = vmatpush1.bf16.xpose.msra.mxu0 0
    %2004 = vmatprep.subr.bf16.mxu0 0
    %2005 = vmatpush1.bf16.xpose.msra.mxu0 0
    %2006 = vmatprep.subr.bf16.mxu0 0
    %2007 = vmatpush1.bf16.xpose.msra.mxu0 0
    %2008 = vmatprep.subr.bf16.mxu0 0
    %2009 = vmatpush1.bf16.xpose.msra.mxu0 0
    %2010 = vmatprep.subr.bf16.mxu0 0
    %2011 = vmatpush1.bf16.xpose.msra.mxu0 0
    %2012 = vmatprep.subr.bf16.mxu0 0
    %2013 = vmatpush1.bf16.xpose.msra.mxu0 0
    %2014 = vmatprep.subr.bf16.mxu0 0
    %2015 = vmatpush1.bf16.xpose.msra.mxu0 0
    %2016 = vmatprep.subr.bf16.mxu0 0
    %2017 = vmatpush1.bf16.xpose.msra.mxu0 0
    %2018 = vmatprep.mubr.bf16.mxu0 0
    %2019 = vmatmul.mubr.bf16.gmra.mrb[0].mxu0 %v1981
    %v2020 = vpop.f32.mrb[0].mxu0
    %v2021 = vadd.f32 %v203, %v2020
    %v2022 = vpop.f32.mrb[0].mxu0
    %v2023 = vpop.f32.mrb[0].mxu0
    %v2024 = vadd.f32 %v205, %v2023
    %v2025 = vpop.f32.mrb[0].mxu0
    %2026 = vdwg.mxu0
    %v2027 = vsel %vm256, %v2021, -inf
    %2028 = vmax.xlane.f32.xlu0 %v2027
    %v2029 = vpop.xlane.xlu0 %2028
    %v2030 = vsel %vm256, %v2024, -inf
    %2031 = vmax.xlane.f32.xlu0 %v2030
    %v2032 = vpop.xlane.xlu0 %2031
    %v2033 = vsub.f32 %v2021, %v2029
    %v2034 = vsub.f32 %v2024, %v2032
    %v2035 = vmul.f32 %v2033, 1.442695
    %v2036 = vpow.pop %v2035
    %v2037 = vmul.f32 %v2034, 1.442695
    %v2038 = vpow.pop %v2037
    %v2039 = vsel %vm256, %v2036, 0.0
    %2040 = vadd.xlane.f32.xlu0 %v2039
    %v2041 = vpop.xlane.xlu0 %2040
    %v2042 = vsel %vm256, %v2038, 0.0
    %2043 = vadd.xlane.f32.xlu0 %v2042
    %v2044 = vpop.xlane.xlu0 %2043
    %v2045 = vpack.c.bf16 %v2038, %v2036
    %2046 = vrot.lane.b32.xlu0 %v1976, 64
    %v2047 = vpop.permute.xlu0 %2046
    %v2050 = vsel %vm256, %v2045, 0
    %2052 = vmatprep.subr.bf16.mxu0 0
    %2053 = vmatpush1.bf16.msra.mxu0 %v2047
    %2054 = vmatprep.subr.bf16.mxu0 0
    %2055 = vmatpush1.bf16.msra.mxu0 0
    %2056 = vmatprep.subr.bf16.mxu0 0
    %2057 = vmatpush1.bf16.msra.mxu0 0
    %2058 = vmatprep.subr.bf16.mxu0 0
    %2059 = vmatpush1.bf16.msra.mxu0 0
    %2060 = vmatprep.subr.bf16.mxu0 0
    %2061 = vmatpush1.bf16.msra.mxu0 0
    %2062 = vmatprep.subr.bf16.mxu0 0
    %2063 = vmatpush1.bf16.msra.mxu0 0
    %2064 = vmatprep.subr.bf16.mxu0 0
    %2065 = vmatpush1.bf16.msra.mxu0 0
    %2066 = vmatprep.subr.bf16.mxu0 0
    %2067 = vmatpush1.bf16.msra.mxu0 0
    %2068 = vmatprep.subr.bf16.mxu0 0
    %2069 = vmatpush1.bf16.msra.mxu0 0
    %2070 = vmatprep.subr.bf16.mxu0 0
    %2071 = vmatpush1.bf16.msra.mxu0 0
    %2072 = vmatprep.subr.bf16.mxu0 0
    %2073 = vmatpush1.bf16.msra.mxu0 0
    %2074 = vmatprep.subr.bf16.mxu0 0
    %2075 = vmatpush1.bf16.msra.mxu0 0
    %2076 = vmatprep.subr.bf16.mxu0 0
    %2077 = vmatpush1.bf16.msra.mxu0 0
    %2078 = vmatprep.subr.bf16.mxu0 0
    %2079 = vmatpush1.bf16.msra.mxu0 0
    %2080 = vmatprep.subr.bf16.mxu0 0
    %2081 = vmatpush1.bf16.msra.mxu0 0
    %2082 = vmatprep.subr.bf16.mxu0 0
    %2083 = vmatpush1.bf16.msra.mxu0 0
    %2084 = vmatprep.mubr.bf16.mxu0 0
    %2085 = vmatmul.mubr.bf16.gmra.mrb[0].mxu0 %v2050
    %v2086 = vpop.f32.mrb[0].mxu0
    %v2087 = vadd.f32 0.0, %v2086
    %v2088 = vpop.f32.mrb[0].mxu0
    %v2089 = vpop.f32.mrb[0].mxu0
    %v2090 = vadd.f32 0.0, %v2089
    %v2091 = vpop.f32.mrb[0].mxu0
    %2092 = vdwg.mxu0
    %v2093 = vrcp.pop %v2041
    %v2094 = vrcp.pop %v2044
    %v2095 = vmul.f32 %v2087, %v2093
    %v2096 = vmul.f32 %v2090, %v2094
    %v2097 = vpack.c.bf16 %v2096, %v2095
    %2098 = vrot.lane.b32.xlu0 %v1976, 120
    %v2099 = vpop.permute.xlu0 %2098
    %2100 = vrot.lane.b32.xlu0 %v1976, 88
    %v2101 = vpop.permute.xlu0 %2100
    %v2103 = vsel %vm208, %v2099, 0
    %v2106 = vsel %vm208, %v2101, 0
    %2108 = vmatprep.subr.bf16.mxu0 0
    %2109 = vmatpush1.bf16.xpose.msra.mxu0 %v2106
    %2110 = vmatprep.subr.bf16.mxu0 0
    %2111 = vmatpush1.bf16.xpose.msra.mxu0 0
    %2112 = vmatprep.subr.bf16.mxu0 0
    %2113 = vmatpush1.bf16.xpose.msra.mxu0 0
    %2114 = vmatprep.subr.bf16.mxu0 0
    %2115 = vmatpush1.bf16.xpose.msra.mxu0 0
    %2116 = vmatprep.subr.bf16.mxu0 0
    %2117 = vmatpush1.bf16.xpose.msra.mxu0 0
    %2118 = vmatprep.subr.bf16.mxu0 0
    %2119 = vmatpush1.bf16.xpose.msra.mxu0 0
    %2120 = vmatprep.subr.bf16.mxu0 0
    %2121 = vmatpush1.bf16.xpose.msra.mxu0 0
    %2122 = vmatprep.subr.bf16.mxu0 0
    %2123 = vmatpush1.bf16.xpose.msra.mxu0 0
    %2124 = vmatprep.subr.bf16.mxu0 0
    %2125 = vmatpush1.bf16.xpose.msra.mxu0 0
    %2126 = vmatprep.subr.bf16.mxu0 0
    %2127 = vmatpush1.bf16.xpose.msra.mxu0 0
    %2128 = vmatprep.subr.bf16.mxu0 0
    %2129 = vmatpush1.bf16.xpose.msra.mxu0 0
    %2130 = vmatprep.subr.bf16.mxu0 0
    %2131 = vmatpush1.bf16.xpose.msra.mxu0 0
    %2132 = vmatprep.subr.bf16.mxu0 0
    %2133 = vmatpush1.bf16.xpose.msra.mxu0 0
    %2134 = vmatprep.subr.bf16.mxu0 0
    %2135 = vmatpush1.bf16.xpose.msra.mxu0 0
    %2136 = vmatprep.subr.bf16.mxu0 0
    %2137 = vmatpush1.bf16.xpose.msra.mxu0 0
    %2138 = vmatprep.subr.bf16.mxu0 0
    %2139 = vmatpush1.bf16.xpose.msra.mxu0 0
    %2140 = vmatprep.mubr.bf16.mxu0 0
    %2141 = vmatmul.mubr.bf16.gmra.mrb[0].mxu0 %v2103
    %v2142 = vpop.f32.mrb[0].mxu0
    %v2143 = vadd.f32 %v203, %v2142
    %v2144 = vpop.f32.mrb[0].mxu0
    %v2145 = vpop.f32.mrb[0].mxu0
    %v2146 = vadd.f32 %v205, %v2145
    %v2147 = vpop.f32.mrb[0].mxu0
    %2148 = vdwg.mxu0
    %v2149 = vsel %vm256, %v2143, -inf
    %2150 = vmax.xlane.f32.xlu0 %v2149
    %v2151 = vpop.xlane.xlu0 %2150
    %v2152 = vsel %vm256, %v2146, -inf
    %2153 = vmax.xlane.f32.xlu0 %v2152
    %v2154 = vpop.xlane.xlu0 %2153
    %v2155 = vsub.f32 %v2143, %v2151
    %v2156 = vsub.f32 %v2146, %v2154
    %v2157 = vmul.f32 %v2155, 1.442695
    %v2158 = vpow.pop %v2157
    %v2159 = vmul.f32 %v2156, 1.442695
    %v2160 = vpow.pop %v2159
    %v2161 = vsel %vm256, %v2158, 0.0
    %2162 = vadd.xlane.f32.xlu0 %v2161
    %v2163 = vpop.xlane.xlu0 %2162
    %v2164 = vsel %vm256, %v2160, 0.0
    %2165 = vadd.xlane.f32.xlu0 %v2164
    %v2166 = vpop.xlane.xlu0 %2165
    %v2167 = vpack.c.bf16 %v2160, %v2158
    %2168 = vrot.lane.b32.xlu0 %v1976, 56
    %v2169 = vpop.permute.xlu0 %2168
    %v2172 = vsel %vm256, %v2167, 0
    %2174 = vmatprep.subr.bf16.mxu0 0
    %2175 = vmatpush1.bf16.msra.mxu0 %v2169
    %2176 = vmatprep.subr.bf16.mxu0 0
    %2177 = vmatpush1.bf16.msra.mxu0 0
    %2178 = vmatprep.subr.bf16.mxu0 0
    %2179 = vmatpush1.bf16.msra.mxu0 0
    %2180 = vmatprep.subr.bf16.mxu0 0
    %2181 = vmatpush1.bf16.msra.mxu0 0
    %2182 = vmatprep.subr.bf16.mxu0 0
    %2183 = vmatpush1.bf16.msra.mxu0 0
    %2184 = vmatprep.subr.bf16.mxu0 0
    %2185 = vmatpush1.bf16.msra.mxu0 0
    %2186 = vmatprep.subr.bf16.mxu0 0
    %2187 = vmatpush1.bf16.msra.mxu0 0
    %2188 = vmatprep.subr.bf16.mxu0 0
    %2189 = vmatpush1.bf16.msra.mxu0 0
    %2190 = vmatprep.subr.bf16.mxu0 0
    %2191 = vmatpush1.bf16.msra.mxu0 0
    %2192 = vmatprep.subr.bf16.mxu0 0
    %2193 = vmatpush1.bf16.msra.mxu0 0
    %2194 = vmatprep.subr.bf16.mxu0 0
    %2195 = vmatpush1.bf16.msra.mxu0 0
    %2196 = vmatprep.subr.bf16.mxu0 0
    %2197 = vmatpush1.bf16.msra.mxu0 0
    %2198 = vmatprep.subr.bf16.mxu0 0
    %2199 = vmatpush1.bf16.msra.mxu0 0
    %2200 = vmatprep.subr.bf16.mxu0 0
    %2201 = vmatpush1.bf16.msra.mxu0 0
    %2202 = vmatprep.subr.bf16.mxu0 0
    %2203 = vmatpush1.bf16.msra.mxu0 0
    %2204 = vmatprep.subr.bf16.mxu0 0
    %2205 = vmatpush1.bf16.msra.mxu0 0
    %2206 = vmatprep.mubr.bf16.mxu0 0
    %2207 = vmatmul.mubr.bf16.gmra.mrb[0].mxu0 %v2172
    %v2208 = vpop.f32.mrb[0].mxu0
    %v2209 = vadd.f32 0.0, %v2208
    %v2210 = vpop.f32.mrb[0].mxu0
    %v2211 = vpop.f32.mrb[0].mxu0
    %v2212 = vadd.f32 0.0, %v2211
    %v2213 = vpop.f32.mrb[0].mxu0
    %2214 = vdwg.mxu0
    %v2215 = vrcp.pop %v2163
    %v2216 = vrcp.pop %v2166
    %v2217 = vmul.f32 %v2209, %v2215
    %v2218 = vmul.f32 %v2212, %v2216
    %v2219 = vpack.c.bf16 %v2218, %v2217
    %v2221 = vsel %vm208, %v2219, 0
    %v2224 = vsel %vm453, %v1903, 0
    %2226 = vmatprep.subr.bf16.mxu0 0
    %2227 = vmatpush1.bf16.msra.mxu0 %v2224
    %2228 = vmatprep.subr.bf16.mxu0 0
    %2229 = vmatpush1.bf16.msra.mxu0 0
    %2230 = vmatprep.subr.bf16.mxu0 0
    %2231 = vmatpush1.bf16.msra.mxu0 0
    %2232 = vmatprep.subr.bf16.mxu0 0
    %2233 = vmatpush1.bf16.msra.mxu0 0
    %2234 = vmatprep.subr.bf16.mxu0 0
    %2235 = vmatpush1.bf16.msra.mxu0 0
    %2236 = vmatprep.subr.bf16.mxu0 0
    %2237 = vmatpush1.bf16.msra.mxu0 0
    %2238 = vmatprep.subr.bf16.mxu0 0
    %2239 = vmatpush1.bf16.msra.mxu0 0
    %2240 = vmatprep.subr.bf16.mxu0 0
    %2241 = vmatpush1.bf16.msra.mxu0 0
    %2242 = vmatprep.subr.bf16.mxu0 0
    %2243 = vmatpush1.bf16.msra.mxu0 0
    %2244 = vmatprep.subr.bf16.mxu0 0
    %2245 = vmatpush1.bf16.msra.mxu0 0
    %2246 = vmatprep.subr.bf16.mxu0 0
    %2247 = vmatpush1.bf16.msra.mxu0 0
    %2248 = vmatprep.subr.bf16.mxu0 0
    %2249 = vmatpush1.bf16.msra.mxu0 0
    %2250 = vmatprep.subr.bf16.mxu0 0
    %2251 = vmatpush1.bf16.msra.mxu0 0
    %2252 = vmatprep.subr.bf16.mxu0 0
    %2253 = vmatpush1.bf16.msra.mxu0 0
    %2254 = vmatprep.subr.bf16.mxu0 0
    %2255 = vmatpush1.bf16.msra.mxu0 0
    %2256 = vmatprep.subr.bf16.mxu0 0
    %2257 = vmatpush1.bf16.msra.mxu0 0
    %2258 = vmatprep.mubr.bf16.mxu0 0
    %2259 = vmatmul.mubr.bf16.gmra.mrb[0].mxu0 %v2221
    %v2260 = vpop.f32.mrb[0].mxu0
    %v2261 = vadd.f32 0.0, %v2260
    %v2262 = vpop.f32.mrb[0].mxu0
    %v2263 = vpop.f32.mrb[0].mxu0
    %v2264 = vadd.f32 0.0, %v2263
    %v2265 = vpop.f32.mrb[0].mxu0
    %2266 = vdwg.mxu0
    %v2268 = vsel %vm208, %v2097, 0
    %v2271 = vsel %vm453, %v1902, 0
    %2273 = vmatprep.subr.bf16.mxu0 0
    %2274 = vmatpush1.bf16.msra.mxu0 %v2271
    %2275 = vmatprep.subr.bf16.mxu0 0
    %2276 = vmatpush1.bf16.msra.mxu0 0
    %2277 = vmatprep.subr.bf16.mxu0 0
    %2278 = vmatpush1.bf16.msra.mxu0 0
    %2279 = vmatprep.subr.bf16.mxu0 0
    %2280 = vmatpush1.bf16.msra.mxu0 0
    %2281 = vmatprep.subr.bf16.mxu0 0
    %2282 = vmatpush1.bf16.msra.mxu0 0
    %2283 = vmatprep.subr.bf16.mxu0 0
    %2284 = vmatpush1.bf16.msra.mxu0 0
    %2285 = vmatprep.subr.bf16.mxu0 0
    %2286 = vmatpush1.bf16.msra.mxu0 0
    %2287 = vmatprep.subr.bf16.mxu0 0
    %2288 = vmatpush1.bf16.msra.mxu0 0
    %2289 = vmatprep.subr.bf16.mxu0 0
    %2290 = vmatpush1.bf16.msra.mxu0 0
    %2291 = vmatprep.subr.bf16.mxu0 0
    %2292 = vmatpush1.bf16.msra.mxu0 0
    %2293 = vmatprep.subr.bf16.mxu0 0
    %2294 = vmatpush1.bf16.msra.mxu0 0
    %2295 = vmatprep.subr.bf16.mxu0 0
    %2296 = vmatpush1.bf16.msra.mxu0 0
    %2297 = vmatprep.subr.bf16.mxu0 0
    %2298 = vmatpush1.bf16.msra.mxu0 0
    %2299 = vmatprep.subr.bf16.mxu0 0
    %2300 = vmatpush1.bf16.msra.mxu0 0
    %2301 = vmatprep.subr.bf16.mxu0 0
    %2302 = vmatpush1.bf16.msra.mxu0 0
    %2303 = vmatprep.subr.bf16.mxu0 0
    %2304 = vmatpush1.bf16.msra.mxu0 0
    %2305 = vmatprep.mubr.bf16.mxu0 0
    %2306 = vmatmul.mubr.bf16.gmra.mrb[0].mxu0 %v2268
    %v2307 = vpop.f32.mrb[0].mxu0
    %v2308 = vadd.f32 %v2261, %v2307
    %v2309 = vpop.f32.mrb[0].mxu0
    %v2310 = vpop.f32.mrb[0].mxu0
    %v2311 = vadd.f32 %v2264, %v2310
    %v2312 = vpop.f32.mrb[0].mxu0
    %2313 = vdwg.mxu0
    %2314 = vrot.lane.b32.xlu0 %v1976, 112
    %v2315 = vpop.permute.xlu0 %2314
    %2316 = vrot.lane.b32.xlu0 %v1976, 80
    %v2317 = vpop.permute.xlu0 %2316
    %v2319 = vsel %vm208, %v2315, 0
    %v2322 = vsel %vm208, %v2317, 0
    %2324 = vmatprep.subr.bf16.mxu0 0
    %2325 = vmatpush1.bf16.xpose.msra.mxu0 %v2322
    %2326 = vmatprep.subr.bf16.mxu0 0
    %2327 = vmatpush1.bf16.xpose.msra.mxu0 0
    %2328 = vmatprep.subr.bf16.mxu0 0
    %2329 = vmatpush1.bf16.xpose.msra.mxu0 0
    %2330 = vmatprep.subr.bf16.mxu0 0
    %2331 = vmatpush1.bf16.xpose.msra.mxu0 0
    %2332 = vmatprep.subr.bf16.mxu0 0
    %2333 = vmatpush1.bf16.xpose.msra.mxu0 0
    %2334 = vmatprep.subr.bf16.mxu0 0
    %2335 = vmatpush1.bf16.xpose.msra.mxu0 0
    %2336 = vmatprep.subr.bf16.mxu0 0
    %2337 = vmatpush1.bf16.xpose.msra.mxu0 0
    %2338 = vmatprep.subr.bf16.mxu0 0
    %2339 = vmatpush1.bf16.xpose.msra.mxu0 0
    %2340 = vmatprep.subr.bf16.mxu0 0
    %2341 = vmatpush1.bf16.xpose.msra.mxu0 0
    %2342 = vmatprep.subr.bf16.mxu0 0
    %2343 = vmatpush1.bf16.xpose.msra.mxu0 0
    %2344 = vmatprep.subr.bf16.mxu0 0
    %2345 = vmatpush1.bf16.xpose.msra.mxu0 0
    %2346 = vmatprep.subr.bf16.mxu0 0
    %2347 = vmatpush1.bf16.xpose.msra.mxu0 0
    %2348 = vmatprep.subr.bf16.mxu0 0
    %2349 = vmatpush1.bf16.xpose.msra.mxu0 0
    %2350 = vmatprep.subr.bf16.mxu0 0
    %2351 = vmatpush1.bf16.xpose.msra.mxu0 0
    %2352 = vmatprep.subr.bf16.mxu0 0
    %2353 = vmatpush1.bf16.xpose.msra.mxu0 0
    %2354 = vmatprep.subr.bf16.mxu0 0
    %2355 = vmatpush1.bf16.xpose.msra.mxu0 0
    %2356 = vmatprep.mubr.bf16.mxu0 0
    %2357 = vmatmul.mubr.bf16.gmra.mrb[0].mxu0 %v2319
    %v2358 = vpop.f32.mrb[0].mxu0
    %v2359 = vadd.f32 %v203, %v2358
    %v2360 = vpop.f32.mrb[0].mxu0
    %v2361 = vpop.f32.mrb[0].mxu0
    %v2362 = vadd.f32 %v205, %v2361
    %v2363 = vpop.f32.mrb[0].mxu0
    %2364 = vdwg.mxu0
    %v2365 = vsel %vm256, %v2359, -inf
    %2366 = vmax.xlane.f32.xlu0 %v2365
    %v2367 = vpop.xlane.xlu0 %2366
    %v2368 = vsel %vm256, %v2362, -inf
    %2369 = vmax.xlane.f32.xlu0 %v2368
    %v2370 = vpop.xlane.xlu0 %2369
    %v2371 = vsub.f32 %v2359, %v2367
    %v2372 = vsub.f32 %v2362, %v2370
    %v2373 = vmul.f32 %v2371, 1.442695
    %v2374 = vpow.pop %v2373
    %v2375 = vmul.f32 %v2372, 1.442695
    %v2376 = vpow.pop %v2375
    %v2377 = vsel %vm256, %v2374, 0.0
    %2378 = vadd.xlane.f32.xlu0 %v2377
    %v2379 = vpop.xlane.xlu0 %2378
    %v2380 = vsel %vm256, %v2376, 0.0
    %2381 = vadd.xlane.f32.xlu0 %v2380
    %v2382 = vpop.xlane.xlu0 %2381
    %v2383 = vpack.c.bf16 %v2376, %v2374
    %2384 = vrot.lane.b32.xlu0 %v1976, 48
    %v2385 = vpop.permute.xlu0 %2384
    %v2388 = vsel %vm256, %v2383, 0
    %2390 = vmatprep.subr.bf16.mxu0 0
    %2391 = vmatpush1.bf16.msra.mxu0 %v2385
    %2392 = vmatprep.subr.bf16.mxu0 0
    %2393 = vmatpush1.bf16.msra.mxu0 0
    %2394 = vmatprep.subr.bf16.mxu0 0
    %2395 = vmatpush1.bf16.msra.mxu0 0
    %2396 = vmatprep.subr.bf16.mxu0 0
    %2397 = vmatpush1.bf16.msra.mxu0 0
    %2398 = vmatprep.subr.bf16.mxu0 0
    %2399 = vmatpush1.bf16.msra.mxu0 0
    %2400 = vmatprep.subr.bf16.mxu0 0
    %2401 = vmatpush1.bf16.msra.mxu0 0
    %2402 = vmatprep.subr.bf16.mxu0 0
    %2403 = vmatpush1.bf16.msra.mxu0 0
    %2404 = vmatprep.subr.bf16.mxu0 0
    %2405 = vmatpush1.bf16.msra.mxu0 0
    %2406 = vmatprep.subr.bf16.mxu0 0
    %2407 = vmatpush1.bf16.msra.mxu0 0
    %2408 = vmatprep.subr.bf16.mxu0 0
    %2409 = vmatpush1.bf16.msra.mxu0 0
    %2410 = vmatprep.subr.bf16.mxu0 0
    %2411 = vmatpush1.bf16.msra.mxu0 0
    %2412 = vmatprep.subr.bf16.mxu0 0
    %2413 = vmatpush1.bf16.msra.mxu0 0
    %2414 = vmatprep.subr.bf16.mxu0 0
    %2415 = vmatpush1.bf16.msra.mxu0 0
    %2416 = vmatprep.subr.bf16.mxu0 0
    %2417 = vmatpush1.bf16.msra.mxu0 0
    %2418 = vmatprep.subr.bf16.mxu0 0
    %2419 = vmatpush1.bf16.msra.mxu0 0
    %2420 = vmatprep.subr.bf16.mxu0 0
    %2421 = vmatpush1.bf16.msra.mxu0 0
    %2422 = vmatprep.mubr.bf16.mxu0 0
    %2423 = vmatmul.mubr.bf16.gmra.mrb[0].mxu0 %v2388
    %v2424 = vpop.f32.mrb[0].mxu0
    %v2425 = vadd.f32 0.0, %v2424
    %v2426 = vpop.f32.mrb[0].mxu0
    %v2427 = vpop.f32.mrb[0].mxu0
    %v2428 = vadd.f32 0.0, %v2427
    %v2429 = vpop.f32.mrb[0].mxu0
    %2430 = vdwg.mxu0
    %v2431 = vrcp.pop %v2379
    %v2432 = vrcp.pop %v2382
    %v2433 = vmul.f32 %v2425, %v2431
    %v2434 = vmul.f32 %v2428, %v2432
    %v2435 = vpack.c.bf16 %v2434, %v2433
    %v2437 = vsel %vm208, %v2435, 0
    %v2440 = vsel %vm453, %v1904, 0
    %2442 = vmatprep.subr.bf16.mxu0 0
    %2443 = vmatpush1.bf16.msra.mxu0 %v2440
    %2444 = vmatprep.subr.bf16.mxu0 0
    %2445 = vmatpush1.bf16.msra.mxu0 0
    %2446 = vmatprep.subr.bf16.mxu0 0
    %2447 = vmatpush1.bf16.msra.mxu0 0
    %2448 = vmatprep.subr.bf16.mxu0 0
    %2449 = vmatpush1.bf16.msra.mxu0 0
    %2450 = vmatprep.subr.bf16.mxu0 0
    %2451 = vmatpush1.bf16.msra.mxu0 0
    %2452 = vmatprep.subr.bf16.mxu0 0
    %2453 = vmatpush1.bf16.msra.mxu0 0
    %2454 = vmatprep.subr.bf16.mxu0 0
    %2455 = vmatpush1.bf16.msra.mxu0 0
    %2456 = vmatprep.subr.bf16.mxu0 0
    %2457 = vmatpush1.bf16.msra.mxu0 0
    %2458 = vmatprep.subr.bf16.mxu0 0
    %2459 = vmatpush1.bf16.msra.mxu0 0
    %2460 = vmatprep.subr.bf16.mxu0 0
    %2461 = vmatpush1.bf16.msra.mxu0 0
    %2462 = vmatprep.subr.bf16.mxu0 0
    %2463 = vmatpush1.bf16.msra.mxu0 0
    %2464 = vmatprep.subr.bf16.mxu0 0
    %2465 = vmatpush1.bf16.msra.mxu0 0
    %2466 = vmatprep.subr.bf16.mxu0 0
    %2467 = vmatpush1.bf16.msra.mxu0 0
    %2468 = vmatprep.subr.bf16.mxu0 0
    %2469 = vmatpush1.bf16.msra.mxu0 0
    %2470 = vmatprep.subr.bf16.mxu0 0
    %2471 = vmatpush1.bf16.msra.mxu0 0
    %2472 = vmatprep.subr.bf16.mxu0 0
    %2473 = vmatpush1.bf16.msra.mxu0 0
    %2474 = vmatprep.mubr.bf16.mxu0 0
    %2475 = vmatmul.mubr.bf16.gmra.mrb[0].mxu0 %v2437
    %v2476 = vpop.f32.mrb[0].mxu0
    %v2477 = vadd.f32 0.0, %v2476
    %v2478 = vpop.f32.mrb[0].mxu0
    %v2479 = vpop.f32.mrb[0].mxu0
    %v2480 = vadd.f32 0.0, %v2479
    %v2481 = vpop.f32.mrb[0].mxu0
    %2482 = vdwg.mxu0
    %v2483 = vadd.f32 %v2308, %v2477
    %v2484 = vadd.f32 %v2311, %v2480
    %2485 = vrot.lane.b32.xlu0 %v1976, 104
    %v2486 = vpop.permute.xlu0 %2485
    %2487 = vrot.lane.b32.xlu0 %v1976, 72
    %v2488 = vpop.permute.xlu0 %2487
    %v2490 = vsel %vm208, %v2486, 0
    %v2493 = vsel %vm208, %v2488, 0
    %2495 = vmatprep.subr.bf16.mxu0 0
    %2496 = vmatpush1.bf16.xpose.msra.mxu0 %v2493
    %2497 = vmatprep.subr.bf16.mxu0 0
    %2498 = vmatpush1.bf16.xpose.msra.mxu0 0
    %2499 = vmatprep.subr.bf16.mxu0 0
    %2500 = vmatpush1.bf16.xpose.msra.mxu0 0
    %2501 = vmatprep.subr.bf16.mxu0 0
    %2502 = vmatpush1.bf16.xpose.msra.mxu0 0
    %2503 = vmatprep.subr.bf16.mxu0 0
    %2504 = vmatpush1.bf16.xpose.msra.mxu0 0
    %2505 = vmatprep.subr.bf16.mxu0 0
    %2506 = vmatpush1.bf16.xpose.msra.mxu0 0
    %2507 = vmatprep.subr.bf16.mxu0 0
    %2508 = vmatpush1.bf16.xpose.msra.mxu0 0
    %2509 = vmatprep.subr.bf16.mxu0 0
    %2510 = vmatpush1.bf16.xpose.msra.mxu0 0
    %2511 = vmatprep.subr.bf16.mxu0 0
    %2512 = vmatpush1.bf16.xpose.msra.mxu0 0
    %2513 = vmatprep.subr.bf16.mxu0 0
    %2514 = vmatpush1.bf16.xpose.msra.mxu0 0
    %2515 = vmatprep.subr.bf16.mxu0 0
    %2516 = vmatpush1.bf16.xpose.msra.mxu0 0
    %2517 = vmatprep.subr.bf16.mxu0 0
    %2518 = vmatpush1.bf16.xpose.msra.mxu0 0
    %2519 = vmatprep.subr.bf16.mxu0 0
    %2520 = vmatpush1.bf16.xpose.msra.mxu0 0
    %2521 = vmatprep.subr.bf16.mxu0 0
    %2522 = vmatpush1.bf16.xpose.msra.mxu0 0
    %2523 = vmatprep.subr.bf16.mxu0 0
    %2524 = vmatpush1.bf16.xpose.msra.mxu0 0
    %2525 = vmatprep.subr.bf16.mxu0 0
    %2526 = vmatpush1.bf16.xpose.msra.mxu0 0
    %2527 = vmatprep.mubr.bf16.mxu0 0
    %2528 = vmatmul.mubr.bf16.gmra.mrb[0].mxu0 %v2490
    %v2529 = vpop.f32.mrb[0].mxu0
    %v2530 = vadd.f32 %v203, %v2529
    %v2531 = vpop.f32.mrb[0].mxu0
    %v2532 = vpop.f32.mrb[0].mxu0
    %v2533 = vadd.f32 %v205, %v2532
    %v2534 = vpop.f32.mrb[0].mxu0
    %2535 = vdwg.mxu0
    %v2536 = vsel %vm256, %v2530, -inf
    %2537 = vmax.xlane.f32.xlu0 %v2536
    %v2538 = vpop.xlane.xlu0 %2537
    %v2539 = vsel %vm256, %v2533, -inf
    %2540 = vmax.xlane.f32.xlu0 %v2539
    %v2541 = vpop.xlane.xlu0 %2540
    %v2542 = vsub.f32 %v2530, %v2538
    %v2543 = vsub.f32 %v2533, %v2541
    %v2544 = vmul.f32 %v2542, 1.442695
    %v2545 = vpow.pop %v2544
    %v2546 = vmul.f32 %v2543, 1.442695
    %v2547 = vpow.pop %v2546
    %v2548 = vsel %vm256, %v2545, 0.0
    %2549 = vadd.xlane.f32.xlu0 %v2548
    %v2550 = vpop.xlane.xlu0 %2549
    %v2551 = vsel %vm256, %v2547, 0.0
    %2552 = vadd.xlane.f32.xlu0 %v2551
    %v2553 = vpop.xlane.xlu0 %2552
    %v2554 = vpack.c.bf16 %v2547, %v2545
    %2555 = vrot.lane.b32.xlu0 %v1976, 40
    %v2556 = vpop.permute.xlu0 %2555
    %v2559 = vsel %vm256, %v2554, 0
    %2561 = vmatprep.subr.bf16.mxu0 0
    %2562 = vmatpush1.bf16.msra.mxu0 %v2556
    %2563 = vmatprep.subr.bf16.mxu0 0
    %2564 = vmatpush1.bf16.msra.mxu0 0
    %2565 = vmatprep.subr.bf16.mxu0 0
    %2566 = vmatpush1.bf16.msra.mxu0 0
    %2567 = vmatprep.subr.bf16.mxu0 0
    %2568 = vmatpush1.bf16.msra.mxu0 0
    %2569 = vmatprep.subr.bf16.mxu0 0
    %2570 = vmatpush1.bf16.msra.mxu0 0
    %2571 = vmatprep.subr.bf16.mxu0 0
    %2572 = vmatpush1.bf16.msra.mxu0 0
    %2573 = vmatprep.subr.bf16.mxu0 0
    %2574 = vmatpush1.bf16.msra.mxu0 0
    %2575 = vmatprep.subr.bf16.mxu0 0
    %2576 = vmatpush1.bf16.msra.mxu0 0
    %2577 = vmatprep.subr.bf16.mxu0 0
    %2578 = vmatpush1.bf16.msra.mxu0 0
    %2579 = vmatprep.subr.bf16.mxu0 0
    %2580 = vmatpush1.bf16.msra.mxu0 0
    %2581 = vmatprep.subr.bf16.mxu0 0
    %2582 = vmatpush1.bf16.msra.mxu0 0
    %2583 = vmatprep.subr.bf16.mxu0 0
    %2584 = vmatpush1.bf16.msra.mxu0 0
    %2585 = vmatprep.subr.bf16.mxu0 0
    %2586 = vmatpush1.bf16.msra.mxu0 0
    %2587 = vmatprep.subr.bf16.mxu0 0
    %2588 = vmatpush1.bf16.msra.mxu0 0
    %2589 = vmatprep.subr.bf16.mxu0 0
    %2590 = vmatpush1.bf16.msra.mxu0 0
    %2591 = vmatprep.subr.bf16.mxu0 0
    %2592 = vmatpush1.bf16.msra.mxu0 0
    %2593 = vmatprep.mubr.bf16.mxu0 0
    %2594 = vmatmul.mubr.bf16.gmra.mrb[0].mxu0 %v2559
    %v2595 = vpop.f32.mrb[0].mxu0
    %v2596 = vadd.f32 0.0, %v2595
    %v2597 = vpop.f32.mrb[0].mxu0
    %v2598 = vpop.f32.mrb[0].mxu0
    %v2599 = vadd.f32 0.0, %v2598
    %v2600 = vpop.f32.mrb[0].mxu0
    %2601 = vdwg.mxu0
    %v2602 = vrcp.pop %v2550
    %v2603 = vrcp.pop %v2553
    %v2604 = vmul.f32 %v2596, %v2602
    %v2605 = vmul.f32 %v2599, %v2603
    %v2606 = vpack.c.bf16 %v2605, %v2604
    %v2608 = vsel %vm208, %v2606, 0
    %v2611 = vsel %vm453, %v1905, 0
    %2613 = vmatprep.subr.bf16.mxu0 0
    %2614 = vmatpush1.bf16.msra.mxu0 %v2611
    %2615 = vmatprep.subr.bf16.mxu0 0
    %2616 = vmatpush1.bf16.msra.mxu0 0
    %2617 = vmatprep.subr.bf16.mxu0 0
    %2618 = vmatpush1.bf16.msra.mxu0 0
    %2619 = vmatprep.subr.bf16.mxu0 0
    %2620 = vmatpush1.bf16.msra.mxu0 0
    %2621 = vmatprep.subr.bf16.mxu0 0
    %2622 = vmatpush1.bf16.msra.mxu0 0
    %2623 = vmatprep.subr.bf16.mxu0 0
    %2624 = vmatpush1.bf16.msra.mxu0 0
    %2625 = vmatprep.subr.bf16.mxu0 0
    %2626 = vmatpush1.bf16.msra.mxu0 0
    %2627 = vmatprep.subr.bf16.mxu0 0
    %2628 = vmatpush1.bf16.msra.mxu0 0
    %2629 = vmatprep.subr.bf16.mxu0 0
    %2630 = vmatpush1.bf16.msra.mxu0 0
    %2631 = vmatprep.subr.bf16.mxu0 0
    %2632 = vmatpush1.bf16.msra.mxu0 0
    %2633 = vmatprep.subr.bf16.mxu0 0
    %2634 = vmatpush1.bf16.msra.mxu0 0
    %2635 = vmatprep.subr.bf16.mxu0 0
    %2636 = vmatpush1.bf16.msra.mxu0 0
    %2637 = vmatprep.subr.bf16.mxu0 0
    %2638 = vmatpush1.bf16.msra.mxu0 0
    %2639 = vmatprep.subr.bf16.mxu0 0
    %2640 = vmatpush1.bf16.msra.mxu0 0
    %2641 = vmatprep.subr.bf16.mxu0 0
    %2642 = vmatpush1.bf16.msra.mxu0 0
    %2643 = vmatprep.subr.bf16.mxu0 0
    %2644 = vmatpush1.bf16.msra.mxu0 0
    %2645 = vmatprep.mubr.bf16.mxu0 0
    %2646 = vmatmul.mubr.bf16.gmra.mrb[0].mxu0 %v2608
    %v2647 = vpop.f32.mrb[0].mxu0
    %v2648 = vadd.f32 0.0, %v2647
    %v2649 = vpop.f32.mrb[0].mxu0
    %v2650 = vpop.f32.mrb[0].mxu0
    %v2651 = vadd.f32 0.0, %v2650
    %v2652 = vpop.f32.mrb[0].mxu0
    %2653 = vdwg.mxu0
    %v2654 = vadd.f32 %v2483, %v2648
    %v2655 = vadd.f32 %v2484, %v2651
    %v2656 = vlaneseq
    %v2657 = vshrl.u32 %v2656, 7
    %v2658 = vsub.s32 0, %v2657
    %v2659 = vrot.slane %v1907, %v2658
    %v2660 = vadd.f32 %v2654, %v2659
    %v2661 = vadd.f32 %v2655, %v2659
    %v2662 = vadd.f32 %v1900, %v2660
    %v2663 = vadd.f32 %v1901, %v2661
    %v2664 = vsel %vm81, %v2662, 0.0
    %2665 = vadd.xlane.f32.xlu0 %v2664
    %v2666 = vpop.xlane.xlu0 %2665
    %v2667 = vsel %vm81, %v2663, 0.0
    %2668 = vadd.xlane.f32.xlu0 %v2667
    %v2669 = vpop.xlane.xlu0 %2668
    %v2670 = vmul.f32 %v2666, %v901
    %v2671 = vmul.f32 %v2669, %v901
    %v2672 = vsub.f32 %v2662, %v2670
    %v2673 = vsub.f32 %v2663, %v2671
    %v2674 = vmul.f32 %v2672, %v2672
    %v2675 = vmul.f32 %v2673, %v2673
    %v2676 = vsel %vm81, %v2674, 0.0
    %2677 = vadd.xlane.f32.xlu0 %v2676
    %v2678 = vpop.xlane.xlu0 %2677
    %v2679 = vsel %vm81, %v2675, 0.0
    %2680 = vadd.xlane.f32.xlu0 %v2679
    %v2681 = vpop.xlane.xlu0 %2680
    %v2682 = vmul.f32 %v2678, %v901
    %v2683 = vmul.f32 %v2681, %v901
    %v2684 = vadd.f32 %v2682, 1e-05
    %v2685 = vadd.f32 %v2683, 1e-05
    %v2686 = vrsqrt.pop %v2684
    %v2687 = vrsqrt.pop %v2685
    %v2688 = vmul.f32 %v2672, %v2686
    %v2689 = vmul.f32 %v2673, %v2687
    %v2690 = vlaneseq
    %v2691 = vshrl.u32 %v2690, 7
    %v2692 = vsub.s32 0, %v2691
    %v2693 = vrot.slane %v1909, %v2692
    %v2694 = vmul.f32 %v2688, %v2693
    %v2695 = vmul.f32 %v2689, %v2693
    %2697 = vrot.lane.b32.xlu0 %v2693, 96
    %v2698 = vpop.permute.xlu0 %2697
    %v2700 = vadd.f32 %v2694, %v2698
    %v2701 = vadd.f32 %v2695, %v2698
    %v2702 = vpack.c.bf16 %v2701, %v2700
    %v2707 = vunpack.c.l.b16 %v1902
    %v2708 = vunpack.c.l.b16 %v1903
    %v2709 = vunpack.c.l.b16 %v1904
    %v2710 = vunpack.c.l.b16 %v1905
    %v2711 = vpack.c.b16 %v2708, %v2707
    %v2712 = vpack.c.b16 %v2710, %v2709
    %2713 = vrot.lane.b32.xlu0 %v2711, 96
    %v2714 = vpop.permute.xlu0 %2713
    %2715 = vrot.lane.b32.xlu0 %v2712, 96
    %v2716 = vpop.permute.xlu0 %2715
    %2720 = vrot.lane.b32.xlu0 %v2659, 96
    %v2721 = vpop.permute.xlu0 %2720
    %v2724 = vsel %vm81, %v2702, 0
    %2726 = vmatprep.subr.bf16.mxu0 0
    %2727 = vmatpush1.bf16.msra.mxu0 %v2714
    %2728 = vmatprep.subr.bf16.mxu0 0
    %2729 = vmatpush1.bf16.msra.mxu0 %v2716
    %2730 = vmatprep.subr.bf16.mxu0 0
    %2731 = vmatpush1.bf16.msra.mxu0 0
    %2732 = vmatprep.subr.bf16.mxu0 0
    %2733 = vmatpush1.bf16.msra.mxu0 0
    %2734 = vmatprep.subr.bf16.mxu0 0
    %2735 = vmatpush1.bf16.msra.mxu0 0
    %2736 = vmatprep.subr.bf16.mxu0 0
    %2737 = vmatpush1.bf16.msra.mxu0 0
    %2738 = vmatprep.subr.bf16.mxu0 0
    %2739 = vmatpush1.bf16.msra.mxu0 0
    %2740 = vmatprep.subr.bf16.mxu0 0
    %2741 = vmatpush1.bf16.msra.mxu0 0
    %2742 = vmatprep.subr.bf16.mxu0 0
    %2743 = vmatpush1.bf16.msra.mxu0 0
    %2744 = vmatprep.subr.bf16.mxu0 0
    %2745 = vmatpush1.bf16.msra.mxu0 0
    %2746 = vmatprep.subr.bf16.mxu0 0
    %2747 = vmatpush1.bf16.msra.mxu0 0
    %2748 = vmatprep.subr.bf16.mxu0 0
    %2749 = vmatpush1.bf16.msra.mxu0 0
    %2750 = vmatprep.subr.bf16.mxu0 0
    %2751 = vmatpush1.bf16.msra.mxu0 0
    %2752 = vmatprep.subr.bf16.mxu0 0
    %2753 = vmatpush1.bf16.msra.mxu0 0
    %2754 = vmatprep.subr.bf16.mxu0 0
    %2755 = vmatpush1.bf16.msra.mxu0 0
    %2756 = vmatprep.subr.bf16.mxu0 0
    %2757 = vmatpush1.bf16.msra.mxu0 0
    %2758 = vmatprep.mubr.bf16.mxu0 0
    %2759 = vmatmul.mubr.bf16.gmra.mrb[0].mxu0 %v2724
    %v2760 = vpop.f32.mrb[0].mxu0
    %v2761 = vadd.f32 %v2721, %v2760
    %v2762 = vpop.f32.mrb[0].mxu0
    %v2763 = vpop.f32.mrb[0].mxu0
    %v2764 = vadd.f32 %v2721, %v2763
    %v2765 = vpop.f32.mrb[0].mxu0
    %2766 = vdwg.mxu0
    %v2767 = vpack.c.bf16 %v2764, %v2761
    %2768 = vrot.lane.b32.xlu0 %v1000, 64
    %v2769 = vpop.permute.xlu0 %2768
    %v2771 = vsel %vm208, %v2767, 0
    %v2774 = vsel %vm208, %v2769, 0
    %2776 = vmatprep.subr.bf16.mxu0 0
    %2777 = vmatpush1.bf16.xpose.msra.mxu0 %v2774
    %2778 = vmatprep.subr.bf16.mxu0 0
    %2779 = vmatpush1.bf16.xpose.msra.mxu0 0
    %2780 = vmatprep.subr.bf16.mxu0 0
    %2781 = vmatpush1.bf16.xpose.msra.mxu0 0
    %2782 = vmatprep.subr.bf16.mxu0 0
    %2783 = vmatpush1.bf16.xpose.msra.mxu0 0
    %2784 = vmatprep.subr.bf16.mxu0 0
    %2785 = vmatpush1.bf16.xpose.msra.mxu0 0
    %2786 = vmatprep.subr.bf16.mxu0 0
    %2787 = vmatpush1.bf16.xpose.msra.mxu0 0
    %2788 = vmatprep.subr.bf16.mxu0 0
    %2789 = vmatpush1.bf16.xpose.msra.mxu0 0
    %2790 = vmatprep.subr.bf16.mxu0 0
    %2791 = vmatpush1.bf16.xpose.msra.mxu0 0
    %2792 = vmatprep.subr.bf16.mxu0 0
    %2793 = vmatpush1.bf16.xpose.msra.mxu0 0
    %2794 = vmatprep.subr.bf16.mxu0 0
    %2795 = vmatpush1.bf16.xpose.msra.mxu0 0
    %2796 = vmatprep.subr.bf16.mxu0 0
    %2797 = vmatpush1.bf16.xpose.msra.mxu0 0
    %2798 = vmatprep.subr.bf16.mxu0 0
    %2799 = vmatpush1.bf16.xpose.msra.mxu0 0
    %2800 = vmatprep.subr.bf16.mxu0 0
    %2801 = vmatpush1.bf16.xpose.msra.mxu0 0
    %2802 = vmatprep.subr.bf16.mxu0 0
    %2803 = vmatpush1.bf16.xpose.msra.mxu0 0
    %2804 = vmatprep.subr.bf16.mxu0 0
    %2805 = vmatpush1.bf16.xpose.msra.mxu0 0
    %2806 = vmatprep.subr.bf16.mxu0 0
    %2807 = vmatpush1.bf16.xpose.msra.mxu0 0
    %2808 = vmatprep.mubr.bf16.mxu0 0
    %2809 = vmatmul.mubr.bf16.gmra.mrb[0].mxu0 %v2771
    %v2810 = vpop.f32.mrb[0].mxu0
    %v2811 = vadd.f32 %v203, %v2810
    %v2812 = vpop.f32.mrb[0].mxu0
    %v2813 = vpop.f32.mrb[0].mxu0
    %v2814 = vadd.f32 %v205, %v2813
    %v2815 = vpop.f32.mrb[0].mxu0
    %2816 = vdwg.mxu0
    %v2817 = vsel %vm256, %v2811, -inf
    %2818 = vmax.xlane.f32.xlu0 %v2817
    %v2819 = vpop.xlane.xlu0 %2818
    %v2820 = vsel %vm256, %v2814, -inf
    %2821 = vmax.xlane.f32.xlu0 %v2820
    %v2822 = vpop.xlane.xlu0 %2821
    %v2823 = vsub.f32 %v2811, %v2819
    %v2824 = vsub.f32 %v2814, %v2822
    %v2825 = vmul.f32 %v2823, 1.442695
    %v2826 = vpow.pop %v2825
    %v2827 = vmul.f32 %v2824, 1.442695
    %v2828 = vpow.pop %v2827
    %v2829 = vsel %vm256, %v2826, 0.0
    %2830 = vadd.xlane.f32.xlu0 %v2829
    %v2831 = vpop.xlane.xlu0 %2830
    %v2832 = vsel %vm256, %v2828, 0.0
    %2833 = vadd.xlane.f32.xlu0 %v2832
    %v2834 = vpop.xlane.xlu0 %2833
    %v2835 = vpack.c.bf16 %v2828, %v2826
    %2836 = vrot.lane.b32.xlu0 %v1000, 32
    %v2837 = vpop.permute.xlu0 %2836
    %v2840 = vsel %vm256, %v2835, 0
    %2842 = vmatprep.subr.bf16.mxu0 0
    %2843 = vmatpush1.bf16.msra.mxu0 %v2837
    %2844 = vmatprep.subr.bf16.mxu0 0
    %2845 = vmatpush1.bf16.msra.mxu0 0
    %2846 = vmatprep.subr.bf16.mxu0 0
    %2847 = vmatpush1.bf16.msra.mxu0 0
    %2848 = vmatprep.subr.bf16.mxu0 0
    %2849 = vmatpush1.bf16.msra.mxu0 0
    %2850 = vmatprep.subr.bf16.mxu0 0
    %2851 = vmatpush1.bf16.msra.mxu0 0
    %2852 = vmatprep.subr.bf16.mxu0 0
    %2853 = vmatpush1.bf16.msra.mxu0 0
    %2854 = vmatprep.subr.bf16.mxu0 0
    %2855 = vmatpush1.bf16.msra.mxu0 0
    %2856 = vmatprep.subr.bf16.mxu0 0
    %2857 = vmatpush1.bf16.msra.mxu0 0
    %2858 = vmatprep.subr.bf16.mxu0 0
    %2859 = vmatpush1.bf16.msra.mxu0 0
    %2860 = vmatprep.subr.bf16.mxu0 0
    %2861 = vmatpush1.bf16.msra.mxu0 0
    %2862 = vmatprep.subr.bf16.mxu0 0
    %2863 = vmatpush1.bf16.msra.mxu0 0
    %2864 = vmatprep.subr.bf16.mxu0 0
    %2865 = vmatpush1.bf16.msra.mxu0 0
    %2866 = vmatprep.subr.bf16.mxu0 0
    %2867 = vmatpush1.bf16.msra.mxu0 0
    %2868 = vmatprep.subr.bf16.mxu0 0
    %2869 = vmatpush1.bf16.msra.mxu0 0
    %2870 = vmatprep.subr.bf16.mxu0 0
    %2871 = vmatpush1.bf16.msra.mxu0 0
    %2872 = vmatprep.subr.bf16.mxu0 0
    %2873 = vmatpush1.bf16.msra.mxu0 0
    %2874 = vmatprep.mubr.bf16.mxu0 0
    %2875 = vmatmul.mubr.bf16.gmra.mrb[0].mxu0 %v2840
    %v2876 = vpop.f32.mrb[0].mxu0
    %v2877 = vadd.f32 0.0, %v2876
    %v2878 = vpop.f32.mrb[0].mxu0
    %v2879 = vpop.f32.mrb[0].mxu0
    %v2880 = vadd.f32 0.0, %v2879
    %v2881 = vpop.f32.mrb[0].mxu0
    %2882 = vdwg.mxu0
    %v2883 = vrcp.pop %v2831
    %v2884 = vrcp.pop %v2834
    %v2885 = vmul.f32 %v2877, %v2883
    %v2886 = vmul.f32 %v2880, %v2884
    %v2887 = vpack.c.bf16 %v2886, %v2885
    %2889 = vrot.lane.b32.xlu0 %v2767, 120
    %v2890 = vpop.permute.xlu0 %2889
    %2891 = vrot.lane.b32.xlu0 %v1000, 56
    %v2892 = vpop.permute.xlu0 %2891
    %v2894 = vsel %vm208, %v2890, 0
    %v2897 = vsel %vm208, %v2892, 0
    %2899 = vmatprep.subr.bf16.mxu0 0
    %2900 = vmatpush1.bf16.xpose.msra.mxu0 %v2897
    %2901 = vmatprep.subr.bf16.mxu0 0
    %2902 = vmatpush1.bf16.xpose.msra.mxu0 0
    %2903 = vmatprep.subr.bf16.mxu0 0
    %2904 = vmatpush1.bf16.xpose.msra.mxu0 0
    %2905 = vmatprep.subr.bf16.mxu0 0
    %2906 = vmatpush1.bf16.xpose.msra.mxu0 0
    %2907 = vmatprep.subr.bf16.mxu0 0
    %2908 = vmatpush1.bf16.xpose.msra.mxu0 0
    %2909 = vmatprep.subr.bf16.mxu0 0
    %2910 = vmatpush1.bf16.xpose.msra.mxu0 0
    %2911 = vmatprep.subr.bf16.mxu0 0
    %2912 = vmatpush1.bf16.xpose.msra.mxu0 0
    %2913 = vmatprep.subr.bf16.mxu0 0
    %2914 = vmatpush1.bf16.xpose.msra.mxu0 0
    %2915 = vmatprep.subr.bf16.mxu0 0
    %2916 = vmatpush1.bf16.xpose.msra.mxu0 0
    %2917 = vmatprep.subr.bf16.mxu0 0
    %2918 = vmatpush1.bf16.xpose.msra.mxu0 0
    %2919 = vmatprep.subr.bf16.mxu0 0
    %2920 = vmatpush1.bf16.xpose.msra.mxu0 0
    %2921 = vmatprep.subr.bf16.mxu0 0
    %2922 = vmatpush1.bf16.xpose.msra.mxu0 0
    %2923 = vmatprep.subr.bf16.mxu0 0
    %2924 = vmatpush1.bf16.xpose.msra.mxu0 0
    %2925 = vmatprep.subr.bf16.mxu0 0
    %2926 = vmatpush1.bf16.xpose.msra.mxu0 0
    %2927 = vmatprep.subr.bf16.mxu0 0
    %2928 = vmatpush1.bf16.xpose.msra.mxu0 0
    %2929 = vmatprep.subr.bf16.mxu0 0
    %2930 = vmatpush1.bf16.xpose.msra.mxu0 0
    %2931 = vmatprep.mubr.bf16.mxu0 0
    %2932 = vmatmul.mubr.bf16.gmra.mrb[0].mxu0 %v2894
    %v2933 = vpop.f32.mrb[0].mxu0
    %v2934 = vadd.f32 %v203, %v2933
    %v2935 = vpop.f32.mrb[0].mxu0
    %v2936 = vpop.f32.mrb[0].mxu0
    %v2937 = vadd.f32 %v205, %v2936
    %v2938 = vpop.f32.mrb[0].mxu0
    %2939 = vdwg.mxu0
    %v2940 = vsel %vm256, %v2934, -inf
    %2941 = vmax.xlane.f32.xlu0 %v2940
    %v2942 = vpop.xlane.xlu0 %2941
    %v2943 = vsel %vm256, %v2937, -inf
    %2944 = vmax.xlane.f32.xlu0 %v2943
    %v2945 = vpop.xlane.xlu0 %2944
    %v2946 = vsub.f32 %v2934, %v2942
    %v2947 = vsub.f32 %v2937, %v2945
    %v2948 = vmul.f32 %v2946, 1.442695
    %v2949 = vpow.pop %v2948
    %v2950 = vmul.f32 %v2947, 1.442695
    %v2951 = vpow.pop %v2950
    %v2952 = vsel %vm256, %v2949, 0.0
    %2953 = vadd.xlane.f32.xlu0 %v2952
    %v2954 = vpop.xlane.xlu0 %2953
    %v2955 = vsel %vm256, %v2951, 0.0
    %2956 = vadd.xlane.f32.xlu0 %v2955
    %v2957 = vpop.xlane.xlu0 %2956
    %v2958 = vpack.c.bf16 %v2951, %v2949
    %2959 = vrot.lane.b32.xlu0 %v1000, 24
    %v2960 = vpop.permute.xlu0 %2959
    %v2963 = vsel %vm256, %v2958, 0
    %2965 = vmatprep.subr.bf16.mxu0 0
    %2966 = vmatpush1.bf16.msra.mxu0 %v2960
    %2967 = vmatprep.subr.bf16.mxu0 0
    %2968 = vmatpush1.bf16.msra.mxu0 0
    %2969 = vmatprep.subr.bf16.mxu0 0
    %2970 = vmatpush1.bf16.msra.mxu0 0
    %2971 = vmatprep.subr.bf16.mxu0 0
    %2972 = vmatpush1.bf16.msra.mxu0 0
    %2973 = vmatprep.subr.bf16.mxu0 0
    %2974 = vmatpush1.bf16.msra.mxu0 0
    %2975 = vmatprep.subr.bf16.mxu0 0
    %2976 = vmatpush1.bf16.msra.mxu0 0
    %2977 = vmatprep.subr.bf16.mxu0 0
    %2978 = vmatpush1.bf16.msra.mxu0 0
    %2979 = vmatprep.subr.bf16.mxu0 0
    %2980 = vmatpush1.bf16.msra.mxu0 0
    %2981 = vmatprep.subr.bf16.mxu0 0
    %2982 = vmatpush1.bf16.msra.mxu0 0
    %2983 = vmatprep.subr.bf16.mxu0 0
    %2984 = vmatpush1.bf16.msra.mxu0 0
    %2985 = vmatprep.subr.bf16.mxu0 0
    %2986 = vmatpush1.bf16.msra.mxu0 0
    %2987 = vmatprep.subr.bf16.mxu0 0
    %2988 = vmatpush1.bf16.msra.mxu0 0
    %2989 = vmatprep.subr.bf16.mxu0 0
    %2990 = vmatpush1.bf16.msra.mxu0 0
    %2991 = vmatprep.subr.bf16.mxu0 0
    %2992 = vmatpush1.bf16.msra.mxu0 0
    %2993 = vmatprep.subr.bf16.mxu0 0
    %2994 = vmatpush1.bf16.msra.mxu0 0
    %2995 = vmatprep.subr.bf16.mxu0 0
    %2996 = vmatpush1.bf16.msra.mxu0 0
    %2997 = vmatprep.mubr.bf16.mxu0 0
    %2998 = vmatmul.mubr.bf16.gmra.mrb[0].mxu0 %v2963
    %v2999 = vpop.f32.mrb[0].mxu0
    %v3000 = vadd.f32 0.0, %v2999
    %v3001 = vpop.f32.mrb[0].mxu0
    %v3002 = vpop.f32.mrb[0].mxu0
    %v3003 = vadd.f32 0.0, %v3002
    %v3004 = vpop.f32.mrb[0].mxu0
    %3005 = vdwg.mxu0
    %v3006 = vrcp.pop %v2954
    %v3007 = vrcp.pop %v2957
    %v3008 = vmul.f32 %v3000, %v3006
    %v3009 = vmul.f32 %v3003, %v3007
    %v3010 = vpack.c.bf16 %v3009, %v3008
    %v3011 = vpack.c.b16 %v2708, %v2708
    %3012 = vrot.lane.b32.xlu0 %v3011, 64
    %v3013 = vpop.permute.xlu0 %3012
    %v3015 = vsel %vm208, %v3010, 0
    %v3018 = vsel %vm453, %v3013, 0
    %3020 = vmatprep.subr.bf16.mxu0 0
    %3021 = vmatpush1.bf16.msra.mxu0 %v3018
    %3022 = vmatprep.subr.bf16.mxu0 0
    %3023 = vmatpush1.bf16.msra.mxu0 0
    %3024 = vmatprep.subr.bf16.mxu0 0
    %3025 = vmatpush1.bf16.msra.mxu0 0
    %3026 = vmatprep.subr.bf16.mxu0 0
    %3027 = vmatpush1.bf16.msra.mxu0 0
    %3028 = vmatprep.subr.bf16.mxu0 0
    %3029 = vmatpush1.bf16.msra.mxu0 0
    %3030 = vmatprep.subr.bf16.mxu0 0
    %3031 = vmatpush1.bf16.msra.mxu0 0
    %3032 = vmatprep.subr.bf16.mxu0 0
    %3033 = vmatpush1.bf16.msra.mxu0 0
    %3034 = vmatprep.subr.bf16.mxu0 0
    %3035 = vmatpush1.bf16.msra.mxu0 0
    %3036 = vmatprep.subr.bf16.mxu0 0
    %3037 = vmatpush1.bf16.msra.mxu0 0
    %3038 = vmatprep.subr.bf16.mxu0 0
    %3039 = vmatpush1.bf16.msra.mxu0 0
    %3040 = vmatprep.subr.bf16.mxu0 0
    %3041 = vmatpush1.bf16.msra.mxu0 0
    %3042 = vmatprep.subr.bf16.mxu0 0
    %3043 = vmatpush1.bf16.msra.mxu0 0
    %3044 = vmatprep.subr.bf16.mxu0 0
    %3045 = vmatpush1.bf16.msra.mxu0 0
    %3046 = vmatprep.subr.bf16.mxu0 0
    %3047 = vmatpush1.bf16.msra.mxu0 0
    %3048 = vmatprep.subr.bf16.mxu0 0
    %3049 = vmatpush1.bf16.msra.mxu0 0
    %3050 = vmatprep.subr.bf16.mxu0 0
    %3051 = vmatpush1.bf16.msra.mxu0 0
    %3052 = vmatprep.mubr.bf16.mxu0 0
    %3053 = vmatmul.mubr.bf16.gmra.mrb[0].mxu0 %v3015
    %v3054 = vpop.f32.mrb[0].mxu0
    %v3055 = vadd.f32 0.0, %v3054
    %v3056 = vpop.f32.mrb[0].mxu0
    %v3057 = vpop.f32.mrb[0].mxu0
    %v3058 = vadd.f32 0.0, %v3057
    %v3059 = vpop.f32.mrb[0].mxu0
    %3060 = vdwg.mxu0
    %v3061 = vpack.c.b16 %v2707, %v2707
    %3062 = vrot.lane.b32.xlu0 %v3061, 64
    %v3063 = vpop.permute.xlu0 %3062
    %v3065 = vsel %vm208, %v2887, 0
    %v3068 = vsel %vm453, %v3063, 0
    %3070 = vmatprep.subr.bf16.mxu0 0
    %3071 = vmatpush1.bf16.msra.mxu0 %v3068
    %3072 = vmatprep.subr.bf16.mxu0 0
    %3073 = vmatpush1.bf16.msra.mxu0 0
    %3074 = vmatprep.subr.bf16.mxu0 0
    %3075 = vmatpush1.bf16.msra.mxu0 0
    %3076 = vmatprep.subr.bf16.mxu0 0
    %3077 = vmatpush1.bf16.msra.mxu0 0
    %3078 = vmatprep.subr.bf16.mxu0 0
    %3079 = vmatpush1.bf16.msra.mxu0 0
    %3080 = vmatprep.subr.bf16.mxu0 0
    %3081 = vmatpush1.bf16.msra.mxu0 0
    %3082 = vmatprep.subr.bf16.mxu0 0
    %3083 = vmatpush1.bf16.msra.mxu0 0
    %3084 = vmatprep.subr.bf16.mxu0 0
    %3085 = vmatpush1.bf16.msra.mxu0 0
    %3086 = vmatprep.subr.bf16.mxu0 0
    %3087 = vmatpush1.bf16.msra.mxu0 0
    %3088 = vmatprep.subr.bf16.mxu0 0
    %3089 = vmatpush1.bf16.msra.mxu0 0
    %3090 = vmatprep.subr.bf16.mxu0 0
    %3091 = vmatpush1.bf16.msra.mxu0 0
    %3092 = vmatprep.subr.bf16.mxu0 0
    %3093 = vmatpush1.bf16.msra.mxu0 0
    %3094 = vmatprep.subr.bf16.mxu0 0
    %3095 = vmatpush1.bf16.msra.mxu0 0
    %3096 = vmatprep.subr.bf16.mxu0 0
    %3097 = vmatpush1.bf16.msra.mxu0 0
    %3098 = vmatprep.subr.bf16.mxu0 0
    %3099 = vmatpush1.bf16.msra.mxu0 0
    %3100 = vmatprep.subr.bf16.mxu0 0
    %3101 = vmatpush1.bf16.msra.mxu0 0
    %3102 = vmatprep.mubr.bf16.mxu0 0
    %3103 = vmatmul.mubr.bf16.gmra.mrb[0].mxu0 %v3065
    %v3104 = vpop.f32.mrb[0].mxu0
    %v3105 = vadd.f32 %v3055, %v3104
    %v3106 = vpop.f32.mrb[0].mxu0
    %v3107 = vpop.f32.mrb[0].mxu0
    %v3108 = vadd.f32 %v3058, %v3107
    %v3109 = vpop.f32.mrb[0].mxu0
    %3110 = vdwg.mxu0
    %3111 = vrot.lane.b32.xlu0 %v2767, 112
    %v3112 = vpop.permute.xlu0 %3111
    %3113 = vrot.lane.b32.xlu0 %v1000, 48
    %v3114 = vpop.permute.xlu0 %3113
    %v3116 = vsel %vm208, %v3112, 0
    %v3119 = vsel %vm208, %v3114, 0
    %3121 = vmatprep.subr.bf16.mxu0 0
    %3122 = vmatpush1.bf16.xpose.msra.mxu0 %v3119
    %3123 = vmatprep.subr.bf16.mxu0 0
    %3124 = vmatpush1.bf16.xpose.msra.mxu0 0
    %3125 = vmatprep.subr.bf16.mxu0 0
    %3126 = vmatpush1.bf16.xpose.msra.mxu0 0
    %3127 = vmatprep.subr.bf16.mxu0 0
    %3128 = vmatpush1.bf16.xpose.msra.mxu0 0
    %3129 = vmatprep.subr.bf16.mxu0 0
    %3130 = vmatpush1.bf16.xpose.msra.mxu0 0
    %3131 = vmatprep.subr.bf16.mxu0 0
    %3132 = vmatpush1.bf16.xpose.msra.mxu0 0
    %3133 = vmatprep.subr.bf16.mxu0 0
    %3134 = vmatpush1.bf16.xpose.msra.mxu0 0
    %3135 = vmatprep.subr.bf16.mxu0 0
    %3136 = vmatpush1.bf16.xpose.msra.mxu0 0
    %3137 = vmatprep.subr.bf16.mxu0 0
    %3138 = vmatpush1.bf16.xpose.msra.mxu0 0
    %3139 = vmatprep.subr.bf16.mxu0 0
    %3140 = vmatpush1.bf16.xpose.msra.mxu0 0
    %3141 = vmatprep.subr.bf16.mxu0 0
    %3142 = vmatpush1.bf16.xpose.msra.mxu0 0
    %3143 = vmatprep.subr.bf16.mxu0 0
    %3144 = vmatpush1.bf16.xpose.msra.mxu0 0
    %3145 = vmatprep.subr.bf16.mxu0 0
    %3146 = vmatpush1.bf16.xpose.msra.mxu0 0
    %3147 = vmatprep.subr.bf16.mxu0 0
    %3148 = vmatpush1.bf16.xpose.msra.mxu0 0
    %3149 = vmatprep.subr.bf16.mxu0 0
    %3150 = vmatpush1.bf16.xpose.msra.mxu0 0
    %3151 = vmatprep.subr.bf16.mxu0 0
    %3152 = vmatpush1.bf16.xpose.msra.mxu0 0
    %3153 = vmatprep.mubr.bf16.mxu0 0
    %3154 = vmatmul.mubr.bf16.gmra.mrb[0].mxu0 %v3116
    %v3155 = vpop.f32.mrb[0].mxu0
    %v3156 = vadd.f32 %v203, %v3155
    %v3157 = vpop.f32.mrb[0].mxu0
    %v3158 = vpop.f32.mrb[0].mxu0
    %v3159 = vadd.f32 %v205, %v3158
    %v3160 = vpop.f32.mrb[0].mxu0
    %3161 = vdwg.mxu0
    %v3162 = vsel %vm256, %v3156, -inf
    %3163 = vmax.xlane.f32.xlu0 %v3162
    %v3164 = vpop.xlane.xlu0 %3163
    %v3165 = vsel %vm256, %v3159, -inf
    %3166 = vmax.xlane.f32.xlu0 %v3165
    %v3167 = vpop.xlane.xlu0 %3166
    %v3168 = vsub.f32 %v3156, %v3164
    %v3169 = vsub.f32 %v3159, %v3167
    %v3170 = vmul.f32 %v3168, 1.442695
    %v3171 = vpow.pop %v3170
    %v3172 = vmul.f32 %v3169, 1.442695
    %v3173 = vpow.pop %v3172
    %v3174 = vsel %vm256, %v3171, 0.0
    %3175 = vadd.xlane.f32.xlu0 %v3174
    %v3176 = vpop.xlane.xlu0 %3175
    %v3177 = vsel %vm256, %v3173, 0.0
    %3178 = vadd.xlane.f32.xlu0 %v3177
    %v3179 = vpop.xlane.xlu0 %3178
    %v3180 = vpack.c.bf16 %v3173, %v3171
    %3181 = vrot.lane.b32.xlu0 %v1000, 16
    %v3182 = vpop.permute.xlu0 %3181
    %v3185 = vsel %vm256, %v3180, 0
    %3187 = vmatprep.subr.bf16.mxu0 0
    %3188 = vmatpush1.bf16.msra.mxu0 %v3182
    %3189 = vmatprep.subr.bf16.mxu0 0
    %3190 = vmatpush1.bf16.msra.mxu0 0
    %3191 = vmatprep.subr.bf16.mxu0 0
    %3192 = vmatpush1.bf16.msra.mxu0 0
    %3193 = vmatprep.subr.bf16.mxu0 0
    %3194 = vmatpush1.bf16.msra.mxu0 0
    %3195 = vmatprep.subr.bf16.mxu0 0
    %3196 = vmatpush1.bf16.msra.mxu0 0
    %3197 = vmatprep.subr.bf16.mxu0 0
    %3198 = vmatpush1.bf16.msra.mxu0 0
    %3199 = vmatprep.subr.bf16.mxu0 0
    %3200 = vmatpush1.bf16.msra.mxu0 0
    %3201 = vmatprep.subr.bf16.mxu0 0
    %3202 = vmatpush1.bf16.msra.mxu0 0
    %3203 = vmatprep.subr.bf16.mxu0 0
    %3204 = vmatpush1.bf16.msra.mxu0 0
    %3205 = vmatprep.subr.bf16.mxu0 0
    %3206 = vmatpush1.bf16.msra.mxu0 0
    %3207 = vmatprep.subr.bf16.mxu0 0
    %3208 = vmatpush1.bf16.msra.mxu0 0
    %3209 = vmatprep.subr.bf16.mxu0 0
    %3210 = vmatpush1.bf16.msra.mxu0 0
    %3211 = vmatprep.subr.bf16.mxu0 0
    %3212 = vmatpush1.bf16.msra.mxu0 0
    %3213 = vmatprep.subr.bf16.mxu0 0
    %3214 = vmatpush1.bf16.msra.mxu0 0
    %3215 = vmatprep.subr.bf16.mxu0 0
    %3216 = vmatpush1.bf16.msra.mxu0 0
    %3217 = vmatprep.subr.bf16.mxu0 0
    %3218 = vmatpush1.bf16.msra.mxu0 0
    %3219 = vmatprep.mubr.bf16.mxu0 0
    %3220 = vmatmul.mubr.bf16.gmra.mrb[0].mxu0 %v3185
    %v3221 = vpop.f32.mrb[0].mxu0
    %v3222 = vadd.f32 0.0, %v3221
    %v3223 = vpop.f32.mrb[0].mxu0
    %v3224 = vpop.f32.mrb[0].mxu0
    %v3225 = vadd.f32 0.0, %v3224
    %v3226 = vpop.f32.mrb[0].mxu0
    %3227 = vdwg.mxu0
    %v3228 = vrcp.pop %v3176
    %v3229 = vrcp.pop %v3179
    %v3230 = vmul.f32 %v3222, %v3228
    %v3231 = vmul.f32 %v3225, %v3229
    %v3232 = vpack.c.bf16 %v3231, %v3230
    %v3233 = vpack.c.b16 %v2709, %v2709
    %3234 = vrot.lane.b32.xlu0 %v3233, 64
    %v3235 = vpop.permute.xlu0 %3234
    %v3237 = vsel %vm208, %v3232, 0
    %v3240 = vsel %vm453, %v3235, 0
    %3242 = vmatprep.subr.bf16.mxu0 0
    %3243 = vmatpush1.bf16.msra.mxu0 %v3240
    %3244 = vmatprep.subr.bf16.mxu0 0
    %3245 = vmatpush1.bf16.msra.mxu0 0
    %3246 = vmatprep.subr.bf16.mxu0 0
    %3247 = vmatpush1.bf16.msra.mxu0 0
    %3248 = vmatprep.subr.bf16.mxu0 0
    %3249 = vmatpush1.bf16.msra.mxu0 0
    %3250 = vmatprep.subr.bf16.mxu0 0
    %3251 = vmatpush1.bf16.msra.mxu0 0
    %3252 = vmatprep.subr.bf16.mxu0 0
    %3253 = vmatpush1.bf16.msra.mxu0 0
    %3254 = vmatprep.subr.bf16.mxu0 0
    %3255 = vmatpush1.bf16.msra.mxu0 0
    %3256 = vmatprep.subr.bf16.mxu0 0
    %3257 = vmatpush1.bf16.msra.mxu0 0
    %3258 = vmatprep.subr.bf16.mxu0 0
    %3259 = vmatpush1.bf16.msra.mxu0 0
    %3260 = vmatprep.subr.bf16.mxu0 0
    %3261 = vmatpush1.bf16.msra.mxu0 0
    %3262 = vmatprep.subr.bf16.mxu0 0
    %3263 = vmatpush1.bf16.msra.mxu0 0
    %3264 = vmatprep.subr.bf16.mxu0 0
    %3265 = vmatpush1.bf16.msra.mxu0 0
    %3266 = vmatprep.subr.bf16.mxu0 0
    %3267 = vmatpush1.bf16.msra.mxu0 0
    %3268 = vmatprep.subr.bf16.mxu0 0
    %3269 = vmatpush1.bf16.msra.mxu0 0
    %3270 = vmatprep.subr.bf16.mxu0 0
    %3271 = vmatpush1.bf16.msra.mxu0 0
    %3272 = vmatprep.subr.bf16.mxu0 0
    %3273 = vmatpush1.bf16.msra.mxu0 0
    %3274 = vmatprep.mubr.bf16.mxu0 0
    %3275 = vmatmul.mubr.bf16.gmra.mrb[0].mxu0 %v3237
    %v3276 = vpop.f32.mrb[0].mxu0
    %v3277 = vadd.f32 0.0, %v3276
    %v3278 = vpop.f32.mrb[0].mxu0
    %v3279 = vpop.f32.mrb[0].mxu0
    %v3280 = vadd.f32 0.0, %v3279
    %v3281 = vpop.f32.mrb[0].mxu0
    %3282 = vdwg.mxu0
    %v3283 = vadd.f32 %v3105, %v3277
    %v3284 = vadd.f32 %v3108, %v3280
    %3285 = vrot.lane.b32.xlu0 %v2767, 104
    %v3286 = vpop.permute.xlu0 %3285
    %3287 = vrot.lane.b32.xlu0 %v1000, 40
    %v3288 = vpop.permute.xlu0 %3287
    %v3290 = vsel %vm208, %v3286, 0
    %v3293 = vsel %vm208, %v3288, 0
    %3295 = vmatprep.subr.bf16.mxu0 0
    %3296 = vmatpush1.bf16.xpose.msra.mxu0 %v3293
    %3297 = vmatprep.subr.bf16.mxu0 0
    %3298 = vmatpush1.bf16.xpose.msra.mxu0 0
    %3299 = vmatprep.subr.bf16.mxu0 0
    %3300 = vmatpush1.bf16.xpose.msra.mxu0 0
    %3301 = vmatprep.subr.bf16.mxu0 0
    %3302 = vmatpush1.bf16.xpose.msra.mxu0 0
    %3303 = vmatprep.subr.bf16.mxu0 0
    %3304 = vmatpush1.bf16.xpose.msra.mxu0 0
    %3305 = vmatprep.subr.bf16.mxu0 0
    %3306 = vmatpush1.bf16.xpose.msra.mxu0 0
    %3307 = vmatprep.subr.bf16.mxu0 0
    %3308 = vmatpush1.bf16.xpose.msra.mxu0 0
    %3309 = vmatprep.subr.bf16.mxu0 0
    %3310 = vmatpush1.bf16.xpose.msra.mxu0 0
    %3311 = vmatprep.subr.bf16.mxu0 0
    %3312 = vmatpush1.bf16.xpose.msra.mxu0 0
    %3313 = vmatprep.subr.bf16.mxu0 0
    %3314 = vmatpush1.bf16.xpose.msra.mxu0 0
    %3315 = vmatprep.subr.bf16.mxu0 0
    %3316 = vmatpush1.bf16.xpose.msra.mxu0 0
    %3317 = vmatprep.subr.bf16.mxu0 0
    %3318 = vmatpush1.bf16.xpose.msra.mxu0 0
    %3319 = vmatprep.subr.bf16.mxu0 0
    %3320 = vmatpush1.bf16.xpose.msra.mxu0 0
    %3321 = vmatprep.subr.bf16.mxu0 0
    %3322 = vmatpush1.bf16.xpose.msra.mxu0 0
    %3323 = vmatprep.subr.bf16.mxu0 0
    %3324 = vmatpush1.bf16.xpose.msra.mxu0 0
    %3325 = vmatprep.subr.bf16.mxu0 0
    %3326 = vmatpush1.bf16.xpose.msra.mxu0 0
    %3327 = vmatprep.mubr.bf16.mxu0 0
    %3328 = vmatmul.mubr.bf16.gmra.mrb[0].mxu0 %v3290
    %v3329 = vpop.f32.mrb[0].mxu0
    %v3330 = vadd.f32 %v203, %v3329
    %v3331 = vpop.f32.mrb[0].mxu0
    %v3332 = vpop.f32.mrb[0].mxu0
    %v3333 = vadd.f32 %v205, %v3332
    %v3334 = vpop.f32.mrb[0].mxu0
    %3335 = vdwg.mxu0
    %v3336 = vsel %vm256, %v3330, -inf
    %3337 = vmax.xlane.f32.xlu0 %v3336
    %v3338 = vpop.xlane.xlu0 %3337
    %v3339 = vsel %vm256, %v3333, -inf
    %3340 = vmax.xlane.f32.xlu0 %v3339
    %v3341 = vpop.xlane.xlu0 %3340
    %v3342 = vsub.f32 %v3330, %v3338
    %v3343 = vsub.f32 %v3333, %v3341
    %v3344 = vmul.f32 %v3342, 1.442695
    %v3345 = vpow.pop %v3344
    %v3346 = vmul.f32 %v3343, 1.442695
    %v3347 = vpow.pop %v3346
    %v3348 = vsel %vm256, %v3345, 0.0
    %3349 = vadd.xlane.f32.xlu0 %v3348
    %v3350 = vpop.xlane.xlu0 %3349
    %v3351 = vsel %vm256, %v3347, 0.0
    %3352 = vadd.xlane.f32.xlu0 %v3351
    %v3353 = vpop.xlane.xlu0 %3352
    %v3354 = vpack.c.bf16 %v3347, %v3345
    %3355 = vrot.lane.b32.xlu0 %v1000, 8
    %v3356 = vpop.permute.xlu0 %3355
    %v3359 = vsel %vm256, %v3354, 0
    %3361 = vmatprep.subr.bf16.mxu0 0
    %3362 = vmatpush1.bf16.msra.mxu0 %v3356
    %3363 = vmatprep.subr.bf16.mxu0 0
    %3364 = vmatpush1.bf16.msra.mxu0 0
    %3365 = vmatprep.subr.bf16.mxu0 0
    %3366 = vmatpush1.bf16.msra.mxu0 0
    %3367 = vmatprep.subr.bf16.mxu0 0
    %3368 = vmatpush1.bf16.msra.mxu0 0
    %3369 = vmatprep.subr.bf16.mxu0 0
    %3370 = vmatpush1.bf16.msra.mxu0 0
    %3371 = vmatprep.subr.bf16.mxu0 0
    %3372 = vmatpush1.bf16.msra.mxu0 0
    %3373 = vmatprep.subr.bf16.mxu0 0
    %3374 = vmatpush1.bf16.msra.mxu0 0
    %3375 = vmatprep.subr.bf16.mxu0 0
    %3376 = vmatpush1.bf16.msra.mxu0 0
    %3377 = vmatprep.subr.bf16.mxu0 0
    %3378 = vmatpush1.bf16.msra.mxu0 0
    %3379 = vmatprep.subr.bf16.mxu0 0
    %3380 = vmatpush1.bf16.msra.mxu0 0
    %3381 = vmatprep.subr.bf16.mxu0 0
    %3382 = vmatpush1.bf16.msra.mxu0 0
    %3383 = vmatprep.subr.bf16.mxu0 0
    %3384 = vmatpush1.bf16.msra.mxu0 0
    %3385 = vmatprep.subr.bf16.mxu0 0
    %3386 = vmatpush1.bf16.msra.mxu0 0
    %3387 = vmatprep.subr.bf16.mxu0 0
    %3388 = vmatpush1.bf16.msra.mxu0 0
    %3389 = vmatprep.subr.bf16.mxu0 0
    %3390 = vmatpush1.bf16.msra.mxu0 0
    %3391 = vmatprep.subr.bf16.mxu0 0
    %3392 = vmatpush1.bf16.msra.mxu0 0
    %3393 = vmatprep.mubr.bf16.mxu0 0
    %3394 = vmatmul.mubr.bf16.gmra.mrb[0].mxu0 %v3359
    %v3395 = vpop.f32.mrb[0].mxu0
    %v3396 = vadd.f32 0.0, %v3395
    %v3397 = vpop.f32.mrb[0].mxu0
    %v3398 = vpop.f32.mrb[0].mxu0
    %v3399 = vadd.f32 0.0, %v3398
    %v3400 = vpop.f32.mrb[0].mxu0
    %3401 = vdwg.mxu0
    %v3402 = vrcp.pop %v3350
    %v3403 = vrcp.pop %v3353
    %v3404 = vmul.f32 %v3396, %v3402
    %v3405 = vmul.f32 %v3399, %v3403
    %v3406 = vpack.c.bf16 %v3405, %v3404
    %v3407 = vpack.c.b16 %v2710, %v2710
    %3408 = vrot.lane.b32.xlu0 %v3407, 64
    %v3409 = vpop.permute.xlu0 %3408
    %v3411 = vsel %vm208, %v3406, 0
    %v3414 = vsel %vm453, %v3409, 0
    %3416 = vmatprep.subr.bf16.mxu0 0
    %3417 = vmatpush1.bf16.msra.mxu0 %v3414
    %3418 = vmatprep.subr.bf16.mxu0 0
    %3419 = vmatpush1.bf16.msra.mxu0 0
    %3420 = vmatprep.subr.bf16.mxu0 0
    %3421 = vmatpush1.bf16.msra.mxu0 0
    %3422 = vmatprep.subr.bf16.mxu0 0
    %3423 = vmatpush1.bf16.msra.mxu0 0
    %3424 = vmatprep.subr.bf16.mxu0 0
    %3425 = vmatpush1.bf16.msra.mxu0 0
    %3426 = vmatprep.subr.bf16.mxu0 0
    %3427 = vmatpush1.bf16.msra.mxu0 0
    %3428 = vmatprep.subr.bf16.mxu0 0
    %3429 = vmatpush1.bf16.msra.mxu0 0
    %3430 = vmatprep.subr.bf16.mxu0 0
    %3431 = vmatpush1.bf16.msra.mxu0 0
    %3432 = vmatprep.subr.bf16.mxu0 0
    %3433 = vmatpush1.bf16.msra.mxu0 0
    %3434 = vmatprep.subr.bf16.mxu0 0
    %3435 = vmatpush1.bf16.msra.mxu0 0
    %3436 = vmatprep.subr.bf16.mxu0 0
    %3437 = vmatpush1.bf16.msra.mxu0 0
    %3438 = vmatprep.subr.bf16.mxu0 0
    %3439 = vmatpush1.bf16.msra.mxu0 0
    %3440 = vmatprep.subr.bf16.mxu0 0
    %3441 = vmatpush1.bf16.msra.mxu0 0
    %3442 = vmatprep.subr.bf16.mxu0 0
    %3443 = vmatpush1.bf16.msra.mxu0 0
    %3444 = vmatprep.subr.bf16.mxu0 0
    %3445 = vmatpush1.bf16.msra.mxu0 0
    %3446 = vmatprep.subr.bf16.mxu0 0
    %3447 = vmatpush1.bf16.msra.mxu0 0
    %3448 = vmatprep.mubr.bf16.mxu0 0
    %3449 = vmatmul.mubr.bf16.gmra.mrb[0].mxu0 %v3411
    %v3450 = vpop.f32.mrb[0].mxu0
    %v3451 = vadd.f32 0.0, %v3450
    %v3452 = vpop.f32.mrb[0].mxu0
    %v3453 = vpop.f32.mrb[0].mxu0
    %v3454 = vadd.f32 0.0, %v3453
    %v3455 = vpop.f32.mrb[0].mxu0
    %3456 = vdwg.mxu0
    %v3457 = vadd.f32 %v3283, %v3451
    %v3458 = vadd.f32 %v3284, %v3454
    %3459 = vrot.lane.b32.xlu0 %v2659, 64
    %v3460 = vpop.permute.xlu0 %3459
    %v3462 = vadd.f32 %v3457, %v3460
    %v3463 = vadd.f32 %v3458, %v3460
    %v3464 = vadd.f32 %v2700, %v3462
    %v3465 = vadd.f32 %v2701, %v3463
    %v3466 = vsel %vm81, %v3464, 0.0
    %3467 = vadd.xlane.f32.xlu0 %v3466
    %v3468 = vpop.xlane.xlu0 %3467
    %v3469 = vsel %vm81, %v3465, 0.0
    %3470 = vadd.xlane.f32.xlu0 %v3469
    %v3471 = vpop.xlane.xlu0 %3470
    %v3472 = vmul.f32 %v3468, %v901
    %v3473 = vmul.f32 %v3471, %v901
    %v3474 = vsub.f32 %v3464, %v3472
    %v3475 = vsub.f32 %v3465, %v3473
    %v3476 = vmul.f32 %v3474, %v3474
    %v3477 = vmul.f32 %v3475, %v3475
    %v3478 = vsel %vm81, %v3476, 0.0
    %3479 = vadd.xlane.f32.xlu0 %v3478
    %v3480 = vpop.xlane.xlu0 %3479
    %v3481 = vsel %vm81, %v3477, 0.0
    %3482 = vadd.xlane.f32.xlu0 %v3481
    %v3483 = vpop.xlane.xlu0 %3482
    %v3484 = vmul.f32 %v3480, %v901
    %v3485 = vmul.f32 %v3483, %v901
    %v3486 = vadd.f32 %v3484, 1e-05
    %v3487 = vadd.f32 %v3485, 1e-05
    %v3488 = vrsqrt.pop %v3486
    %v3489 = vrsqrt.pop %v3487
    %v3490 = vmul.f32 %v3474, %v3488
    %v3491 = vmul.f32 %v3475, %v3489
    %3492 = vrot.lane.b32.xlu0 %v2693, 64
    %v3493 = vpop.permute.xlu0 %3492
    %v3495 = vmul.f32 %v3490, %v3493
    %v3496 = vmul.f32 %v3491, %v3493
    %3497 = vrot.lane.b32.xlu0 %v2693, 32
    %v3498 = vpop.permute.xlu0 %3497
    %v3500 = vadd.f32 %v3495, %v3498
    %v3501 = vadd.f32 %v3496, %v3498
    %v3502 = vpack.c.bf16 %v3501, %v3500
    %v3503 = vld [vmem:[#allocation5 + $0x80] sm:$0xf]
    %v3504 = vld [vmem:[#allocation5 + $0x84] sm:$0xf]
    %v3505 = vld [vmem:[#allocation5 + $0x88] sm:$0xf]
    %v3506 = vld [vmem:[#allocation5 + $0x8c] sm:$0xf]
    %v3507 = vlaneseq
    %v3508 = vshrl.u32 %v3507, 7
    %v3509 = vsub.s32 0, %v3508
    %v3510 = vrot.slane %v1908, %v3509
    %v3515 = vunpack.c.l.b16 %v3503
    %v3516 = vunpack.c.l.b16 %v3504
    %v3517 = vunpack.c.l.b16 %v3505
    %v3518 = vunpack.c.l.b16 %v3506
    %v3519 = vpack.c.b16 %v3516, %v3515
    %v3520 = vpack.c.b16 %v3518, %v3517
    %v3524 = vsel %vm81, %v3502, 0
    %3526 = vmatprep.subr.bf16.mxu0 0
    %3527 = vmatpush1.bf16.msra.mxu0 %v3519
    %3528 = vmatprep.subr.bf16.mxu0 0
    %3529 = vmatpush1.bf16.msra.mxu0 %v3520
    %3530 = vmatprep.subr.bf16.mxu0 0
    %3531 = vmatpush1.bf16.msra.mxu0 0
    %3532 = vmatprep.subr.bf16.mxu0 0
    %3533 = vmatpush1.bf16.msra.mxu0 0
    %3534 = vmatprep.subr.bf16.mxu0 0
    %3535 = vmatpush1.bf16.msra.mxu0 0
    %3536 = vmatprep.subr.bf16.mxu0 0
    %3537 = vmatpush1.bf16.msra.mxu0 0
    %3538 = vmatprep.subr.bf16.mxu0 0
    %3539 = vmatpush1.bf16.msra.mxu0 0
    %3540 = vmatprep.subr.bf16.mxu0 0
    %3541 = vmatpush1.bf16.msra.mxu0 0
    %3542 = vmatprep.subr.bf16.mxu0 0
    %3543 = vmatpush1.bf16.msra.mxu0 0
    %3544 = vmatprep.subr.bf16.mxu0 0
    %3545 = vmatpush1.bf16.msra.mxu0 0
    %3546 = vmatprep.subr.bf16.mxu0 0
    %3547 = vmatpush1.bf16.msra.mxu0 0
    %3548 = vmatprep.subr.bf16.mxu0 0
    %3549 = vmatpush1.bf16.msra.mxu0 0
    %3550 = vmatprep.subr.bf16.mxu0 0
    %3551 = vmatpush1.bf16.msra.mxu0 0
    %3552 = vmatprep.subr.bf16.mxu0 0
    %3553 = vmatpush1.bf16.msra.mxu0 0
    %3554 = vmatprep.subr.bf16.mxu0 0
    %3555 = vmatpush1.bf16.msra.mxu0 0
    %3556 = vmatprep.subr.bf16.mxu0 0
    %3557 = vmatpush1.bf16.msra.mxu0 0
    %3558 = vmatprep.mubr.bf16.mxu0 0
    %3559 = vmatmul.mubr.bf16.gmra.mrb[0].mxu0 %v3524
    %v3560 = vpop.f32.mrb[0].mxu0
    %v3561 = vadd.f32 %v3510, %v3560
    %v3562 = vpop.f32.mrb[0].mxu0
    %v3563 = vpop.f32.mrb[0].mxu0
    %v3564 = vadd.f32 %v3510, %v3563
    %v3565 = vpop.f32.mrb[0].mxu0
    %3566 = vdwg.mxu0
    %v3567 = vmax.f32 %v3561, 0.0
    %v3568 = vmax.f32 %v3564, 0.0
    %v3569 = vpack.c.bf16 %v3568, %v3567
    %v3570 = vld [vmem:[#allocation5 + $0x90] sm:$0xf]
    %v3571 = vld [vmem:[#allocation5 + $0x94] sm:$0xf]
    %v3572 = vld [vmem:[#allocation5 + $0x98] sm:$0xf]
    %v3573 = vld [vmem:[#allocation5 + $0x9c] sm:$0xf]
    %v3574 = vlaneseq
    %v3575 = vshrl.u32 %v3574, 7
    %v3576 = vsub.s32 0, %v3575
    %v3577 = vrot.slane %v1910, %v3576
    %v3582 = vunpack.c.l.b16 %v3570
    %v3583 = vunpack.c.l.b16 %v3571
    %v3584 = vunpack.c.l.b16 %v3572
    %v3585 = vunpack.c.l.b16 %v3573
    %v3586 = vpack.c.b16 %v3583, %v3582
    %v3587 = vpack.c.b16 %v3585, %v3584
    %3591 = vrot.lane.b32.xlu0 %v3577, 64
    %v3592 = vpop.permute.xlu0 %3591
    %3594 = vmatprep.subr.bf16.mxu0 0
    %3595 = vmatpush1.bf16.xpose.msra.mxu0 %v3586
    %3596 = vmatprep.subr.bf16.mxu0 0
    %3597 = vmatpush1.bf16.xpose.msra.mxu0 %v3587
    %3598 = vmatprep.subr.bf16.mxu0 0
    %3599 = vmatpush1.bf16.xpose.msra.mxu0 0
    %3600 = vmatprep.subr.bf16.mxu0 0
    %3601 = vmatpush1.bf16.xpose.msra.mxu0 0
    %3602 = vmatprep.subr.bf16.mxu0 0
    %3603 = vmatpush1.bf16.xpose.msra.mxu0 0
    %3604 = vmatprep.subr.bf16.mxu0 0
    %3605 = vmatpush1.bf16.xpose.msra.mxu0 0
    %3606 = vmatprep.subr.bf16.mxu0 0
    %3607 = vmatpush1.bf16.xpose.msra.mxu0 0
    %3608 = vmatprep.subr.bf16.mxu0 0
    %3609 = vmatpush1.bf16.xpose.msra.mxu0 0
    %3610 = vmatprep.subr.bf16.mxu0 0
    %3611 = vmatpush1.bf16.xpose.msra.mxu0 0
    %3612 = vmatprep.subr.bf16.mxu0 0
    %3613 = vmatpush1.bf16.xpose.msra.mxu0 0
    %3614 = vmatprep.subr.bf16.mxu0 0
    %3615 = vmatpush1.bf16.xpose.msra.mxu0 0
    %3616 = vmatprep.subr.bf16.mxu0 0
    %3617 = vmatpush1.bf16.xpose.msra.mxu0 0
    %3618 = vmatprep.subr.bf16.mxu0 0
    %3619 = vmatpush1.bf16.xpose.msra.mxu0 0
    %3620 = vmatprep.subr.bf16.mxu0 0
    %3621 = vmatpush1.bf16.xpose.msra.mxu0 0
    %3622 = vmatprep.subr.bf16.mxu0 0
    %3623 = vmatpush1.bf16.xpose.msra.mxu0 0
    %3624 = vmatprep.subr.bf16.mxu0 0
    %3625 = vmatpush1.bf16.xpose.msra.mxu0 0
    %3626 = vmatprep.mubr.bf16.mxu0 0
    %3627 = vmatmul.mubr.bf16.gmra.mrb[0].mxu0 %v3569
    %v3628 = vpop.f32.mrb[0].mxu0
    %v3629 = vadd.f32 %v3592, %v3628
    %v3630 = vpop.f32.mrb[0].mxu0
    %v3631 = vpop.f32.mrb[0].mxu0
    %v3632 = vadd.f32 %v3592, %v3631
    %v3633 = vpop.f32.mrb[0].mxu0
    %3634 = vdwg.mxu0
    %v3635 = vadd.f32 %v3500, %v3629
    %v3636 = vadd.f32 %v3501, %v3632
    %v3637 = vsel %vm81, %v3635, 0.0
    %3638 = vadd.xlane.f32.xlu0 %v3637
    %v3639 = vpop.xlane.xlu0 %3638
    %v3640 = vsel %vm81, %v3636, 0.0
    %3641 = vadd.xlane.f32.xlu0 %v3640
    %v3642 = vpop.xlane.xlu0 %3641
    %v3643 = vmul.f32 %v3639, %v901
    %v3644 = vmul.f32 %v3642, %v901
    %v3645 = vsub.f32 %v3635, %v3643
    %v3646 = vsub.f32 %v3636, %v3644
    %v3647 = vmul.f32 %v3645, %v3645
    %v3648 = vmul.f32 %v3646, %v3646
    %v3649 = vsel %vm81, %v3647, 0.0
    %3650 = vadd.xlane.f32.xlu0 %v3649
    %v3651 = vpop.xlane.xlu0 %3650
    %v3652 = vsel %vm81, %v3648, 0.0
    %3653 = vadd.xlane.f32.xlu0 %v3652
    %v3654 = vpop.xlane.xlu0 %3653
    %v3655 = vmul.f32 %v3651, %v901
    %v3656 = vmul.f32 %v3654, %v901
    %v3657 = vadd.f32 %v3655, 1e-05
    %v3658 = vadd.f32 %v3656, 1e-05
    %v3659 = vrsqrt.pop %v3657
    %v3660 = vrsqrt.pop %v3658
    %v3661 = vmul.f32 %v3645, %v3659
    %v3662 = vmul.f32 %v3646, %v3660
    %v3663 = vmul.f32 %v3661, %v3577
    %v3664 = vmul.f32 %v3662, %v3577
    %3665 = vrot.lane.b32.xlu0 %v3577, 96
    %v3666 = vpop.permute.xlu0 %3665
    %v3668 = vadd.f32 %v3663, %v3666
    %v3669 = vadd.f32 %v3664, %v3666
    %v3670 = vpack.c.bf16 %v3669, %v3668
    %v3671 = vld [vmem:[#allocation5 + $0x10] sm:$0xf]
    %v3672 = vld [vmem:[#allocation5 + $0x14] sm:$0xf]
    %v3673 = vld [vmem:[#allocation5 + $0x18] sm:$0xf]
    %v3674 = vld [vmem:[#allocation5 + $0x1c] sm:$0xf]
    %v3679 = vunpack.c.l.b16 %v3671
    %v3680 = vunpack.c.l.b16 %v3672
    %v3681 = vunpack.c.l.b16 %v3673
    %v3682 = vunpack.c.l.b16 %v3674
    %v3683 = vpack.c.b16 %v3680, %v3679
    %v3684 = vpack.c.b16 %v3682, %v3681
    %v3688 = vsel %vm81, %v3670, 0
    %3690 = vmatprep.subr.bf16.mxu0 0
    %3691 = vmatpush1.bf16.msra.mxu0 %v3683
    %3692 = vmatprep.subr.bf16.mxu0 0
    %3693 = vmatpush1.bf16.msra.mxu0 %v3684
    %3694 = vmatprep.subr.bf16.mxu0 0
    %3695 = vmatpush1.bf16.msra.mxu0 0
    %3696 = vmatprep.subr.bf16.mxu0 0
    %3697 = vmatpush1.bf16.msra.mxu0 0
    %3698 = vmatprep.subr.bf16.mxu0 0
    %3699 = vmatpush1.bf16.msra.mxu0 0
    %3700 = vmatprep.subr.bf16.mxu0 0
    %3701 = vmatpush1.bf16.msra.mxu0 0
    %3702 = vmatprep.subr.bf16.mxu0 0
    %3703 = vmatpush1.bf16.msra.mxu0 0
    %3704 = vmatprep.subr.bf16.mxu0 0
    %3705 = vmatpush1.bf16.msra.mxu0 0
    %3706 = vmatprep.subr.bf16.mxu0 0
    %3707 = vmatpush1.bf16.msra.mxu0 0
    %3708 = vmatprep.subr.bf16.mxu0 0
    %3709 = vmatpush1.bf16.msra.mxu0 0
    %3710 = vmatprep.subr.bf16.mxu0 0
    %3711 = vmatpush1.bf16.msra.mxu0 0
    %3712 = vmatprep.subr.bf16.mxu0 0
    %3713 = vmatpush1.bf16.msra.mxu0 0
    %3714 = vmatprep.subr.bf16.mxu0 0
    %3715 = vmatpush1.bf16.msra.mxu0 0
    %3716 = vmatprep.subr.bf16.mxu0 0
    %3717 = vmatpush1.bf16.msra.mxu0 0
    %3718 = vmatprep.subr.bf16.mxu0 0
    %3719 = vmatpush1.bf16.msra.mxu0 0
    %3720 = vmatprep.subr.bf16.mxu0 0
    %3721 = vmatpush1.bf16.msra.mxu0 0
    %3722 = vmatprep.mubr.bf16.mxu0 0
    %3723 = vmatmul.mubr.bf16.gmra.mrb[0].mxu0 %v3688
    %v3724 = vpop.f32.mrb[0].mxu0
    %v3725 = vadd.f32 0.0, %v3724
    %v3726 = vpop.f32.mrb[0].mxu0
    %v3727 = vpop.f32.mrb[0].mxu0
    %v3728 = vadd.f32 0.0, %v3727
    %v3729 = vpop.f32.mrb[0].mxu0
    %3730 = vdwg.mxu0
    %3731 = vst [vmem:[#allocation8] sm:$0xff] %v3725
    %3732 = vst [vmem:[#allocation8 + $0x8] sm:$0xff] %v3728
    // Predicated region
    $region26: #{tpu_custom_call.1} parent=1 // pred_check
      _
    $region27: #{tpu_custom_call.1} parent=1 // pred_check_branch
      %3734 = sbr.rel (0) target = $region29
    $region28: #{tpu_custom_call.1} parent=1 // pred_region
      %s3736 = ssub.s32 256, 256
      %3737 = vsyncadd [#allocation4], %s3736
      %s3738 = sshll.u32 [#allocation8], 4
      %s3739 = int_to_ptr.vmem [resolvable:$true] %s3738
      %3744 = dma.vmem_to_hbm [thread:$0]  %s3739, 256, %s3, [#allocation4], 128, 128, 8
    $region29: #{tpu_custom_call.1} parent=1 // pred_fallthru
      _
    // Predicated region
    $region30: #{tpu_custom_call.1} parent=1 // pred_check
      _
    $region31: #{tpu_custom_call.1} parent=1 // pred_check_branch
      %3746 = sbr.rel (0) target = $region33
    $region32: #{tpu_custom_call.1} parent=1 // pred_region
      %3747 = dma.done [#allocation4], 256
    $region33: #{tpu_custom_call.1} parent=1 // pred_fallthru
      _
    %3748 = vsyncpa [#allocation3], 1
    %3749 = vsyncpa [#allocation6], 1
    %3750 = vsyncpa [#allocation4], 1

</llo_original>
